<compile_context>
chip_gen: v6e
topology: v6e:2x2x1
jax: 0.10.0
libtpu: 0.0.40
codegen_flags: <defaults>
</compile_context>

<pallas_src>
import jax
import jax.numpy as jnp
from jax.experimental import pallas as pl
from jax.experimental.pallas import tpu as pltpu


def _round_up(n, m=8):
    return ((n + m - 1) // m) * m


# ----------------------------------------------------------------------------
# Pallas kernels
# ----------------------------------------------------------------------------
def gru_kernel(x2_ref, len_ref, h0_ref, wi_ref, wh_ref, bi_ref, bh_ref,
               seq_ref, hfin_ref):
    """Masked GRU over a whole sequence in ONE kernel invocation.

    x2_ref : (T*NP, E)  time-major, batch padded to NP (multiple of 8)
    len_ref: (NP, 1)    float32 sequence lengths (0 for padded rows)
    h0_ref : (NP, H)    initial hidden
    wi_ref : (3, E, H), wh_ref: (3, H, H), bi/bh: (3, 1, H)   [gates r, z, n]
    seq_ref: (T*NP, H)  per-step hidden states (time-major, flat)
    hfin_ref: (NP, H)   final hidden (== hidden at each row's length)
    """
    NP, H = h0_ref.shape
    TN, _ = x2_ref.shape
    T = TN // NP

    # Input-path gates for all timesteps at once (3 batched matmuls total).
    x2 = x2_ref[...]
    gi_r = jnp.dot(x2, wi_ref[0], preferred_element_type=jnp.float32) + bi_ref[0]
    gi_z = jnp.dot(x2, wi_ref[1], preferred_element_type=jnp.float32) + bi_ref[1]
    gi_n = jnp.dot(x2, wi_ref[2], preferred_element_type=jnp.float32) + bi_ref[2]

    lens = len_ref[...]          # (NP, 1)
    h = h0_ref[...]              # (NP, H)
    for t in range(T):           # statically unrolled, T small
        sl = slice(t * NP, (t + 1) * NP)
        hr = jnp.dot(h, wh_ref[0], preferred_element_type=jnp.float32) + bh_ref[0]
        hz = jnp.dot(h, wh_ref[1], preferred_element_type=jnp.float32) + bh_ref[1]
        hn = jnp.dot(h, wh_ref[2], preferred_element_type=jnp.float32) + bh_ref[2]
        r = jax.nn.sigmoid(gi_r[sl] + hr)
        z = jax.nn.sigmoid(gi_z[sl] + hz)
        n = jnp.tanh(gi_n[sl] + r * hn)
        h_new = (1.0 - z) * n + z * h
        m = (lens > float(t)).astype(jnp.float32)      # freeze past length
        h = m * h_new + (1.0 - m) * h
        seq_ref[sl, :] = h
    hfin_ref[...] = h


def decoder_kernel(x2_ref, h0_ref, wi_ref, wh_ref, bi_ref, bh_ref,
                   wo_ref, bo_ref, logits_ref, h_scr):
    """Teacher-forced GRU decoder + single batched vocab projection.

    x2_ref : (S*NP, E) time-major flat embeddings; h0_ref: (NP, H)
    wo_ref : (H, V), bo_ref: (1, V); logits_ref: (S*NP, V)
    h_scr  : (S*NP, H) VMEM scratch collecting per-step hidden states.
    """
    NP, H = h0_ref.shape
    TN, _ = x2_ref.shape
    T = TN // NP

    x2 = x2_ref[...]
    gi_r = jnp.dot(x2, wi_ref[0], preferred_element_type=jnp.float32) + bi_ref[0]
    gi_z = jnp.dot(x2, wi_ref[1], preferred_element_type=jnp.float32) + bi_ref[1]
    gi_n = jnp.dot(x2, wi_ref[2], preferred_element_type=jnp.float32) + bi_ref[2]

    h = h0_ref[...]
    for t in range(T):
        sl = slice(t * NP, (t + 1) * NP)
        hr = jnp.dot(h, wh_ref[0], preferred_element_type=jnp.float32) + bh_ref[0]
        hz = jnp.dot(h, wh_ref[1], preferred_element_type=jnp.float32) + bh_ref[1]
        hn = jnp.dot(h, wh_ref[2], preferred_element_type=jnp.float32) + bh_ref[2]
        r = jax.nn.sigmoid(gi_r[sl] + hr)
        z = jax.nn.sigmoid(gi_z[sl] + hz)
        n = jnp.tanh(gi_n[sl] + r * hn)
        h = (1.0 - z) * n + z * h
        h_scr[sl, :] = h

    # One big matmul for the vocab projection (instead of one per step).
    h_all = h_scr[...]
    logits_ref[...] = (jnp.dot(h_all, wo_ref[...], preferred_element_type=jnp.float32)
                       + bo_ref[...])


def latent_kernel(ctx_ref, enc_ref, eps_ref,
                  pw1_ref, pb1_ref, pw2_ref, pb2_ref,
                  pwmu_ref, pbmu_ref, pwvar_ref, pbvar_ref,
                  qw1c_ref, qw1e_ref, qb1_ref, qw2_ref, qb2_ref,
                  qwmu_ref, qbmu_ref, qwvar_ref, qbvar_ref,
                  cwc_ref, cwz_ref, cb_ref,
                  dec_init_ref, kl_ref):
    """Fused prior + posterior + reparameterize + KL + context2decoder."""
    ctx = ctx_ref[...]
    enc = enc_ref[...]
    eps = eps_ref[...]

    def mm(a, w_ref, b_ref):
        return jnp.dot(a, w_ref[...], preferred_element_type=jnp.float32) + b_ref[...]

    # prior network (FeedForward x2 + mu / softplus(var))
    h = jnp.tanh(mm(ctx, pw1_ref, pb1_ref))
    h = jnp.tanh(mm(h, pw2_ref, pb2_ref))
    mu_p = mm(h, pwmu_ref, pbmu_ref)
    var_p = jax.nn.softplus(mm(h, pwvar_ref, pbvar_ref))

    # posterior network; split weight == concat([ctx, enc], 1) @ W (no lane concat)
    h = jnp.tanh(jnp.dot(ctx, qw1c_ref[...], preferred_element_type=jnp.float32)
                 + jnp.dot(enc, qw1e_ref[...], preferred_element_type=jnp.float32)
                 + qb1_ref[...])
    h = jnp.tanh(mm(h, qw2_ref, qb2_ref))
    mu_q = mm(h, qwmu_ref, qbmu_ref)
    var_q = jax.nn.softplus(mm(h, qwvar_ref, qbvar_ref))

    # reparameterize + KL(q || p)
    z = mu_q + jnp.sqrt(var_q) * eps
    kl = 0.5 * (jnp.log(var_p) - jnp.log(var_q)
                + (var_q + (mu_q - mu_p) ** 2) / var_p - 1.0)
    kl_ref[...] = jnp.sum(kl)[None, None]

    # context2decoder: tanh(concat([ctx, z]) @ W + b), split-weight form
    dec_init_ref[...] = jnp.tanh(
        jnp.dot(ctx, cwc_ref[...], preferred_element_type=jnp.float32)
        + jnp.dot(z, cwz_ref[...], preferred_element_type=jnp.float32)
        + cb_ref[...])


# ----------------------------------------------------------------------------
# Wrappers around pallas_call (no grid; single invocation each, all-VMEM)
# ----------------------------------------------------------------------------
def gru_forward(x_flat, lens_pad, h_dim, gp):
    TN, _ = x_flat.shape
    NP = lens_pad.shape[0]
    h0 = jnp.zeros((NP, h_dim), jnp.float32)
    seq, hfin = pl.pallas_call(
        gru_kernel,
        out_shape=(jax.ShapeDtypeStruct((TN, h_dim), jnp.float32),
                   jax.ShapeDtypeStruct((NP, h_dim), jnp.float32)),
    )(x_flat, lens_pad, h0, gp["wi"], gp["wh"], gp["bi"], gp["bh"])
    return seq, hfin


def decoder_forward(x_flat, h0_pad, gp, wo, bo):
    TN, _ = x_flat.shape
    H = h0_pad.shape[1]
    V = wo.shape[1]
    logits = pl.pallas_call(
        decoder_kernel,
        out_shape=jax.ShapeDtypeStruct((TN, V), jnp.float32),
        scratch_shapes=[pltpu.VMEM((TN, H), jnp.float32)],
    )(x_flat, h0_pad, gp["wi"], gp["wh"], gp["bi"], gp["bh"], wo, bo)
    return logits


def latent_forward(ctx, enc, eps, p):
    M = ctx.shape[0]
    dec_h = p["c2d_wc"].shape[1]
    dec_init, kl = pl.pallas_call(
        latent_kernel,
        out_shape=(jax.ShapeDtypeStruct((M, dec_h), jnp.float32),
                   jax.ShapeDtypeStruct((1, 1), jnp.float32)),
    )(ctx, enc, eps,
      p["prior_w1"], p["prior_b1"], p["prior_w2"], p["prior_b2"],
      p["prior_wmu"], p["prior_bmu"], p["prior_wvar"], p["prior_bvar"],
      p["post_w1c"], p["post_w1e"], p["post_b1"], p["post_w2"], p["post_b2"],
      p["post_wmu"], p["post_bmu"], p["post_wvar"], p["post_bvar"],
      p["c2d_wc"], p["c2d_wz"], p["c2d_b"])
    return dec_init, kl[0, 0]


def _time_major_flat_pad(x_nte, NP):
    """(N, T, E) token-major -> (T*NP, E) time-major with batch padded to NP."""
    N, T, E = x_nte.shape
    x = jnp.transpose(x_nte, (1, 0, 2))
    x = jnp.pad(x, ((0, 0), (0, NP - N), (0, 0)))
    return x.reshape(T * NP, E)


# ----------------------------------------------------------------------------
# Parameter construction (deterministic, synthetic)
# ----------------------------------------------------------------------------
def make_params(key, vocab, emb, enc_h, ctx, dec_h, z_dim):
    keys = iter(jax.random.split(key, 64))

    def nxt(shape, scale=0.1):
        return (scale * jax.random.normal(next(keys), shape)).astype(jnp.float32)

    def gru(in_dim, h):
        return dict(wi=nxt((3, in_dim, h)), wh=nxt((3, h, h)),
                    bi=nxt((3, 1, h)), bh=nxt((3, 1, h)))

    return dict(
        embedding=nxt((vocab, emb)),                 # tied encoder/decoder embedding
        enc_gru=gru(emb, enc_h),
        ctx_gru=gru(enc_h, ctx),                     # num_layers * enc_h * num_dirs = enc_h
        dec_gru=gru(emb, dec_h),
        dec_out_w=nxt((dec_h, vocab)), dec_out_b=nxt((1, vocab)),
        prior_w1=nxt((ctx, ctx)), prior_b1=nxt((1, ctx)),
        prior_w2=nxt((ctx, ctx)), prior_b2=nxt((1, ctx)),
        prior_wmu=nxt((ctx, z_dim)), prior_bmu=nxt((1, z_dim)),
        prior_wvar=nxt((ctx, z_dim)), prior_bvar=nxt((1, z_dim)),
        # posterior first layer stored row-split: [ctx-part ; enc-part]
        post_w1c=nxt((ctx, ctx)), post_w1e=nxt((enc_h, ctx)), post_b1=nxt((1, ctx)),
        post_w2=nxt((ctx, ctx)), post_b2=nxt((1, ctx)),
        post_wmu=nxt((ctx, z_dim)), post_bmu=nxt((1, z_dim)),
        post_wvar=nxt((ctx, z_dim)), post_bvar=nxt((1, z_dim)),
        # context2decoder stored row-split: [ctx-part ; z-part]
        c2d_wc=nxt((ctx, dec_h)), c2d_wz=nxt((z_dim, dec_h)), c2d_b=nxt((1, dec_h)),
    )


# ----------------------------------------------------------------------------
# VHRED forward (decode=False path)
# ----------------------------------------------------------------------------
def vhred_forward(params, utterances, utterance_length, conv_len_list,
                  target_utterances, eps, sos_id=1):
    num_utt, T = utterances.shape
    B = len(conv_len_list)
    max_conv = max(conv_len_list)
    enc_h = params["enc_gru"]["wh"].shape[1]
    ctx_h = params["ctx_gru"]["wh"].shape[1]

    UP = _round_up(num_utt)      # padded utterance batch for encoder GRU
    BP = _round_up(B)            # padded conversation batch for context GRU

    # --- EncoderRNN: embed + masked GRU (pack_padded semantics) -------------
    emb = jnp.take(params["embedding"], utterances, axis=0)           # (num_utt, T, E)
    x_flat = _time_major_flat_pad(emb, UP)                            # (T*UP, E)
    lens = jnp.pad(utterance_length.astype(jnp.float32), (0, UP - num_utt))
    _, enc_hfin = gru_forward(x_flat, lens.reshape(UP, 1), enc_h, params["enc_gru"])
    encoder_hidden = enc_hfin[:num_utt]                               # (num_utt, enc_h)

    # --- static segment index arrays (host) -> single gathers ---------------
    starts = [0]
    for l in conv_len_list[:-1]:
        starts.append(starts[-1] + l + 1)

    ctx_in_idx = []                                  # time-major (t, b) -> encoder row
    for t in range(max_conv):
        for b in range(BP):
            ok = (b < B) and (t < conv_len_list[b])
            ctx_in_idx.append(starts[b] + t if ok else 0)
    ctx_in_idx = jnp.array(ctx_in_idx, jnp.int32)

    inf_idx = jnp.array([starts[b] + 1 + t
                         for b in range(B) for t in range(conv_len_list[b])], jnp.int32)
    ctx_out_idx = jnp.array([t * BP + b
                             for b in range(B) for t in range(conv_len_list[b])], jnp.int32)

    enc_inference_flat = jnp.take(encoder_hidden, inf_idx, axis=0)    # (M, enc_h)

    # --- ContextRNN over conversation turns ----------------------------------
    ctx_x_flat = jnp.take(encoder_hidden, ctx_in_idx, axis=0)         # (max_conv*BP, enc_h)
    conv_lens = jnp.pad(jnp.array(conv_len_list, jnp.float32), (0, BP - B))
    ctx_seq_flat, _ = gru_forward(ctx_x_flat, conv_lens.reshape(BP, 1),
                                  ctx_h, params["ctx_gru"])
    context_outputs = jnp.take(ctx_seq_flat, ctx_out_idx, axis=0)     # (M, ctx_h)

    # --- fused prior / posterior / reparameterize / KL / context2decoder ----
    decoder_init, kl_div = latent_forward(context_outputs, enc_inference_flat,
                                          eps, params)

    # --- DecoderRNN (teacher forcing: SOS + target[:, :-1]) + projection ----
    n_tgt, S = target_utterances.shape
    NP = _round_up(n_tgt)
    dec_tokens = jnp.concatenate(
        [jnp.full((n_tgt, 1), sos_id, jnp.int32), target_utterances[:, :-1]], axis=1)
    dec_emb = jnp.take(params["embedding"], dec_tokens, axis=0)       # tied embedding
    dec_x_flat = _time_major_flat_pad(dec_emb, NP)                    # (S*NP, E)
    h0_pad = jnp.pad(decoder_init, ((0, NP - n_tgt), (0, 0)))
    logits_flat = decoder_forward(dec_x_flat, h0_pad, params["dec_gru"],
                                  params["dec_out_w"], params["dec_out_b"])
    decoder_outputs = jnp.transpose(
        logits_flat.reshape(S, NP, -1)[:, :n_tgt, :], (1, 0, 2))      # (n_tgt, S, V)

    return decoder_outputs, kl_div


# ----------------------------------------------------------------------------
if __name__ == "__main__":
    VOCAB, EMB, ENC_H, CTX, DEC_H, Z = 64, 16, 32, 32, 32, 16
    MAX_UTTER_LEN, SEQ_LEN = 8, 8
    conv_len_list = [3, 2]                                # batch_size = 2
    batch_size = len(conv_len_list)
    num_utterances = sum(l + 1 for l in conv_len_list)    # 7
    num_targets = num_utterances - batch_size             # 5

    root = jax.random.PRNGKey(0)
    k_par, k_utt, k_len, k_tgt, k_eps = jax.random.split(root, 5)

    params = make_params(k_par, VOCAB, EMB, ENC_H, CTX, DEC_H, Z)

    utterances = jax.random.randint(k_utt, (num_utterances, MAX_UTTER_LEN), 2, VOCAB,
                                    dtype=jnp.int32)
    utterance_length = jax.random.randint(k_len, (num_utterances,), 1, MAX_UTTER_LEN + 1,
                                          dtype=jnp.int32)
    target_utterances = jax.random.randint(k_tgt, (num_targets, SEQ_LEN), 2, VOCAB,
                                           dtype=jnp.int32)
    eps = jax.random.normal(k_eps, (num_targets, Z), jnp.float32)

    decoder_outputs, kl_div = vhred_forward(
        params, utterances, utterance_length, conv_len_list, target_utterances, eps)

    jax.block_until_ready(decoder_outputs)
    jax.block_until_ready(kl_div)

    assert decoder_outputs.shape == (num_targets, SEQ_LEN, VOCAB)
    assert kl_div.shape == ()
    print("KERNEL_OK")
</pallas_src>

<mosaic_0001>
module attributes {stable_mosaic.version = 11 : i64} {
  func.func @gru_kernel(%arg0: memref<64x16xf32, #tpu.memory_space<vmem>>, %arg1: memref<8x1xf32, #tpu.memory_space<vmem>>, %arg2: memref<8x32xf32, #tpu.memory_space<vmem>>, %arg3: memref<3x16x32xf32, #tpu.memory_space<vmem>>, %arg4: memref<3x32x32xf32, #tpu.memory_space<vmem>>, %arg5: memref<3x1x32xf32, #tpu.memory_space<vmem>>, %arg6: memref<3x1x32xf32, #tpu.memory_space<vmem>>, %arg7: memref<64x32xf32, #tpu.memory_space<vmem>>, %arg8: memref<8x32xf32, #tpu.memory_space<vmem>>) attributes {dimension_semantics = [], scalar_prefetch = 0 : i64, scratch_operands = 0 : i64, tpu.core_type = #tpu.core_type<tc>} {
    %c0 = arith.constant 0 : index
    %c0_0 = arith.constant 0 : index
    %0 = vector.load %arg0[%c0, %c0_0] : memref<64x16xf32, #tpu.memory_space<vmem>>, vector<64x16xf32>
    %c0_1 = arith.constant 0 : index
    %c0_2 = arith.constant 0 : index
    %c0_3 = arith.constant 0 : index
    %1 = vector.load %arg3[%c0_1, %c0_2, %c0_3] : memref<3x16x32xf32, #tpu.memory_space<vmem>>, vector<1x16x32xf32>
    %2 = vector.shape_cast %1 : vector<1x16x32xf32> to vector<16x32xf32>
    %cst = arith.constant dense<0.000000e+00> : vector<64x32xf32>
    %3 = tpu.matmul %0, %2, %cst {dimension_numbers = #tpu.dot_dimension_numbers<[1], [0], [0], [1], [0, 0, 1, 1], [], []>} : vector<64x16xf32>, vector<16x32xf32>, vector<64x32xf32> -> vector<64x32xf32>
    %c0_4 = arith.constant 0 : index
    %c0_5 = arith.constant 0 : index
    %c0_6 = arith.constant 0 : index
    %4 = vector.load %arg5[%c0_4, %c0_5, %c0_6] : memref<3x1x32xf32, #tpu.memory_space<vmem>>, vector<1x1x32xf32>
    %5 = vector.shape_cast %4 : vector<1x1x32xf32> to vector<1x32xf32>
    %6 = vector.broadcast %5 : vector<1x32xf32> to vector<64x32xf32>
    %7 = arith.addf %3, %6 : vector<64x32xf32>
    %c1 = arith.constant 1 : index
    %c0_7 = arith.constant 0 : index
    %c0_8 = arith.constant 0 : index
    %8 = vector.load %arg3[%c1, %c0_7, %c0_8] : memref<3x16x32xf32, #tpu.memory_space<vmem>>, vector<1x16x32xf32>
    %9 = vector.shape_cast %8 : vector<1x16x32xf32> to vector<16x32xf32>
    %cst_9 = arith.constant dense<0.000000e+00> : vector<64x32xf32>
    %10 = tpu.matmul %0, %9, %cst_9 {dimension_numbers = #tpu.dot_dimension_numbers<[1], [0], [0], [1], [0, 0, 1, 1], [], []>} : vector<64x16xf32>, vector<16x32xf32>, vector<64x32xf32> -> vector<64x32xf32>
    %c1_10 = arith.constant 1 : index
    %c0_11 = arith.constant 0 : index
    %c0_12 = arith.constant 0 : index
    %11 = vector.load %arg5[%c1_10, %c0_11, %c0_12] : memref<3x1x32xf32, #tpu.memory_space<vmem>>, vector<1x1x32xf32>
    %12 = vector.shape_cast %11 : vector<1x1x32xf32> to vector<1x32xf32>
    %13 = vector.broadcast %12 : vector<1x32xf32> to vector<64x32xf32>
    %14 = arith.addf %10, %13 : vector<64x32xf32>
    %c2 = arith.constant 2 : index
    %c0_13 = arith.constant 0 : index
    %c0_14 = arith.constant 0 : index
    %15 = vector.load %arg3[%c2, %c0_13, %c0_14] : memref<3x16x32xf32, #tpu.memory_space<vmem>>, vector<1x16x32xf32>
    %16 = vector.shape_cast %15 : vector<1x16x32xf32> to vector<16x32xf32>
    %cst_15 = arith.constant dense<0.000000e+00> : vector<64x32xf32>
    %17 = tpu.matmul %0, %16, %cst_15 {dimension_numbers = #tpu.dot_dimension_numbers<[1], [0], [0], [1], [0, 0, 1, 1], [], []>} : vector<64x16xf32>, vector<16x32xf32>, vector<64x32xf32> -> vector<64x32xf32>
    %c2_16 = arith.constant 2 : index
    %c0_17 = arith.constant 0 : index
    %c0_18 = arith.constant 0 : index
    %18 = vector.load %arg5[%c2_16, %c0_17, %c0_18] : memref<3x1x32xf32, #tpu.memory_space<vmem>>, vector<1x1x32xf32>
    %19 = vector.shape_cast %18 : vector<1x1x32xf32> to vector<1x32xf32>
    %20 = vector.broadcast %19 : vector<1x32xf32> to vector<64x32xf32>
    %21 = arith.addf %17, %20 : vector<64x32xf32>
    %c0_19 = arith.constant 0 : index
    %c0_20 = arith.constant 0 : index
    %22 = vector.load %arg1[%c0_19, %c0_20] : memref<8x1xf32, #tpu.memory_space<vmem>>, vector<8x1xf32>
    %c0_21 = arith.constant 0 : index
    %c0_22 = arith.constant 0 : index
    %23 = vector.load %arg2[%c0_21, %c0_22] : memref<8x32xf32, #tpu.memory_space<vmem>>, vector<8x32xf32>
    %c0_23 = arith.constant 0 : index
    %c0_24 = arith.constant 0 : index
    %c0_25 = arith.constant 0 : index
    %24 = vector.load %arg4[%c0_23, %c0_24, %c0_25] : memref<3x32x32xf32, #tpu.memory_space<vmem>>, vector<1x32x32xf32>
    %25 = vector.shape_cast %24 : vector<1x32x32xf32> to vector<32x32xf32>
    %cst_26 = arith.constant dense<0.000000e+00> : vector<8x32xf32>
    %26 = tpu.matmul %23, %25, %cst_26 {dimension_numbers = #tpu.dot_dimension_numbers<[1], [0], [0], [1], [0, 0, 1, 1], [], []>} : vector<8x32xf32>, vector<32x32xf32>, vector<8x32xf32> -> vector<8x32xf32>
    %c0_27 = arith.constant 0 : index
    %c0_28 = arith.constant 0 : index
    %c0_29 = arith.constant 0 : index
    %27 = vector.load %arg6[%c0_27, %c0_28, %c0_29] : memref<3x1x32xf32, #tpu.memory_space<vmem>>, vector<1x1x32xf32>
    %28 = vector.shape_cast %27 : vector<1x1x32xf32> to vector<1x32xf32>
    %29 = vector.broadcast %28 : vector<1x32xf32> to vector<8x32xf32>
    %30 = arith.addf %26, %29 : vector<8x32xf32>
    %c1_30 = arith.constant 1 : index
    %c0_31 = arith.constant 0 : index
    %c0_32 = arith.constant 0 : index
    %31 = vector.load %arg4[%c1_30, %c0_31, %c0_32] : memref<3x32x32xf32, #tpu.memory_space<vmem>>, vector<1x32x32xf32>
    %32 = vector.shape_cast %31 : vector<1x32x32xf32> to vector<32x32xf32>
    %cst_33 = arith.constant dense<0.000000e+00> : vector<8x32xf32>
    %33 = tpu.matmul %23, %32, %cst_33 {dimension_numbers = #tpu.dot_dimension_numbers<[1], [0], [0], [1], [0, 0, 1, 1], [], []>} : vector<8x32xf32>, vector<32x32xf32>, vector<8x32xf32> -> vector<8x32xf32>
    %c1_34 = arith.constant 1 : index
    %c0_35 = arith.constant 0 : index
    %c0_36 = arith.constant 0 : index
    %34 = vector.load %arg6[%c1_34, %c0_35, %c0_36] : memref<3x1x32xf32, #tpu.memory_space<vmem>>, vector<1x1x32xf32>
    %35 = vector.shape_cast %34 : vector<1x1x32xf32> to vector<1x32xf32>
    %36 = vector.broadcast %35 : vector<1x32xf32> to vector<8x32xf32>
    %37 = arith.addf %33, %36 : vector<8x32xf32>
    %c2_37 = arith.constant 2 : index
    %c0_38 = arith.constant 0 : index
    %c0_39 = arith.constant 0 : index
    %38 = vector.load %arg4[%c2_37, %c0_38, %c0_39] : memref<3x32x32xf32, #tpu.memory_space<vmem>>, vector<1x32x32xf32>
    %39 = vector.shape_cast %38 : vector<1x32x32xf32> to vector<32x32xf32>
    %cst_40 = arith.constant dense<0.000000e+00> : vector<8x32xf32>
    %40 = tpu.matmul %23, %39, %cst_40 {dimension_numbers = #tpu.dot_dimension_numbers<[1], [0], [0], [1], [0, 0, 1, 1], [], []>} : vector<8x32xf32>, vector<32x32xf32>, vector<8x32xf32> -> vector<8x32xf32>
    %c2_41 = arith.constant 2 : index
    %c0_42 = arith.constant 0 : index
    %c0_43 = arith.constant 0 : index
    %41 = vector.load %arg6[%c2_41, %c0_42, %c0_43] : memref<3x1x32xf32, #tpu.memory_space<vmem>>, vector<1x1x32xf32>
    %42 = vector.shape_cast %41 : vector<1x1x32xf32> to vector<1x32xf32>
    %43 = vector.broadcast %42 : vector<1x32xf32> to vector<8x32xf32>
    %44 = arith.addf %40, %43 : vector<8x32xf32>
    %45 = vector.extract_strided_slice %7 {offsets = [0, 0], sizes = [8, 32], strides = [1, 1]} : vector<64x32xf32> to vector<8x32xf32>
    %46 = arith.addf %45, %30 : vector<8x32xf32>
    %47 = arith.negf %46 : vector<8x32xf32>
    %48 = math.exp %47 : vector<8x32xf32>
    %cst_44 = arith.constant 1.000000e+00 : f32
    %49 = vector.broadcast %cst_44 : f32 to vector<8x32xf32>
    %50 = arith.addf %49, %48 : vector<8x32xf32>
    %51 = arith.divf %49, %50 : vector<8x32xf32>
    %52 = vector.extract_strided_slice %14 {offsets = [0, 0], sizes = [8, 32], strides = [1, 1]} : vector<64x32xf32> to vector<8x32xf32>
    %53 = arith.addf %52, %37 : vector<8x32xf32>
    %54 = arith.negf %53 : vector<8x32xf32>
    %55 = math.exp %54 : vector<8x32xf32>
    %cst_45 = arith.constant 1.000000e+00 : f32
    %56 = vector.broadcast %cst_45 : f32 to vector<8x32xf32>
    %57 = arith.addf %56, %55 : vector<8x32xf32>
    %58 = arith.divf %56, %57 : vector<8x32xf32>
    %59 = vector.extract_strided_slice %21 {offsets = [0, 0], sizes = [8, 32], strides = [1, 1]} : vector<64x32xf32> to vector<8x32xf32>
    %60 = arith.mulf %51, %44 : vector<8x32xf32>
    %61 = arith.addf %59, %60 : vector<8x32xf32>
    %62 = math.tanh %61 : vector<8x32xf32>
    %cst_46 = arith.constant 1.000000e+00 : f32
    %63 = vector.broadcast %cst_46 : f32 to vector<8x32xf32>
    %64 = arith.subf %63, %58 : vector<8x32xf32>
    %65 = arith.mulf %64, %62 : vector<8x32xf32>
    %66 = arith.mulf %58, %23 : vector<8x32xf32>
    %67 = arith.addf %65, %66 : vector<8x32xf32>
    %cst_47 = arith.constant 0.000000e+00 : f32
    %68 = vector.broadcast %cst_47 : f32 to vector<8x1xf32>
    %69 = arith.cmpf ogt, %22, %68 : vector<8x1xf32>
    %70 = arith.extui %69 : vector<8x1xi1> to vector<8x1xi32>
    %71 = arith.sitofp %70 : vector<8x1xi32> to vector<8x1xf32>
    %72 = vector.broadcast %71 : vector<8x1xf32> to vector<8x32xf32>
    %73 = arith.mulf %72, %67 : vector<8x32xf32>
    %cst_48 = arith.constant 1.000000e+00 : f32
    %74 = vector.broadcast %cst_48 : f32 to vector<8x1xf32>
    %75 = arith.subf %74, %71 : vector<8x1xf32>
    %76 = vector.broadcast %75 : vector<8x1xf32> to vector<8x32xf32>
    %77 = arith.mulf %76, %23 : vector<8x32xf32>
    %78 = arith.addf %73, %77 : vector<8x32xf32>
    %c0_49 = arith.constant 0 : index
    %c0_50 = arith.constant 0 : index
    %79 = vector.load %arg7[%c0_49, %c0_50] : memref<64x32xf32, #tpu.memory_space<vmem>>, vector<8x32xf32>
    tpu.vector_store %arg7[%c0_49, %c0_50], %78 {strides = array<i32>} : memref<64x32xf32, #tpu.memory_space<vmem>>, vector<8x32xf32>,
    %c0_51 = arith.constant 0 : index
    %c0_52 = arith.constant 0 : index
    %c0_53 = arith.constant 0 : index
    %80 = vector.load %arg4[%c0_51, %c0_52, %c0_53] : memref<3x32x32xf32, #tpu.memory_space<vmem>>, vector<1x32x32xf32>
    %81 = vector.shape_cast %80 : vector<1x32x32xf32> to vector<32x32xf32>
    %cst_54 = arith.constant dense<0.000000e+00> : vector<8x32xf32>
    %82 = tpu.matmul %78, %81, %cst_54 {dimension_numbers = #tpu.dot_dimension_numbers<[1], [0], [0], [1], [0, 0, 1, 1], [], []>} : vector<8x32xf32>, vector<32x32xf32>, vector<8x32xf32> -> vector<8x32xf32>
    %c0_55 = arith.constant 0 : index
    %c0_56 = arith.constant 0 : index
    %c0_57 = arith.constant 0 : index
    %83 = vector.load %arg6[%c0_55, %c0_56, %c0_57] : memref<3x1x32xf32, #tpu.memory_space<vmem>>, vector<1x1x32xf32>
    %84 = vector.shape_cast %83 : vector<1x1x32xf32> to vector<1x32xf32>
    %85 = vector.broadcast %84 : vector<1x32xf32> to vector<8x32xf32>
    %86 = arith.addf %82, %85 : vector<8x32xf32>
    %c1_58 = arith.constant 1 : index
    %c0_59 = arith.constant 0 : index
    %c0_60 = arith.constant 0 : index
    %87 = vector.load %arg4[%c1_58, %c0_59, %c0_60] : memref<3x32x32xf32, #tpu.memory_space<vmem>>, vector<1x32x32xf32>
    %88 = vector.shape_cast %87 : vector<1x32x32xf32> to vector<32x32xf32>
    %cst_61 = arith.constant dense<0.000000e+00> : vector<8x32xf32>
    %89 = tpu.matmul %78, %88, %cst_61 {dimension_numbers = #tpu.dot_dimension_numbers<[1], [0], [0], [1], [0, 0, 1, 1], [], []>} : vector<8x32xf32>, vector<32x32xf32>, vector<8x32xf32> -> vector<8x32xf32>
    %c1_62 = arith.constant 1 : index
    %c0_63 = arith.constant 0 : index
    %c0_64 = arith.constant 0 : index
    %90 = vector.load %arg6[%c1_62, %c0_63, %c0_64] : memref<3x1x32xf32, #tpu.memory_space<vmem>>, vector<1x1x32xf32>
    %91 = vector.shape_cast %90 : vector<1x1x32xf32> to vector<1x32xf32>
    %92 = vector.broadcast %91 : vector<1x32xf32> to vector<8x32xf32>
    %93 = arith.addf %89, %92 : vector<8x32xf32>
    %c2_65 = arith.constant 2 : index
    %c0_66 = arith.constant 0 : index
    %c0_67 = arith.constant 0 : index
    %94 = vector.load %arg4[%c2_65, %c0_66, %c0_67] : memref<3x32x32xf32, #tpu.memory_space<vmem>>, vector<1x32x32xf32>
    %95 = vector.shape_cast %94 : vector<1x32x32xf32> to vector<32x32xf32>
    %cst_68 = arith.constant dense<0.000000e+00> : vector<8x32xf32>
    %96 = tpu.matmul %78, %95, %cst_68 {dimension_numbers = #tpu.dot_dimension_numbers<[1], [0], [0], [1], [0, 0, 1, 1], [], []>} : vector<8x32xf32>, vector<32x32xf32>, vector<8x32xf32> -> vector<8x32xf32>
    %c2_69 = arith.constant 2 : index
    %c0_70 = arith.constant 0 : index
    %c0_71 = arith.constant 0 : index
    %97 = vector.load %arg6[%c2_69, %c0_70, %c0_71] : memref<3x1x32xf32, #tpu.memory_space<vmem>>, vector<1x1x32xf32>
    %98 = vector.shape_cast %97 : vector<1x1x32xf32> to vector<1x32xf32>
    %99 = vector.broadcast %98 : vector<1x32xf32> to vector<8x32xf32>
    %100 = arith.addf %96, %99 : vector<8x32xf32>
    %101 = vector.extract_strided_slice %7 {offsets = [8, 0], sizes = [8, 32], strides = [1, 1]} : vector<64x32xf32> to vector<8x32xf32>
    %102 = arith.addf %101, %86 : vector<8x32xf32>
    %103 = arith.negf %102 : vector<8x32xf32>
    %104 = math.exp %103 : vector<8x32xf32>
    %cst_72 = arith.constant 1.000000e+00 : f32
    %105 = vector.broadcast %cst_72 : f32 to vector<8x32xf32>
    %106 = arith.addf %105, %104 : vector<8x32xf32>
    %107 = arith.divf %105, %106 : vector<8x32xf32>
    %108 = vector.extract_strided_slice %14 {offsets = [8, 0], sizes = [8, 32], strides = [1, 1]} : vector<64x32xf32> to vector<8x32xf32>
    %109 = arith.addf %108, %93 : vector<8x32xf32>
    %110 = arith.negf %109 : vector<8x32xf32>
    %111 = math.exp %110 : vector<8x32xf32>
    %cst_73 = arith.constant 1.000000e+00 : f32
    %112 = vector.broadcast %cst_73 : f32 to vector<8x32xf32>
    %113 = arith.addf %112, %111 : vector<8x32xf32>
    %114 = arith.divf %112, %113 : vector<8x32xf32>
    %115 = vector.extract_strided_slice %21 {offsets = [8, 0], sizes = [8, 32], strides = [1, 1]} : vector<64x32xf32> to vector<8x32xf32>
    %116 = arith.mulf %107, %100 : vector<8x32xf32>
    %117 = arith.addf %115, %116 : vector<8x32xf32>
    %118 = math.tanh %117 : vector<8x32xf32>
    %cst_74 = arith.constant 1.000000e+00 : f32
    %119 = vector.broadcast %cst_74 : f32 to vector<8x32xf32>
    %120 = arith.subf %119, %114 : vector<8x32xf32>
    %121 = arith.mulf %120, %118 : vector<8x32xf32>
    %122 = arith.mulf %114, %78 : vector<8x32xf32>
    %123 = arith.addf %121, %122 : vector<8x32xf32>
    %cst_75 = arith.constant 1.000000e+00 : f32
    %124 = vector.broadcast %cst_75 : f32 to vector<8x1xf32>
    %125 = arith.cmpf ogt, %22, %124 : vector<8x1xf32>
    %126 = arith.extui %125 : vector<8x1xi1> to vector<8x1xi32>
    %127 = arith.sitofp %126 : vector<8x1xi32> to vector<8x1xf32>
    %128 = vector.broadcast %127 : vector<8x1xf32> to vector<8x32xf32>
    %129 = arith.mulf %128, %123 : vector<8x32xf32>
    %cst_76 = arith.constant 1.000000e+00 : f32
    %130 = vector.broadcast %cst_76 : f32 to vector<8x1xf32>
    %131 = arith.subf %130, %127 : vector<8x1xf32>
    %132 = vector.broadcast %131 : vector<8x1xf32> to vector<8x32xf32>
    %133 = arith.mulf %132, %78 : vector<8x32xf32>
    %134 = arith.addf %129, %133 : vector<8x32xf32>
    %c8 = arith.constant 8 : index
    %c0_77 = arith.constant 0 : index
    %135 = vector.load %arg7[%c8, %c0_77] : memref<64x32xf32, #tpu.memory_space<vmem>>, vector<8x32xf32>
    tpu.vector_store %arg7[%c8, %c0_77], %134 {strides = array<i32>} : memref<64x32xf32, #tpu.memory_space<vmem>>, vector<8x32xf32>,
    %c0_78 = arith.constant 0 : index
    %c0_79 = arith.constant 0 : index
    %c0_80 = arith.constant 0 : index
    %136 = vector.load %arg4[%c0_78, %c0_79, %c0_80] : memref<3x32x32xf32, #tpu.memory_space<vmem>>, vector<1x32x32xf32>
    %137 = vector.shape_cast %136 : vector<1x32x32xf32> to vector<32x32xf32>
    %cst_81 = arith.constant dense<0.000000e+00> : vector<8x32xf32>
    %138 = tpu.matmul %134, %137, %cst_81 {dimension_numbers = #tpu.dot_dimension_numbers<[1], [0], [0], [1], [0, 0, 1, 1], [], []>} : vector<8x32xf32>, vector<32x32xf32>, vector<8x32xf32> -> vector<8x32xf32>
    %c0_82 = arith.constant 0 : index
    %c0_83 = arith.constant 0 : index
    %c0_84 = arith.constant 0 : index
    %139 = vector.load %arg6[%c0_82, %c0_83, %c0_84] : memref<3x1x32xf32, #tpu.memory_space<vmem>>, vector<1x1x32xf32>
    %140 = vector.shape_cast %139 : vector<1x1x32xf32> to vector<1x32xf32>
    %141 = vector.broadcast %140 : vector<1x32xf32> to vector<8x32xf32>
    %142 = arith.addf %138, %141 : vector<8x32xf32>
    %c1_85 = arith.constant 1 : index
    %c0_86 = arith.constant 0 : index
    %c0_87 = arith.constant 0 : index
    %143 = vector.load %arg4[%c1_85, %c0_86, %c0_87] : memref<3x32x32xf32, #tpu.memory_space<vmem>>, vector<1x32x32xf32>
    %144 = vector.shape_cast %143 : vector<1x32x32xf32> to vector<32x32xf32>
    %cst_88 = arith.constant dense<0.000000e+00> : vector<8x32xf32>
    %145 = tpu.matmul %134, %144, %cst_88 {dimension_numbers = #tpu.dot_dimension_numbers<[1], [0], [0], [1], [0, 0, 1, 1], [], []>} : vector<8x32xf32>, vector<32x32xf32>, vector<8x32xf32> -> vector<8x32xf32>
    %c1_89 = arith.constant 1 : index
    %c0_90 = arith.constant 0 : index
    %c0_91 = arith.constant 0 : index
    %146 = vector.load %arg6[%c1_89, %c0_90, %c0_91] : memref<3x1x32xf32, #tpu.memory_space<vmem>>, vector<1x1x32xf32>
    %147 = vector.shape_cast %146 : vector<1x1x32xf32> to vector<1x32xf32>
    %148 = vector.broadcast %147 : vector<1x32xf32> to vector<8x32xf32>
    %149 = arith.addf %145, %148 : vector<8x32xf32>
    %c2_92 = arith.constant 2 : index
    %c0_93 = arith.constant 0 : index
    %c0_94 = arith.constant 0 : index
    %150 = vector.load %arg4[%c2_92, %c0_93, %c0_94] : memref<3x32x32xf32, #tpu.memory_space<vmem>>, vector<1x32x32xf32>
    %151 = vector.shape_cast %150 : vector<1x32x32xf32> to vector<32x32xf32>
    %cst_95 = arith.constant dense<0.000000e+00> : vector<8x32xf32>
    %152 = tpu.matmul %134, %151, %cst_95 {dimension_numbers = #tpu.dot_dimension_numbers<[1], [0], [0], [1], [0, 0, 1, 1], [], []>} : vector<8x32xf32>, vector<32x32xf32>, vector<8x32xf32> -> vector<8x32xf32>
    %c2_96 = arith.constant 2 : index
    %c0_97 = arith.constant 0 : index
    %c0_98 = arith.constant 0 : index
    %153 = vector.load %arg6[%c2_96, %c0_97, %c0_98] : memref<3x1x32xf32, #tpu.memory_space<vmem>>, vector<1x1x32xf32>
    %154 = vector.shape_cast %153 : vector<1x1x32xf32> to vector<1x32xf32>
    %155 = vector.broadcast %154 : vector<1x32xf32> to vector<8x32xf32>
    %156 = arith.addf %152, %155 : vector<8x32xf32>
    %157 = vector.extract_strided_slice %7 {offsets = [16, 0], sizes = [8, 32], strides = [1, 1]} : vector<64x32xf32> to vector<8x32xf32>
    %158 = arith.addf %157, %142 : vector<8x32xf32>
    %159 = arith.negf %158 : vector<8x32xf32>
    %160 = math.exp %159 : vector<8x32xf32>
    %cst_99 = arith.constant 1.000000e+00 : f32
    %161 = vector.broadcast %cst_99 : f32 to vector<8x32xf32>
    %162 = arith.addf %161, %160 : vector<8x32xf32>
    %163 = arith.divf %161, %162 : vector<8x32xf32>
    %164 = vector.extract_strided_slice %14 {offsets = [16, 0], sizes = [8, 32], strides = [1, 1]} : vector<64x32xf32> to vector<8x32xf32>
    %165 = arith.addf %164, %149 : vector<8x32xf32>
    %166 = arith.negf %165 : vector<8x32xf32>
    %167 = math.exp %166 : vector<8x32xf32>
    %cst_100 = arith.constant 1.000000e+00 : f32
    %168 = vector.broadcast %cst_100 : f32 to vector<8x32xf32>
    %169 = arith.addf %168, %167 : vector<8x32xf32>
    %170 = arith.divf %168, %169 : vector<8x32xf32>
    %171 = vector.extract_strided_slice %21 {offsets = [16, 0], sizes = [8, 32], strides = [1, 1]} : vector<64x32xf32> to vector<8x32xf32>
    %172 = arith.mulf %163, %156 : vector<8x32xf32>
    %173 = arith.addf %171, %172 : vector<8x32xf32>
    %174 = math.tanh %173 : vector<8x32xf32>
    %cst_101 = arith.constant 1.000000e+00 : f32
    %175 = vector.broadcast %cst_101 : f32 to vector<8x32xf32>
    %176 = arith.subf %175, %170 : vector<8x32xf32>
    %177 = arith.mulf %176, %174 : vector<8x32xf32>
    %178 = arith.mulf %170, %134 : vector<8x32xf32>
    %179 = arith.addf %177, %178 : vector<8x32xf32>
    %cst_102 = arith.constant 2.000000e+00 : f32
    %180 = vector.broadcast %cst_102 : f32 to vector<8x1xf32>
    %181 = arith.cmpf ogt, %22, %180 : vector<8x1xf32>
    %182 = arith.extui %181 : vector<8x1xi1> to vector<8x1xi32>
    %183 = arith.sitofp %182 : vector<8x1xi32> to vector<8x1xf32>
    %184 = vector.broadcast %183 : vector<8x1xf32> to vector<8x32xf32>
    %185 = arith.mulf %184, %179 : vector<8x32xf32>
    %cst_103 = arith.constant 1.000000e+00 : f32
    %186 = vector.broadcast %cst_103 : f32 to vector<8x1xf32>
    %187 = arith.subf %186, %183 : vector<8x1xf32>
    %188 = vector.broadcast %187 : vector<8x1xf32> to vector<8x32xf32>
    %189 = arith.mulf %188, %134 : vector<8x32xf32>
    %190 = arith.addf %185, %189 : vector<8x32xf32>
    %c16 = arith.constant 16 : index
    %c0_104 = arith.constant 0 : index
    %191 = vector.load %arg7[%c16, %c0_104] : memref<64x32xf32, #tpu.memory_space<vmem>>, vector<8x32xf32>
    tpu.vector_store %arg7[%c16, %c0_104], %190 {strides = array<i32>} : memref<64x32xf32, #tpu.memory_space<vmem>>, vector<8x32xf32>,
    %c0_105 = arith.constant 0 : index
    %c0_106 = arith.constant 0 : index
    %c0_107 = arith.constant 0 : index
    %192 = vector.load %arg4[%c0_105, %c0_106, %c0_107] : memref<3x32x32xf32, #tpu.memory_space<vmem>>, vector<1x32x32xf32>
    %193 = vector.shape_cast %192 : vector<1x32x32xf32> to vector<32x32xf32>
    %cst_108 = arith.constant dense<0.000000e+00> : vector<8x32xf32>
    %194 = tpu.matmul %190, %193, %cst_108 {dimension_numbers = #tpu.dot_dimension_numbers<[1], [0], [0], [1], [0, 0, 1, 1], [], []>} : vector<8x32xf32>, vector<32x32xf32>, vector<8x32xf32> -> vector<8x32xf32>
    %c0_109 = arith.constant 0 : index
    %c0_110 = arith.constant 0 : index
    %c0_111 = arith.constant 0 : index
    %195 = vector.load %arg6[%c0_109, %c0_110, %c0_111] : memref<3x1x32xf32, #tpu.memory_space<vmem>>, vector<1x1x32xf32>
    %196 = vector.shape_cast %195 : vector<1x1x32xf32> to vector<1x32xf32>
    %197 = vector.broadcast %196 : vector<1x32xf32> to vector<8x32xf32>
    %198 = arith.addf %194, %197 : vector<8x32xf32>
    %c1_112 = arith.constant 1 : index
    %c0_113 = arith.constant 0 : index
    %c0_114 = arith.constant 0 : index
    %199 = vector.load %arg4[%c1_112, %c0_113, %c0_114] : memref<3x32x32xf32, #tpu.memory_space<vmem>>, vector<1x32x32xf32>
    %200 = vector.shape_cast %199 : vector<1x32x32xf32> to vector<32x32xf32>
    %cst_115 = arith.constant dense<0.000000e+00> : vector<8x32xf32>
    %201 = tpu.matmul %190, %200, %cst_115 {dimension_numbers = #tpu.dot_dimension_numbers<[1], [0], [0], [1], [0, 0, 1, 1], [], []>} : vector<8x32xf32>, vector<32x32xf32>, vector<8x32xf32> -> vector<8x32xf32>
    %c1_116 = arith.constant 1 : index
    %c0_117 = arith.constant 0 : index
    %c0_118 = arith.constant 0 : index
    %202 = vector.load %arg6[%c1_116, %c0_117, %c0_118] : memref<3x1x32xf32, #tpu.memory_space<vmem>>, vector<1x1x32xf32>
    %203 = vector.shape_cast %202 : vector<1x1x32xf32> to vector<1x32xf32>
    %204 = vector.broadcast %203 : vector<1x32xf32> to vector<8x32xf32>
    %205 = arith.addf %201, %204 : vector<8x32xf32>
    %c2_119 = arith.constant 2 : index
    %c0_120 = arith.constant 0 : index
    %c0_121 = arith.constant 0 : index
    %206 = vector.load %arg4[%c2_119, %c0_120, %c0_121] : memref<3x32x32xf32, #tpu.memory_space<vmem>>, vector<1x32x32xf32>
    %207 = vector.shape_cast %206 : vector<1x32x32xf32> to vector<32x32xf32>
    %cst_122 = arith.constant dense<0.000000e+00> : vector<8x32xf32>
    %208 = tpu.matmul %190, %207, %cst_122 {dimension_numbers = #tpu.dot_dimension_numbers<[1], [0], [0], [1], [0, 0, 1, 1], [], []>} : vector<8x32xf32>, vector<32x32xf32>, vector<8x32xf32> -> vector<8x32xf32>
    %c2_123 = arith.constant 2 : index
    %c0_124 = arith.constant 0 : index
    %c0_125 = arith.constant 0 : index
    %209 = vector.load %arg6[%c2_123, %c0_124, %c0_125] : memref<3x1x32xf32, #tpu.memory_space<vmem>>, vector<1x1x32xf32>
    %210 = vector.shape_cast %209 : vector<1x1x32xf32> to vector<1x32xf32>
    %211 = vector.broadcast %210 : vector<1x32xf32> to vector<8x32xf32>
    %212 = arith.addf %208, %211 : vector<8x32xf32>
    %213 = vector.extract_strided_slice %7 {offsets = [24, 0], sizes = [8, 32], strides = [1, 1]} : vector<64x32xf32> to vector<8x32xf32>
    %214 = arith.addf %213, %198 : vector<8x32xf32>
    %215 = arith.negf %214 : vector<8x32xf32>
    %216 = math.exp %215 : vector<8x32xf32>
    %cst_126 = arith.constant 1.000000e+00 : f32
    %217 = vector.broadcast %cst_126 : f32 to vector<8x32xf32>
    %218 = arith.addf %217, %216 : vector<8x32xf32>
    %219 = arith.divf %217, %218 : vector<8x32xf32>
    %220 = vector.extract_strided_slice %14 {offsets = [24, 0], sizes = [8, 32], strides = [1, 1]} : vector<64x32xf32> to vector<8x32xf32>
    %221 = arith.addf %220, %205 : vector<8x32xf32>
    %222 = arith.negf %221 : vector<8x32xf32>
    %223 = math.exp %222 : vector<8x32xf32>
    %cst_127 = arith.constant 1.000000e+00 : f32
    %224 = vector.broadcast %cst_127 : f32 to vector<8x32xf32>
    %225 = arith.addf %224, %223 : vector<8x32xf32>
    %226 = arith.divf %224, %225 : vector<8x32xf32>
    %227 = vector.extract_strided_slice %21 {offsets = [24, 0], sizes = [8, 32], strides = [1, 1]} : vector<64x32xf32> to vector<8x32xf32>
    %228 = arith.mulf %219, %212 : vector<8x32xf32>
    %229 = arith.addf %227, %228 : vector<8x32xf32>
    %230 = math.tanh %229 : vector<8x32xf32>
    %cst_128 = arith.constant 1.000000e+00 : f32
    %231 = vector.broadcast %cst_128 : f32 to vector<8x32xf32>
    %232 = arith.subf %231, %226 : vector<8x32xf32>
    %233 = arith.mulf %232, %230 : vector<8x32xf32>
    %234 = arith.mulf %226, %190 : vector<8x32xf32>
    %235 = arith.addf %233, %234 : vector<8x32xf32>
    %cst_129 = arith.constant 3.000000e+00 : f32
    %236 = vector.broadcast %cst_129 : f32 to vector<8x1xf32>
    %237 = arith.cmpf ogt, %22, %236 : vector<8x1xf32>
    %238 = arith.extui %237 : vector<8x1xi1> to vector<8x1xi32>
    %239 = arith.sitofp %238 : vector<8x1xi32> to vector<8x1xf32>
    %240 = vector.broadcast %239 : vector<8x1xf32> to vector<8x32xf32>
    %241 = arith.mulf %240, %235 : vector<8x32xf32>
    %cst_130 = arith.constant 1.000000e+00 : f32
    %242 = vector.broadcast %cst_130 : f32 to vector<8x1xf32>
    %243 = arith.subf %242, %239 : vector<8x1xf32>
    %244 = vector.broadcast %243 : vector<8x1xf32> to vector<8x32xf32>
    %245 = arith.mulf %244, %190 : vector<8x32xf32>
    %246 = arith.addf %241, %245 : vector<8x32xf32>
    %c24 = arith.constant 24 : index
    %c0_131 = arith.constant 0 : index
    %247 = vector.load %arg7[%c24, %c0_131] : memref<64x32xf32, #tpu.memory_space<vmem>>, vector<8x32xf32>
    tpu.vector_store %arg7[%c24, %c0_131], %246 {strides = array<i32>} : memref<64x32xf32, #tpu.memory_space<vmem>>, vector<8x32xf32>,
    %c0_132 = arith.constant 0 : index
    %c0_133 = arith.constant 0 : index
    %c0_134 = arith.constant 0 : index
    %248 = vector.load %arg4[%c0_132, %c0_133, %c0_134] : memref<3x32x32xf32, #tpu.memory_space<vmem>>, vector<1x32x32xf32>
    %249 = vector.shape_cast %248 : vector<1x32x32xf32> to vector<32x32xf32>
    %cst_135 = arith.constant dense<0.000000e+00> : vector<8x32xf32>
    %250 = tpu.matmul %246, %249, %cst_135 {dimension_numbers = #tpu.dot_dimension_numbers<[1], [0], [0], [1], [0, 0, 1, 1], [], []>} : vector<8x32xf32>, vector<32x32xf32>, vector<8x32xf32> -> vector<8x32xf32>
    %c0_136 = arith.constant 0 : index
    %c0_137 = arith.constant 0 : index
    %c0_138 = arith.constant 0 : index
    %251 = vector.load %arg6[%c0_136, %c0_137, %c0_138] : memref<3x1x32xf32, #tpu.memory_space<vmem>>, vector<1x1x32xf32>
    %252 = vector.shape_cast %251 : vector<1x1x32xf32> to vector<1x32xf32>
    %253 = vector.broadcast %252 : vector<1x32xf32> to vector<8x32xf32>
    %254 = arith.addf %250, %253 : vector<8x32xf32>
    %c1_139 = arith.constant 1 : index
    %c0_140 = arith.constant 0 : index
    %c0_141 = arith.constant 0 : index
    %255 = vector.load %arg4[%c1_139, %c0_140, %c0_141] : memref<3x32x32xf32, #tpu.memory_space<vmem>>, vector<1x32x32xf32>
    %256 = vector.shape_cast %255 : vector<1x32x32xf32> to vector<32x32xf32>
    %cst_142 = arith.constant dense<0.000000e+00> : vector<8x32xf32>
    %257 = tpu.matmul %246, %256, %cst_142 {dimension_numbers = #tpu.dot_dimension_numbers<[1], [0], [0], [1], [0, 0, 1, 1], [], []>} : vector<8x32xf32>, vector<32x32xf32>, vector<8x32xf32> -> vector<8x32xf32>
    %c1_143 = arith.constant 1 : index
    %c0_144 = arith.constant 0 : index
    %c0_145 = arith.constant 0 : index
    %258 = vector.load %arg6[%c1_143, %c0_144, %c0_145] : memref<3x1x32xf32, #tpu.memory_space<vmem>>, vector<1x1x32xf32>
    %259 = vector.shape_cast %258 : vector<1x1x32xf32> to vector<1x32xf32>
    %260 = vector.broadcast %259 : vector<1x32xf32> to vector<8x32xf32>
    %261 = arith.addf %257, %260 : vector<8x32xf32>
    %c2_146 = arith.constant 2 : index
    %c0_147 = arith.constant 0 : index
    %c0_148 = arith.constant 0 : index
    %262 = vector.load %arg4[%c2_146, %c0_147, %c0_148] : memref<3x32x32xf32, #tpu.memory_space<vmem>>, vector<1x32x32xf32>
    %263 = vector.shape_cast %262 : vector<1x32x32xf32> to vector<32x32xf32>
    %cst_149 = arith.constant dense<0.000000e+00> : vector<8x32xf32>
    %264 = tpu.matmul %246, %263, %cst_149 {dimension_numbers = #tpu.dot_dimension_numbers<[1], [0], [0], [1], [0, 0, 1, 1], [], []>} : vector<8x32xf32>, vector<32x32xf32>, vector<8x32xf32> -> vector<8x32xf32>
    %c2_150 = arith.constant 2 : index
    %c0_151 = arith.constant 0 : index
    %c0_152 = arith.constant 0 : index
    %265 = vector.load %arg6[%c2_150, %c0_151, %c0_152] : memref<3x1x32xf32, #tpu.memory_space<vmem>>, vector<1x1x32xf32>
    %266 = vector.shape_cast %265 : vector<1x1x32xf32> to vector<1x32xf32>
    %267 = vector.broadcast %266 : vector<1x32xf32> to vector<8x32xf32>
    %268 = arith.addf %264, %267 : vector<8x32xf32>
    %269 = vector.extract_strided_slice %7 {offsets = [32, 0], sizes = [8, 32], strides = [1, 1]} : vector<64x32xf32> to vector<8x32xf32>
    %270 = arith.addf %269, %254 : vector<8x32xf32>
    %271 = arith.negf %270 : vector<8x32xf32>
    %272 = math.exp %271 : vector<8x32xf32>
    %cst_153 = arith.constant 1.000000e+00 : f32
    %273 = vector.broadcast %cst_153 : f32 to vector<8x32xf32>
    %274 = arith.addf %273, %272 : vector<8x32xf32>
    %275 = arith.divf %273, %274 : vector<8x32xf32>
    %276 = vector.extract_strided_slice %14 {offsets = [32, 0], sizes = [8, 32], strides = [1, 1]} : vector<64x32xf32> to vector<8x32xf32>
    %277 = arith.addf %276, %261 : vector<8x32xf32>
    %278 = arith.negf %277 : vector<8x32xf32>
    %279 = math.exp %278 : vector<8x32xf32>
    %cst_154 = arith.constant 1.000000e+00 : f32
    %280 = vector.broadcast %cst_154 : f32 to vector<8x32xf32>
    %281 = arith.addf %280, %279 : vector<8x32xf32>
    %282 = arith.divf %280, %281 : vector<8x32xf32>
    %283 = vector.extract_strided_slice %21 {offsets = [32, 0], sizes = [8, 32], strides = [1, 1]} : vector<64x32xf32> to vector<8x32xf32>
    %284 = arith.mulf %275, %268 : vector<8x32xf32>
    %285 = arith.addf %283, %284 : vector<8x32xf32>
    %286 = math.tanh %285 : vector<8x32xf32>
    %cst_155 = arith.constant 1.000000e+00 : f32
    %287 = vector.broadcast %cst_155 : f32 to vector<8x32xf32>
    %288 = arith.subf %287, %282 : vector<8x32xf32>
    %289 = arith.mulf %288, %286 : vector<8x32xf32>
    %290 = arith.mulf %282, %246 : vector<8x32xf32>
    %291 = arith.addf %289, %290 : vector<8x32xf32>
    %cst_156 = arith.constant 4.000000e+00 : f32
    %292 = vector.broadcast %cst_156 : f32 to vector<8x1xf32>
    %293 = arith.cmpf ogt, %22, %292 : vector<8x1xf32>
    %294 = arith.extui %293 : vector<8x1xi1> to vector<8x1xi32>
    %295 = arith.sitofp %294 : vector<8x1xi32> to vector<8x1xf32>
    %296 = vector.broadcast %295 : vector<8x1xf32> to vector<8x32xf32>
    %297 = arith.mulf %296, %291 : vector<8x32xf32>
    %cst_157 = arith.constant 1.000000e+00 : f32
    %298 = vector.broadcast %cst_157 : f32 to vector<8x1xf32>
    %299 = arith.subf %298, %295 : vector<8x1xf32>
    %300 = vector.broadcast %299 : vector<8x1xf32> to vector<8x32xf32>
    %301 = arith.mulf %300, %246 : vector<8x32xf32>
    %302 = arith.addf %297, %301 : vector<8x32xf32>
    %c32 = arith.constant 32 : index
    %c0_158 = arith.constant 0 : index
    %303 = vector.load %arg7[%c32, %c0_158] : memref<64x32xf32, #tpu.memory_space<vmem>>, vector<8x32xf32>
    tpu.vector_store %arg7[%c32, %c0_158], %302 {strides = array<i32>} : memref<64x32xf32, #tpu.memory_space<vmem>>, vector<8x32xf32>,
    %c0_159 = arith.constant 0 : index
    %c0_160 = arith.constant 0 : index
    %c0_161 = arith.constant 0 : index
    %304 = vector.load %arg4[%c0_159, %c0_160, %c0_161] : memref<3x32x32xf32, #tpu.memory_space<vmem>>, vector<1x32x32xf32>
    %305 = vector.shape_cast %304 : vector<1x32x32xf32> to vector<32x32xf32>
    %cst_162 = arith.constant dense<0.000000e+00> : vector<8x32xf32>
    %306 = tpu.matmul %302, %305, %cst_162 {dimension_numbers = #tpu.dot_dimension_numbers<[1], [0], [0], [1], [0, 0, 1, 1], [], []>} : vector<8x32xf32>, vector<32x32xf32>, vector<8x32xf32> -> vector<8x32xf32>
    %c0_163 = arith.constant 0 : index
    %c0_164 = arith.constant 0 : index
    %c0_165 = arith.constant 0 : index
    %307 = vector.load %arg6[%c0_163, %c0_164, %c0_165] : memref<3x1x32xf32, #tpu.memory_space<vmem>>, vector<1x1x32xf32>
    %308 = vector.shape_cast %307 : vector<1x1x32xf32> to vector<1x32xf32>
    %309 = vector.broadcast %308 : vector<1x32xf32> to vector<8x32xf32>
    %310 = arith.addf %306, %309 : vector<8x32xf32>
    %c1_166 = arith.constant 1 : index
    %c0_167 = arith.constant 0 : index
    %c0_168 = arith.constant 0 : index
    %311 = vector.load %arg4[%c1_166, %c0_167, %c0_168] : memref<3x32x32xf32, #tpu.memory_space<vmem>>, vector<1x32x32xf32>
    %312 = vector.shape_cast %311 : vector<1x32x32xf32> to vector<32x32xf32>
    %cst_169 = arith.constant dense<0.000000e+00> : vector<8x32xf32>
    %313 = tpu.matmul %302, %312, %cst_169 {dimension_numbers = #tpu.dot_dimension_numbers<[1], [0], [0], [1], [0, 0, 1, 1], [], []>} : vector<8x32xf32>, vector<32x32xf32>, vector<8x32xf32> -> vector<8x32xf32>
    %c1_170 = arith.constant 1 : index
    %c0_171 = arith.constant 0 : index
    %c0_172 = arith.constant 0 : index
    %314 = vector.load %arg6[%c1_170, %c0_171, %c0_172] : memref<3x1x32xf32, #tpu.memory_space<vmem>>, vector<1x1x32xf32>
    %315 = vector.shape_cast %314 : vector<1x1x32xf32> to vector<1x32xf32>
    %316 = vector.broadcast %315 : vector<1x32xf32> to vector<8x32xf32>
    %317 = arith.addf %313, %316 : vector<8x32xf32>
    %c2_173 = arith.constant 2 : index
    %c0_174 = arith.constant 0 : index
    %c0_175 = arith.constant 0 : index
    %318 = vector.load %arg4[%c2_173, %c0_174, %c0_175] : memref<3x32x32xf32, #tpu.memory_space<vmem>>, vector<1x32x32xf32>
    %319 = vector.shape_cast %318 : vector<1x32x32xf32> to vector<32x32xf32>
    %cst_176 = arith.constant dense<0.000000e+00> : vector<8x32xf32>
    %320 = tpu.matmul %302, %319, %cst_176 {dimension_numbers = #tpu.dot_dimension_numbers<[1], [0], [0], [1], [0, 0, 1, 1], [], []>} : vector<8x32xf32>, vector<32x32xf32>, vector<8x32xf32> -> vector<8x32xf32>
    %c2_177 = arith.constant 2 : index
    %c0_178 = arith.constant 0 : index
    %c0_179 = arith.constant 0 : index
    %321 = vector.load %arg6[%c2_177, %c0_178, %c0_179] : memref<3x1x32xf32, #tpu.memory_space<vmem>>, vector<1x1x32xf32>
    %322 = vector.shape_cast %321 : vector<1x1x32xf32> to vector<1x32xf32>
    %323 = vector.broadcast %322 : vector<1x32xf32> to vector<8x32xf32>
    %324 = arith.addf %320, %323 : vector<8x32xf32>
    %325 = vector.extract_strided_slice %7 {offsets = [40, 0], sizes = [8, 32], strides = [1, 1]} : vector<64x32xf32> to vector<8x32xf32>
    %326 = arith.addf %325, %310 : vector<8x32xf32>
    %327 = arith.negf %326 : vector<8x32xf32>
    %328 = math.exp %327 : vector<8x32xf32>
    %cst_180 = arith.constant 1.000000e+00 : f32
    %329 = vector.broadcast %cst_180 : f32 to vector<8x32xf32>
    %330 = arith.addf %329, %328 : vector<8x32xf32>
    %331 = arith.divf %329, %330 : vector<8x32xf32>
    %332 = vector.extract_strided_slice %14 {offsets = [40, 0], sizes = [8, 32], strides = [1, 1]} : vector<64x32xf32> to vector<8x32xf32>
    %333 = arith.addf %332, %317 : vector<8x32xf32>
    %334 = arith.negf %333 : vector<8x32xf32>
    %335 = math.exp %334 : vector<8x32xf32>
    %cst_181 = arith.constant 1.000000e+00 : f32
    %336 = vector.broadcast %cst_181 : f32 to vector<8x32xf32>
    %337 = arith.addf %336, %335 : vector<8x32xf32>
    %338 = arith.divf %336, %337 : vector<8x32xf32>
    %339 = vector.extract_strided_slice %21 {offsets = [40, 0], sizes = [8, 32], strides = [1, 1]} : vector<64x32xf32> to vector<8x32xf32>
    %340 = arith.mulf %331, %324 : vector<8x32xf32>
    %341 = arith.addf %339, %340 : vector<8x32xf32>
    %342 = math.tanh %341 : vector<8x32xf32>
    %cst_182 = arith.constant 1.000000e+00 : f32
    %343 = vector.broadcast %cst_182 : f32 to vector<8x32xf32>
    %344 = arith.subf %343, %338 : vector<8x32xf32>
    %345 = arith.mulf %344, %342 : vector<8x32xf32>
    %346 = arith.mulf %338, %302 : vector<8x32xf32>
    %347 = arith.addf %345, %346 : vector<8x32xf32>
    %cst_183 = arith.constant 5.000000e+00 : f32
    %348 = vector.broadcast %cst_183 : f32 to vector<8x1xf32>
    %349 = arith.cmpf ogt, %22, %348 : vector<8x1xf32>
    %350 = arith.extui %349 : vector<8x1xi1> to vector<8x1xi32>
    %351 = arith.sitofp %350 : vector<8x1xi32> to vector<8x1xf32>
    %352 = vector.broadcast %351 : vector<8x1xf32> to vector<8x32xf32>
    %353 = arith.mulf %352, %347 : vector<8x32xf32>
    %cst_184 = arith.constant 1.000000e+00 : f32
    %354 = vector.broadcast %cst_184 : f32 to vector<8x1xf32>
    %355 = arith.subf %354, %351 : vector<8x1xf32>
    %356 = vector.broadcast %355 : vector<8x1xf32> to vector<8x32xf32>
    %357 = arith.mulf %356, %302 : vector<8x32xf32>
    %358 = arith.addf %353, %357 : vector<8x32xf32>
    %c40 = arith.constant 40 : index
    %c0_185 = arith.constant 0 : index
    %359 = vector.load %arg7[%c40, %c0_185] : memref<64x32xf32, #tpu.memory_space<vmem>>, vector<8x32xf32>
    tpu.vector_store %arg7[%c40, %c0_185], %358 {strides = array<i32>} : memref<64x32xf32, #tpu.memory_space<vmem>>, vector<8x32xf32>,
    %c0_186 = arith.constant 0 : index
    %c0_187 = arith.constant 0 : index
    %c0_188 = arith.constant 0 : index
    %360 = vector.load %arg4[%c0_186, %c0_187, %c0_188] : memref<3x32x32xf32, #tpu.memory_space<vmem>>, vector<1x32x32xf32>
    %361 = vector.shape_cast %360 : vector<1x32x32xf32> to vector<32x32xf32>
    %cst_189 = arith.constant dense<0.000000e+00> : vector<8x32xf32>
    %362 = tpu.matmul %358, %361, %cst_189 {dimension_numbers = #tpu.dot_dimension_numbers<[1], [0], [0], [1], [0, 0, 1, 1], [], []>} : vector<8x32xf32>, vector<32x32xf32>, vector<8x32xf32> -> vector<8x32xf32>
    %c0_190 = arith.constant 0 : index
    %c0_191 = arith.constant 0 : index
    %c0_192 = arith.constant 0 : index
    %363 = vector.load %arg6[%c0_190, %c0_191, %c0_192] : memref<3x1x32xf32, #tpu.memory_space<vmem>>, vector<1x1x32xf32>
    %364 = vector.shape_cast %363 : vector<1x1x32xf32> to vector<1x32xf32>
    %365 = vector.broadcast %364 : vector<1x32xf32> to vector<8x32xf32>
    %366 = arith.addf %362, %365 : vector<8x32xf32>
    %c1_193 = arith.constant 1 : index
    %c0_194 = arith.constant 0 : index
    %c0_195 = arith.constant 0 : index
    %367 = vector.load %arg4[%c1_193, %c0_194, %c0_195] : memref<3x32x32xf32, #tpu.memory_space<vmem>>, vector<1x32x32xf32>
    %368 = vector.shape_cast %367 : vector<1x32x32xf32> to vector<32x32xf32>
    %cst_196 = arith.constant dense<0.000000e+00> : vector<8x32xf32>
    %369 = tpu.matmul %358, %368, %cst_196 {dimension_numbers = #tpu.dot_dimension_numbers<[1], [0], [0], [1], [0, 0, 1, 1], [], []>} : vector<8x32xf32>, vector<32x32xf32>, vector<8x32xf32> -> vector<8x32xf32>
    %c1_197 = arith.constant 1 : index
    %c0_198 = arith.constant 0 : index
    %c0_199 = arith.constant 0 : index
    %370 = vector.load %arg6[%c1_197, %c0_198, %c0_199] : memref<3x1x32xf32, #tpu.memory_space<vmem>>, vector<1x1x32xf32>
    %371 = vector.shape_cast %370 : vector<1x1x32xf32> to vector<1x32xf32>
    %372 = vector.broadcast %371 : vector<1x32xf32> to vector<8x32xf32>
    %373 = arith.addf %369, %372 : vector<8x32xf32>
    %c2_200 = arith.constant 2 : index
    %c0_201 = arith.constant 0 : index
    %c0_202 = arith.constant 0 : index
    %374 = vector.load %arg4[%c2_200, %c0_201, %c0_202] : memref<3x32x32xf32, #tpu.memory_space<vmem>>, vector<1x32x32xf32>
    %375 = vector.shape_cast %374 : vector<1x32x32xf32> to vector<32x32xf32>
    %cst_203 = arith.constant dense<0.000000e+00> : vector<8x32xf32>
    %376 = tpu.matmul %358, %375, %cst_203 {dimension_numbers = #tpu.dot_dimension_numbers<[1], [0], [0], [1], [0, 0, 1, 1], [], []>} : vector<8x32xf32>, vector<32x32xf32>, vector<8x32xf32> -> vector<8x32xf32>
    %c2_204 = arith.constant 2 : index
    %c0_205 = arith.constant 0 : index
    %c0_206 = arith.constant 0 : index
    %377 = vector.load %arg6[%c2_204, %c0_205, %c0_206] : memref<3x1x32xf32, #tpu.memory_space<vmem>>, vector<1x1x32xf32>
    %378 = vector.shape_cast %377 : vector<1x1x32xf32> to vector<1x32xf32>
    %379 = vector.broadcast %378 : vector<1x32xf32> to vector<8x32xf32>
    %380 = arith.addf %376, %379 : vector<8x32xf32>
    %381 = vector.extract_strided_slice %7 {offsets = [48, 0], sizes = [8, 32], strides = [1, 1]} : vector<64x32xf32> to vector<8x32xf32>
    %382 = arith.addf %381, %366 : vector<8x32xf32>
    %383 = arith.negf %382 : vector<8x32xf32>
    %384 = math.exp %383 : vector<8x32xf32>
    %cst_207 = arith.constant 1.000000e+00 : f32
    %385 = vector.broadcast %cst_207 : f32 to vector<8x32xf32>
    %386 = arith.addf %385, %384 : vector<8x32xf32>
    %387 = arith.divf %385, %386 : vector<8x32xf32>
    %388 = vector.extract_strided_slice %14 {offsets = [48, 0], sizes = [8, 32], strides = [1, 1]} : vector<64x32xf32> to vector<8x32xf32>
    %389 = arith.addf %388, %373 : vector<8x32xf32>
    %390 = arith.negf %389 : vector<8x32xf32>
    %391 = math.exp %390 : vector<8x32xf32>
    %cst_208 = arith.constant 1.000000e+00 : f32
    %392 = vector.broadcast %cst_208 : f32 to vector<8x32xf32>
    %393 = arith.addf %392, %391 : vector<8x32xf32>
    %394 = arith.divf %392, %393 : vector<8x32xf32>
    %395 = vector.extract_strided_slice %21 {offsets = [48, 0], sizes = [8, 32], strides = [1, 1]} : vector<64x32xf32> to vector<8x32xf32>
    %396 = arith.mulf %387, %380 : vector<8x32xf32>
    %397 = arith.addf %395, %396 : vector<8x32xf32>
    %398 = math.tanh %397 : vector<8x32xf32>
    %cst_209 = arith.constant 1.000000e+00 : f32
    %399 = vector.broadcast %cst_209 : f32 to vector<8x32xf32>
    %400 = arith.subf %399, %394 : vector<8x32xf32>
    %401 = arith.mulf %400, %398 : vector<8x32xf32>
    %402 = arith.mulf %394, %358 : vector<8x32xf32>
    %403 = arith.addf %401, %402 : vector<8x32xf32>
    %cst_210 = arith.constant 6.000000e+00 : f32
    %404 = vector.broadcast %cst_210 : f32 to vector<8x1xf32>
    %405 = arith.cmpf ogt, %22, %404 : vector<8x1xf32>
    %406 = arith.extui %405 : vector<8x1xi1> to vector<8x1xi32>
    %407 = arith.sitofp %406 : vector<8x1xi32> to vector<8x1xf32>
    %408 = vector.broadcast %407 : vector<8x1xf32> to vector<8x32xf32>
    %409 = arith.mulf %408, %403 : vector<8x32xf32>
    %cst_211 = arith.constant 1.000000e+00 : f32
    %410 = vector.broadcast %cst_211 : f32 to vector<8x1xf32>
    %411 = arith.subf %410, %407 : vector<8x1xf32>
    %412 = vector.broadcast %411 : vector<8x1xf32> to vector<8x32xf32>
    %413 = arith.mulf %412, %358 : vector<8x32xf32>
    %414 = arith.addf %409, %413 : vector<8x32xf32>
    %c48 = arith.constant 48 : index
    %c0_212 = arith.constant 0 : index
    %415 = vector.load %arg7[%c48, %c0_212] : memref<64x32xf32, #tpu.memory_space<vmem>>, vector<8x32xf32>
    tpu.vector_store %arg7[%c48, %c0_212], %414 {strides = array<i32>} : memref<64x32xf32, #tpu.memory_space<vmem>>, vector<8x32xf32>,
    %c0_213 = arith.constant 0 : index
    %c0_214 = arith.constant 0 : index
    %c0_215 = arith.constant 0 : index
    %416 = vector.load %arg4[%c0_213, %c0_214, %c0_215] : memref<3x32x32xf32, #tpu.memory_space<vmem>>, vector<1x32x32xf32>
    %417 = vector.shape_cast %416 : vector<1x32x32xf32> to vector<32x32xf32>
    %cst_216 = arith.constant dense<0.000000e+00> : vector<8x32xf32>
    %418 = tpu.matmul %414, %417, %cst_216 {dimension_numbers = #tpu.dot_dimension_numbers<[1], [0], [0], [1], [0, 0, 1, 1], [], []>} : vector<8x32xf32>, vector<32x32xf32>, vector<8x32xf32> -> vector<8x32xf32>
    %c0_217 = arith.constant 0 : index
    %c0_218 = arith.constant 0 : index
    %c0_219 = arith.constant 0 : index
    %419 = vector.load %arg6[%c0_217, %c0_218, %c0_219] : memref<3x1x32xf32, #tpu.memory_space<vmem>>, vector<1x1x32xf32>
    %420 = vector.shape_cast %419 : vector<1x1x32xf32> to vector<1x32xf32>
    %421 = vector.broadcast %420 : vector<1x32xf32> to vector<8x32xf32>
    %422 = arith.addf %418, %421 : vector<8x32xf32>
    %c1_220 = arith.constant 1 : index
    %c0_221 = arith.constant 0 : index
    %c0_222 = arith.constant 0 : index
    %423 = vector.load %arg4[%c1_220, %c0_221, %c0_222] : memref<3x32x32xf32, #tpu.memory_space<vmem>>, vector<1x32x32xf32>
    %424 = vector.shape_cast %423 : vector<1x32x32xf32> to vector<32x32xf32>
    %cst_223 = arith.constant dense<0.000000e+00> : vector<8x32xf32>
    %425 = tpu.matmul %414, %424, %cst_223 {dimension_numbers = #tpu.dot_dimension_numbers<[1], [0], [0], [1], [0, 0, 1, 1], [], []>} : vector<8x32xf32>, vector<32x32xf32>, vector<8x32xf32> -> vector<8x32xf32>
    %c1_224 = arith.constant 1 : index
    %c0_225 = arith.constant 0 : index
    %c0_226 = arith.constant 0 : index
    %426 = vector.load %arg6[%c1_224, %c0_225, %c0_226] : memref<3x1x32xf32, #tpu.memory_space<vmem>>, vector<1x1x32xf32>
    %427 = vector.shape_cast %426 : vector<1x1x32xf32> to vector<1x32xf32>
    %428 = vector.broadcast %427 : vector<1x32xf32> to vector<8x32xf32>
    %429 = arith.addf %425, %428 : vector<8x32xf32>
    %c2_227 = arith.constant 2 : index
    %c0_228 = arith.constant 0 : index
    %c0_229 = arith.constant 0 : index
    %430 = vector.load %arg4[%c2_227, %c0_228, %c0_229] : memref<3x32x32xf32, #tpu.memory_space<vmem>>, vector<1x32x32xf32>
    %431 = vector.shape_cast %430 : vector<1x32x32xf32> to vector<32x32xf32>
    %cst_230 = arith.constant dense<0.000000e+00> : vector<8x32xf32>
    %432 = tpu.matmul %414, %431, %cst_230 {dimension_numbers = #tpu.dot_dimension_numbers<[1], [0], [0], [1], [0, 0, 1, 1], [], []>} : vector<8x32xf32>, vector<32x32xf32>, vector<8x32xf32> -> vector<8x32xf32>
    %c2_231 = arith.constant 2 : index
    %c0_232 = arith.constant 0 : index
    %c0_233 = arith.constant 0 : index
    %433 = vector.load %arg6[%c2_231, %c0_232, %c0_233] : memref<3x1x32xf32, #tpu.memory_space<vmem>>, vector<1x1x32xf32>
    %434 = vector.shape_cast %433 : vector<1x1x32xf32> to vector<1x32xf32>
    %435 = vector.broadcast %434 : vector<1x32xf32> to vector<8x32xf32>
    %436 = arith.addf %432, %435 : vector<8x32xf32>
    %437 = vector.extract_strided_slice %7 {offsets = [56, 0], sizes = [8, 32], strides = [1, 1]} : vector<64x32xf32> to vector<8x32xf32>
    %438 = arith.addf %437, %422 : vector<8x32xf32>
    %439 = arith.negf %438 : vector<8x32xf32>
    %440 = math.exp %439 : vector<8x32xf32>
    %cst_234 = arith.constant 1.000000e+00 : f32
    %441 = vector.broadcast %cst_234 : f32 to vector<8x32xf32>
    %442 = arith.addf %441, %440 : vector<8x32xf32>
    %443 = arith.divf %441, %442 : vector<8x32xf32>
    %444 = vector.extract_strided_slice %14 {offsets = [56, 0], sizes = [8, 32], strides = [1, 1]} : vector<64x32xf32> to vector<8x32xf32>
    %445 = arith.addf %444, %429 : vector<8x32xf32>
    %446 = arith.negf %445 : vector<8x32xf32>
    %447 = math.exp %446 : vector<8x32xf32>
    %cst_235 = arith.constant 1.000000e+00 : f32
    %448 = vector.broadcast %cst_235 : f32 to vector<8x32xf32>
    %449 = arith.addf %448, %447 : vector<8x32xf32>
    %450 = arith.divf %448, %449 : vector<8x32xf32>
    %451 = vector.extract_strided_slice %21 {offsets = [56, 0], sizes = [8, 32], strides = [1, 1]} : vector<64x32xf32> to vector<8x32xf32>
    %452 = arith.mulf %443, %436 : vector<8x32xf32>
    %453 = arith.addf %451, %452 : vector<8x32xf32>
    %454 = math.tanh %453 : vector<8x32xf32>
    %cst_236 = arith.constant 1.000000e+00 : f32
    %455 = vector.broadcast %cst_236 : f32 to vector<8x32xf32>
    %456 = arith.subf %455, %450 : vector<8x32xf32>
    %457 = arith.mulf %456, %454 : vector<8x32xf32>
    %458 = arith.mulf %450, %414 : vector<8x32xf32>
    %459 = arith.addf %457, %458 : vector<8x32xf32>
    %cst_237 = arith.constant 7.000000e+00 : f32
    %460 = vector.broadcast %cst_237 : f32 to vector<8x1xf32>
    %461 = arith.cmpf ogt, %22, %460 : vector<8x1xf32>
    %462 = arith.extui %461 : vector<8x1xi1> to vector<8x1xi32>
    %463 = arith.sitofp %462 : vector<8x1xi32> to vector<8x1xf32>
    %464 = vector.broadcast %463 : vector<8x1xf32> to vector<8x32xf32>
    %465 = arith.mulf %464, %459 : vector<8x32xf32>
    %cst_238 = arith.constant 1.000000e+00 : f32
    %466 = vector.broadcast %cst_238 : f32 to vector<8x1xf32>
    %467 = arith.subf %466, %463 : vector<8x1xf32>
    %468 = vector.broadcast %467 : vector<8x1xf32> to vector<8x32xf32>
    %469 = arith.mulf %468, %414 : vector<8x32xf32>
    %470 = arith.addf %465, %469 : vector<8x32xf32>
    %c56 = arith.constant 56 : index
    %c0_239 = arith.constant 0 : index
    %471 = vector.load %arg7[%c56, %c0_239] : memref<64x32xf32, #tpu.memory_space<vmem>>, vector<8x32xf32>
    tpu.vector_store %arg7[%c56, %c0_239], %470 {strides = array<i32>} : memref<64x32xf32, #tpu.memory_space<vmem>>, vector<8x32xf32>,
    %c0_240 = arith.constant 0 : index
    %c0_241 = arith.constant 0 : index
    %472 = vector.load %arg8[%c0_240, %c0_241] : memref<8x32xf32, #tpu.memory_space<vmem>>, vector<8x32xf32>
    tpu.vector_store %arg8[%c0_240, %c0_241], %470 {strides = array<i32>} : memref<8x32xf32, #tpu.memory_space<vmem>>, vector<8x32xf32>,
    return
  }
}

</mosaic_0001>

<llo_original>
// kernel: tpu_custom_call.1
$region0: #{tpu_custom_call.1}
  #allocation0 [shape = 'u32[]', space=smem, size = 0x4, offset = 0x4, fixed_abs, tag = 'smem constant byte address 0x4 - core index']
  #allocation1 [shape = 'u32[144,128]{1,0:T(1,128)}', space=vmem, size = 0x12000, scoped, tag = 'internal scratch']
  %s0 = inlined_call_operand.vmem [shape: f32[64,16], index: 0, kind: input, shape index: {}]
  %s1 = inlined_call_operand.vmem [shape: f32[8,1], index: 1, kind: input, shape index: {}]
  %s2 = inlined_call_operand.hbm [shape: f32[8,32], index: 2, kind: input, shape index: {}]
  %s3 = inlined_call_operand.hbm [shape: f32[3,16,32], index: 3, kind: input, shape index: {}]
  %s4 = inlined_call_operand.vmem [shape: f32[3,32,32], index: 4, kind: input, shape index: {}]
  %s5 = inlined_call_operand.hbm [shape: f32[3,1,32], index: 5, kind: input, shape index: {}]
  %s6 = inlined_call_operand.vmem [shape: f32[3,1,32], index: 6, kind: input, shape index: {}]
  %s7 = inlined_call_operand.vmem [shape: f32[64,32], index: 7, kind: output, shape index: {0}]
  %s8 = inlined_call_operand.hbm [shape: f32[8,32], index: 8, kind: output, shape index: {1}]
  %9 = xla_tuple %s7, %s8
  %s10 = sld [smem:[#allocation0]]
  $region58: #{tpu_custom_call.1} parent=0
    _
  %s12 = ssub.s32 1, %s10
  %s13 = scalar_select 0, %s12, %s10
  $region1: #{tpu_custom_call.1} parent=0
    #allocation2 [shape = 'u8[4096]{0}', space=vmem, size = 0x1000, scoped, tag = 'input window, operand 2, single buffered']
    #allocation3 [shape = 's32[1]{0}', space=sflag, size = 0x4, scoped, tag = 'scoped memory for tpu_custom_call.1']
    #allocation4 [shape = 's32[1]{0}', space=sflag, size = 0x4, scoped, tag = 'scoped memory for tpu_custom_call.1']
    #allocation5 [shape = 'u8[24576]{0}', space=vmem, size = 0x6000, scoped, tag = 'input window, operand 3, single buffered']
    #allocation6 [shape = 's32[1]{0}', space=sflag, size = 0x4, scoped, tag = 'scoped memory for tpu_custom_call.1']
    #allocation7 [shape = 'u8[1536]{0}', space=vmem, size = 0x800, scoped, tag = 'input window, operand 5, single buffered']
    #allocation8 [shape = 'u8[4096]{0}', space=vmem, size = 0x1000, scoped, tag = 'output window, operand 1, single buffered']
    %14 = vsyncpa [#allocation3], 0
    %15 = vsyncpa [#allocation6], 0
    %16 = vsyncpa [#allocation4], 0
    // Predicated region
    $region2: #{tpu_custom_call.1} parent=1 // pred_check
      _
    $region3: #{tpu_custom_call.1} parent=1 // pred_check_branch
      %18 = sbr.rel (0) target = $region5
    $region4: #{tpu_custom_call.1} parent=1 // pred_region
      _
    $region5: #{tpu_custom_call.1} parent=1 // pred_fallthru
      _
    // Predicated region
    $region6: #{tpu_custom_call.1} parent=1 // pred_check
      _
    $region7: #{tpu_custom_call.1} parent=1 // pred_check_branch
      %20 = sbr.rel (0) target = $region9
    $region8: #{tpu_custom_call.1} parent=1 // pred_region
      _
    $region9: #{tpu_custom_call.1} parent=1 // pred_fallthru
      _
    // Predicated region
    $region10: #{tpu_custom_call.1} parent=1 // pred_check
      _
    $region11: #{tpu_custom_call.1} parent=1 // pred_check_branch
      %22 = sbr.rel (0) target = $region13
    $region12: #{tpu_custom_call.1} parent=1 // pred_region
      %s24 = ssub.s32 128, 128
      %25 = vsyncadd [#allocation3], %s24
      %s27 = sshll.u32 [#allocation2], 4
      %s28 = int_to_ptr.vmem [resolvable:$true] %s27
      %30 = dma.hbm_to_vmem [thread:$0]  %s2, 128, %s28, [#allocation3]
    $region13: #{tpu_custom_call.1} parent=1 // pred_fallthru
      _
    // Predicated region
    $region14: #{tpu_custom_call.1} parent=1 // pred_check
      _
    $region15: #{tpu_custom_call.1} parent=1 // pred_check_branch
      %32 = sbr.rel (0) target = $region17
    $region16: #{tpu_custom_call.1} parent=1 // pred_region
      %s34 = ssub.s32 768, 768
      %35 = vsyncadd [#allocation6], %s34
      %s36 = sshll.u32 [#allocation5], 4
      %s37 = int_to_ptr.vmem [resolvable:$true] %s36
      %42 = dma.hbm_to_vmem [thread:$0]  %s3, 768, %s37, [#allocation6], 128, 128, 8
    $region17: #{tpu_custom_call.1} parent=1 // pred_fallthru
      _
    // Predicated region
    $region18: #{tpu_custom_call.1} parent=1 // pred_check
      _
    $region19: #{tpu_custom_call.1} parent=1 // pred_check_branch
      %44 = sbr.rel (0) target = $region21
    $region20: #{tpu_custom_call.1} parent=1 // pred_region
      _
    $region21: #{tpu_custom_call.1} parent=1 // pred_fallthru
      _
    // Predicated region
    $region22: #{tpu_custom_call.1} parent=1 // pred_check
      _
    $region23: #{tpu_custom_call.1} parent=1 // pred_check_branch
      %46 = sbr.rel (0) target = $region25
    $region24: #{tpu_custom_call.1} parent=1 // pred_region
      %s48 = ssub.s32 48, 48
      %49 = vsyncadd [#allocation6], %s48
      %s50 = sshll.u32 [#allocation7], 4
      %s51 = int_to_ptr.vmem [resolvable:$true] %s50
      %56 = dma.hbm_to_vmem [thread:$0]  %s5, 48, %s51, [#allocation6], 16, 16, 1
    $region25: #{tpu_custom_call.1} parent=1 // pred_fallthru
      _
    // Predicated region
    $region26: #{tpu_custom_call.1} parent=1 // pred_check
      _
    $region27: #{tpu_custom_call.1} parent=1 // pred_check_branch
      %58 = sbr.rel (0) target = $region29
    $region28: #{tpu_custom_call.1} parent=1 // pred_region
      _
    $region29: #{tpu_custom_call.1} parent=1 // pred_fallthru
      _
    // Predicated region
    $region30: #{tpu_custom_call.1} parent=1 // pred_check
      _
    $region31: #{tpu_custom_call.1} parent=1 // pred_check_branch
      %60 = sbr.rel (0) target = $region33
    $region32: #{tpu_custom_call.1} parent=1 // pred_region
      %61 = dma.done [#allocation3], 128
    $region33: #{tpu_custom_call.1} parent=1 // pred_fallthru
      _
    // Predicated region
    $region34: #{tpu_custom_call.1} parent=1 // pred_check
      _
    $region35: #{tpu_custom_call.1} parent=1 // pred_check_branch
      %63 = sbr.rel (0) target = $region37
    $region36: #{tpu_custom_call.1} parent=1 // pred_region
      %64 = dma.done [#allocation6], 768
    $region37: #{tpu_custom_call.1} parent=1 // pred_fallthru
      _
    // Predicated region
    $region38: #{tpu_custom_call.1} parent=1 // pred_check
      _
    $region39: #{tpu_custom_call.1} parent=1 // pred_check_branch
      %66 = sbr.rel (0) target = $region41
    $region40: #{tpu_custom_call.1} parent=1 // pred_region
      %67 = dma.done [#allocation6], 48
    $region41: #{tpu_custom_call.1} parent=1 // pred_fallthru
      _
    %v68 = vld [vmem:[%s0] sm:$0xff]
    %v69 = vld [vmem:[%s0 + $0x8] sm:$0xff]
    %v70 = vld [vmem:[%s0 + $0x10] sm:$0xff]
    %v71 = vld [vmem:[%s0 + $0x18] sm:$0xff]
    %v72 = vld [vmem:[%s0 + $0x20] sm:$0xff]
    %v73 = vld [vmem:[%s0 + $0x28] sm:$0xff]
    %v74 = vld [vmem:[%s0 + $0x30] sm:$0xff]
    %v75 = vld [vmem:[%s0 + $0x38] sm:$0xff]
    %v76 = vld [vmem:[#allocation5] sm:$0xff]
    %v77 = vld [vmem:[#allocation5 + $0x8] sm:$0xff]
    %v78 = vld [vmem:[#allocation7] sm:$0x1]
    %v80 = vlaneseq
    %v81 = vshrl.u32 %v80, 7
    %v82 = vsub.s32 0, %v81
    %v83 = vrot.slane %v78, %v82
    %vm85 = vcmask 130048
    %v87 = vsel %vm85, %v68, 0
    %v90 = vsel %vm85, %v69, 0
    %v93 = vsel %vm85, %v70, 0
    %v96 = vsel %vm85, %v71, 0
    %v99 = vsel %vm85, %v72, 0
    %v102 = vsel %vm85, %v73, 0
    %v105 = vsel %vm85, %v74, 0
    %v108 = vsel %vm85, %v75, 0
    %110 = vmatprep.subr.mxu0 0.0
    %111 = vmatpush1.msra.mxu0 0.0
    %112 = vmatprep.subr.mxu0 0.0
    %113 = vmatpush1.msra.mxu0 0.0
    %114 = vmatprep.subr.mxu0 0.0
    %115 = vmatpush1.msra.mxu0 0.0
    %116 = vmatprep.subr.mxu0 0.0
    %117 = vmatpush1.msra.mxu0 0.0
    %118 = vmatprep.subr.mxu0 0.0
    %119 = vmatpush1.msra.mxu0 0.0
    %120 = vmatprep.subr.mxu0 0.0
    %121 = vmatpush1.msra.mxu0 0.0
    %122 = vmatprep.subr.mxu0 0.0
    %123 = vmatpush1.msra.mxu0 0.0
    %124 = vmatprep.subr.mxu0 0.0
    %125 = vmatpush1.msra.mxu0 0.0
    %126 = vmatprep.subr.mxu0 0.0
    %127 = vmatpush1.msra.mxu0 0.0
    %128 = vmatprep.subr.mxu0 0.0
    %129 = vmatpush1.msra.mxu0 0.0
    %130 = vmatprep.subr.mxu0 0.0
    %131 = vmatpush1.msra.mxu0 0.0
    %132 = vmatprep.subr.mxu0 0.0
    %133 = vmatpush1.msra.mxu0 0.0
    %134 = vmatprep.subr.mxu0 0.0
    %135 = vmatpush1.msra.mxu0 0.0
    %136 = vmatprep.subr.mxu0 0.0
    %137 = vmatpush1.msra.mxu0 0.0
    %138 = vmatprep.subr.mxu0 0.0
    %139 = vmatpush1.msra.mxu0 %v77
    %140 = vmatprep.subr.mxu0 0.0
    %141 = vmatpush1.msra.mxu0 %v76
    %142 = vmatprep.subr.mxu0 0.0
    %143 = vmatpush2.msra.mxu0 0.0
    %144 = vmatprep.subr.mxu0 0.0
    %145 = vmatpush2.msra.mxu0 0.0
    %146 = vmatprep.subr.mxu0 0.0
    %147 = vmatpush2.msra.mxu0 0.0
    %148 = vmatprep.subr.mxu0 0.0
    %149 = vmatpush2.msra.mxu0 0.0
    %150 = vmatprep.subr.mxu0 0.0
    %151 = vmatpush2.msra.mxu0 0.0
    %152 = vmatprep.subr.mxu0 0.0
    %153 = vmatpush2.msra.mxu0 0.0
    %154 = vmatprep.subr.mxu0 0.0
    %155 = vmatpush2.msra.mxu0 0.0
    %156 = vmatprep.subr.mxu0 0.0
    %157 = vmatpush2.msra.mxu0 0.0
    %158 = vmatprep.subr.mxu0 0.0
    %159 = vmatpush2.msra.mxu0 0.0
    %160 = vmatprep.subr.mxu0 0.0
    %161 = vmatpush2.msra.mxu0 0.0
    %162 = vmatprep.subr.mxu0 0.0
    %163 = vmatpush2.msra.mxu0 0.0
    %164 = vmatprep.subr.mxu0 0.0
    %165 = vmatpush2.msra.mxu0 0.0
    %166 = vmatprep.subr.mxu0 0.0
    %167 = vmatpush2.msra.mxu0 0.0
    %168 = vmatprep.subr.mxu0 0.0
    %169 = vmatpush2.msra.mxu0 0.0
    %170 = vmatprep.subr.mxu0 0.0
    %171 = vmatpush2.msra.mxu0 0.0
    %172 = vmatprep.subr.mxu0 0.0
    %173 = vmatpush2.msra.mxu0 0.0
    %174 = vmatprep.mubr.f32.mxu0 0.0
    %175 = vmatmul.mubr.f32.gmra.mxu0 %v87
    %v176 = vpop.f32.mrf.mxu0
    %v177 = vadd.f32 %v83, %v176
    %v178 = vpop.f32.mrf.mxu0
    %179 = vmatprep.mubr.f32.mxu0 0.0
    %180 = vmatmul.mubr.f32.gmra.mxu0 %v90
    %v181 = vpop.f32.mrf.mxu0
    %v182 = vadd.f32 %v83, %v181
    %v183 = vpop.f32.mrf.mxu0
    %184 = vmatprep.mubr.f32.mxu0 0.0
    %185 = vmatmul.mubr.f32.gmra.mxu0 %v93
    %v186 = vpop.f32.mrf.mxu0
    %v187 = vadd.f32 %v83, %v186
    %v188 = vpop.f32.mrf.mxu0
    %189 = vmatprep.mubr.f32.mxu0 0.0
    %190 = vmatmul.mubr.f32.gmra.mxu0 %v96
    %v191 = vpop.f32.mrf.mxu0
    %v192 = vadd.f32 %v83, %v191
    %v193 = vpop.f32.mrf.mxu0
    %194 = vmatprep.mubr.f32.mxu0 0.0
    %195 = vmatmul.mubr.f32.gmra.mxu0 %v99
    %v196 = vpop.f32.mrf.mxu0
    %v197 = vadd.f32 %v83, %v196
    %v198 = vpop.f32.mrf.mxu0
    %199 = vmatprep.mubr.f32.mxu0 0.0
    %200 = vmatmul.mubr.f32.gmra.mxu0 %v102
    %v201 = vpop.f32.mrf.mxu0
    %v202 = vadd.f32 %v83, %v201
    %v203 = vpop.f32.mrf.mxu0
    %204 = vmatprep.mubr.f32.mxu0 0.0
    %205 = vmatmul.mubr.f32.gmra.mxu0 %v105
    %v206 = vpop.f32.mrf.mxu0
    %v207 = vadd.f32 %v83, %v206
    %v208 = vpop.f32.mrf.mxu0
    %209 = vmatprep.mubr.f32.mxu0 0.0
    %210 = vmatmul.mubr.f32.gmra.mxu0 %v108
    %v211 = vpop.f32.mrf.mxu0
    %v212 = vadd.f32 %v83, %v211
    %v213 = vpop.f32.mrf.mxu0
    %214 = vdwg.mxu0
    %s215 = scalar_lea.vmem [#allocation5], 16
    %v216 = vld [vmem:[%s215] sm:$0xff]
    %v217 = vld [vmem:[%s215 + $0x8] sm:$0xff]
    %s218 = scalar_lea.vmem [#allocation7], 1
    %v219 = vld [vmem:[%s218] sm:$0x1]
    %v221 = vlaneseq
    %v222 = vshrl.u32 %v221, 7
    %v223 = vsub.s32 0, %v222
    %v224 = vrot.slane %v219, %v223
    %226 = vmatprep.subr.mxu0 0.0
    %227 = vmatpush1.msra.mxu0 0.0
    %228 = vmatprep.subr.mxu0 0.0
    %229 = vmatpush1.msra.mxu0 0.0
    %230 = vmatprep.subr.mxu0 0.0
    %231 = vmatpush1.msra.mxu0 0.0
    %232 = vmatprep.subr.mxu0 0.0
    %233 = vmatpush1.msra.mxu0 0.0
    %234 = vmatprep.subr.mxu0 0.0
    %235 = vmatpush1.msra.mxu0 0.0
    %236 = vmatprep.subr.mxu0 0.0
    %237 = vmatpush1.msra.mxu0 0.0
    %238 = vmatprep.subr.mxu0 0.0
    %239 = vmatpush1.msra.mxu0 0.0
    %240 = vmatprep.subr.mxu0 0.0
    %241 = vmatpush1.msra.mxu0 0.0
    %242 = vmatprep.subr.mxu0 0.0
    %243 = vmatpush1.msra.mxu0 0.0
    %244 = vmatprep.subr.mxu0 0.0
    %245 = vmatpush1.msra.mxu0 0.0
    %246 = vmatprep.subr.mxu0 0.0
    %247 = vmatpush1.msra.mxu0 0.0
    %248 = vmatprep.subr.mxu0 0.0
    %249 = vmatpush1.msra.mxu0 0.0
    %250 = vmatprep.subr.mxu0 0.0
    %251 = vmatpush1.msra.mxu0 0.0
    %252 = vmatprep.subr.mxu0 0.0
    %253 = vmatpush1.msra.mxu0 0.0
    %254 = vmatprep.subr.mxu0 0.0
    %255 = vmatpush1.msra.mxu0 %v217
    %256 = vmatprep.subr.mxu0 0.0
    %257 = vmatpush1.msra.mxu0 %v216
    %258 = vmatprep.subr.mxu0 0.0
    %259 = vmatpush2.msra.mxu0 0.0
    %260 = vmatprep.subr.mxu0 0.0
    %261 = vmatpush2.msra.mxu0 0.0
    %262 = vmatprep.subr.mxu0 0.0
    %263 = vmatpush2.msra.mxu0 0.0
    %264 = vmatprep.subr.mxu0 0.0
    %265 = vmatpush2.msra.mxu0 0.0
    %266 = vmatprep.subr.mxu0 0.0
    %267 = vmatpush2.msra.mxu0 0.0
    %268 = vmatprep.subr.mxu0 0.0
    %269 = vmatpush2.msra.mxu0 0.0
    %270 = vmatprep.subr.mxu0 0.0
    %271 = vmatpush2.msra.mxu0 0.0
    %272 = vmatprep.subr.mxu0 0.0
    %273 = vmatpush2.msra.mxu0 0.0
    %274 = vmatprep.subr.mxu0 0.0
    %275 = vmatpush2.msra.mxu0 0.0
    %276 = vmatprep.subr.mxu0 0.0
    %277 = vmatpush2.msra.mxu0 0.0
    %278 = vmatprep.subr.mxu0 0.0
    %279 = vmatpush2.msra.mxu0 0.0
    %280 = vmatprep.subr.mxu0 0.0
    %281 = vmatpush2.msra.mxu0 0.0
    %282 = vmatprep.subr.mxu0 0.0
    %283 = vmatpush2.msra.mxu0 0.0
    %284 = vmatprep.subr.mxu0 0.0
    %285 = vmatpush2.msra.mxu0 0.0
    %286 = vmatprep.subr.mxu0 0.0
    %287 = vmatpush2.msra.mxu0 0.0
    %288 = vmatprep.subr.mxu0 0.0
    %289 = vmatpush2.msra.mxu0 0.0
    %290 = vmatprep.mubr.f32.mxu0 0.0
    %291 = vmatmul.mubr.f32.gmra.mxu0 %v87
    %v292 = vpop.f32.mrf.mxu0
    %v293 = vadd.f32 %v224, %v292
    %v294 = vpop.f32.mrf.mxu0
    %295 = vmatprep.mubr.f32.mxu0 0.0
    %296 = vmatmul.mubr.f32.gmra.mxu0 %v90
    %v297 = vpop.f32.mrf.mxu0
    %v298 = vadd.f32 %v224, %v297
    %v299 = vpop.f32.mrf.mxu0
    %300 = vmatprep.mubr.f32.mxu0 0.0
    %301 = vmatmul.mubr.f32.gmra.mxu0 %v93
    %v302 = vpop.f32.mrf.mxu0
    %v303 = vadd.f32 %v224, %v302
    %v304 = vpop.f32.mrf.mxu0
    %305 = vmatprep.mubr.f32.mxu0 0.0
    %306 = vmatmul.mubr.f32.gmra.mxu0 %v96
    %v307 = vpop.f32.mrf.mxu0
    %v308 = vadd.f32 %v224, %v307
    %v309 = vpop.f32.mrf.mxu0
    %310 = vmatprep.mubr.f32.mxu0 0.0
    %311 = vmatmul.mubr.f32.gmra.mxu0 %v99
    %v312 = vpop.f32.mrf.mxu0
    %v313 = vadd.f32 %v224, %v312
    %v314 = vpop.f32.mrf.mxu0
    %315 = vmatprep.mubr.f32.mxu0 0.0
    %316 = vmatmul.mubr.f32.gmra.mxu0 %v102
    %v317 = vpop.f32.mrf.mxu0
    %v318 = vadd.f32 %v224, %v317
    %v319 = vpop.f32.mrf.mxu0
    %320 = vmatprep.mubr.f32.mxu0 0.0
    %321 = vmatmul.mubr.f32.gmra.mxu0 %v105
    %v322 = vpop.f32.mrf.mxu0
    %v323 = vadd.f32 %v224, %v322
    %v324 = vpop.f32.mrf.mxu0
    %325 = vmatprep.mubr.f32.mxu0 0.0
    %326 = vmatmul.mubr.f32.gmra.mxu0 %v108
    %v327 = vpop.f32.mrf.mxu0
    %v328 = vadd.f32 %v224, %v327
    %v329 = vpop.f32.mrf.mxu0
    %330 = vdwg.mxu0
    %s331 = scalar_lea.vmem [#allocation5], 32
    %v332 = vld [vmem:[%s331] sm:$0xff]
    %v333 = vld [vmem:[%s331 + $0x8] sm:$0xff]
    %s334 = scalar_lea.vmem [#allocation7], 2
    %v335 = vld [vmem:[%s334] sm:$0x1]
    %v337 = vlaneseq
    %v338 = vshrl.u32 %v337, 7
    %v339 = vsub.s32 0, %v338
    %v340 = vrot.slane %v335, %v339
    %342 = vmatprep.subr.mxu0 0.0
    %343 = vmatpush1.msra.mxu0 0.0
    %344 = vmatprep.subr.mxu0 0.0
    %345 = vmatpush1.msra.mxu0 0.0
    %346 = vmatprep.subr.mxu0 0.0
    %347 = vmatpush1.msra.mxu0 0.0
    %348 = vmatprep.subr.mxu0 0.0
    %349 = vmatpush1.msra.mxu0 0.0
    %350 = vmatprep.subr.mxu0 0.0
    %351 = vmatpush1.msra.mxu0 0.0
    %352 = vmatprep.subr.mxu0 0.0
    %353 = vmatpush1.msra.mxu0 0.0
    %354 = vmatprep.subr.mxu0 0.0
    %355 = vmatpush1.msra.mxu0 0.0
    %356 = vmatprep.subr.mxu0 0.0
    %357 = vmatpush1.msra.mxu0 0.0
    %358 = vmatprep.subr.mxu0 0.0
    %359 = vmatpush1.msra.mxu0 0.0
    %360 = vmatprep.subr.mxu0 0.0
    %361 = vmatpush1.msra.mxu0 0.0
    %362 = vmatprep.subr.mxu0 0.0
    %363 = vmatpush1.msra.mxu0 0.0
    %364 = vmatprep.subr.mxu0 0.0
    %365 = vmatpush1.msra.mxu0 0.0
    %366 = vmatprep.subr.mxu0 0.0
    %367 = vmatpush1.msra.mxu0 0.0
    %368 = vmatprep.subr.mxu0 0.0
    %369 = vmatpush1.msra.mxu0 0.0
    %370 = vmatprep.subr.mxu0 0.0
    %371 = vmatpush1.msra.mxu0 %v333
    %372 = vmatprep.subr.mxu0 0.0
    %373 = vmatpush1.msra.mxu0 %v332
    %374 = vmatprep.subr.mxu0 0.0
    %375 = vmatpush2.msra.mxu0 0.0
    %376 = vmatprep.subr.mxu0 0.0
    %377 = vmatpush2.msra.mxu0 0.0
    %378 = vmatprep.subr.mxu0 0.0
    %379 = vmatpush2.msra.mxu0 0.0
    %380 = vmatprep.subr.mxu0 0.0
    %381 = vmatpush2.msra.mxu0 0.0
    %382 = vmatprep.subr.mxu0 0.0
    %383 = vmatpush2.msra.mxu0 0.0
    %384 = vmatprep.subr.mxu0 0.0
    %385 = vmatpush2.msra.mxu0 0.0
    %386 = vmatprep.subr.mxu0 0.0
    %387 = vmatpush2.msra.mxu0 0.0
    %388 = vmatprep.subr.mxu0 0.0
    %389 = vmatpush2.msra.mxu0 0.0
    %390 = vmatprep.subr.mxu0 0.0
    %391 = vmatpush2.msra.mxu0 0.0
    %392 = vmatprep.subr.mxu0 0.0
    %393 = vmatpush2.msra.mxu0 0.0
    %394 = vmatprep.subr.mxu0 0.0
    %395 = vmatpush2.msra.mxu0 0.0
    %396 = vmatprep.subr.mxu0 0.0
    %397 = vmatpush2.msra.mxu0 0.0
    %398 = vmatprep.subr.mxu0 0.0
    %399 = vmatpush2.msra.mxu0 0.0
    %400 = vmatprep.subr.mxu0 0.0
    %401 = vmatpush2.msra.mxu0 0.0
    %402 = vmatprep.subr.mxu0 0.0
    %403 = vmatpush2.msra.mxu0 0.0
    %404 = vmatprep.subr.mxu0 0.0
    %405 = vmatpush2.msra.mxu0 0.0
    %406 = vmatprep.mubr.f32.mxu0 0.0
    %407 = vmatmul.mubr.f32.gmra.mxu0 %v87
    %v408 = vpop.f32.mrf.mxu0
    %v409 = vadd.f32 %v340, %v408
    %v410 = vpop.f32.mrf.mxu0
    %411 = vmatprep.mubr.f32.mxu0 0.0
    %412 = vmatmul.mubr.f32.gmra.mxu0 %v90
    %v413 = vpop.f32.mrf.mxu0
    %v414 = vadd.f32 %v340, %v413
    %v415 = vpop.f32.mrf.mxu0
    %416 = vmatprep.mubr.f32.mxu0 0.0
    %417 = vmatmul.mubr.f32.gmra.mxu0 %v93
    %v418 = vpop.f32.mrf.mxu0
    %v419 = vadd.f32 %v340, %v418
    %v420 = vpop.f32.mrf.mxu0
    %421 = vmatprep.mubr.f32.mxu0 0.0
    %422 = vmatmul.mubr.f32.gmra.mxu0 %v96
    %v423 = vpop.f32.mrf.mxu0
    %v424 = vadd.f32 %v340, %v423
    %v425 = vpop.f32.mrf.mxu0
    %426 = vmatprep.mubr.f32.mxu0 0.0
    %427 = vmatmul.mubr.f32.gmra.mxu0 %v99
    %v428 = vpop.f32.mrf.mxu0
    %v429 = vadd.f32 %v340, %v428
    %v430 = vpop.f32.mrf.mxu0
    %431 = vmatprep.mubr.f32.mxu0 0.0
    %432 = vmatmul.mubr.f32.gmra.mxu0 %v102
    %v433 = vpop.f32.mrf.mxu0
    %v434 = vadd.f32 %v340, %v433
    %v435 = vpop.f32.mrf.mxu0
    %436 = vmatprep.mubr.f32.mxu0 0.0
    %437 = vmatmul.mubr.f32.gmra.mxu0 %v105
    %v438 = vpop.f32.mrf.mxu0
    %v439 = vadd.f32 %v340, %v438
    %v440 = vpop.f32.mrf.mxu0
    %441 = vmatprep.mubr.f32.mxu0 0.0
    %442 = vmatmul.mubr.f32.gmra.mxu0 %v108
    %v443 = vpop.f32.mrf.mxu0
    %v444 = vadd.f32 %v340, %v443
    %v445 = vpop.f32.mrf.mxu0
    %446 = vdwg.mxu0
    %v447 = vld [vmem:[%s1] sm:$0xff]
    %v448 = vld [vmem:[#allocation2] sm:$0xff]
    %v449 = vld [vmem:[%s4] sm:$0xff]
    %v450 = vld [vmem:[%s4 + $0x8] sm:$0xff]
    %v451 = vld [vmem:[%s4 + $0x10] sm:$0xff]
    %v452 = vld [vmem:[%s4 + $0x18] sm:$0xff]
    %v453 = vld [vmem:[%s6] sm:$0x1]
    %v455 = vlaneseq
    %v456 = vshrl.u32 %v455, 7
    %v457 = vsub.s32 0, %v456
    %v458 = vrot.slane %v453, %v457
    %vm460 = vcmask 261120
    %v462 = vsel %vm460, %v448, 0
    %464 = vmatprep.subr.mxu0 0.0
    %465 = vmatpush1.msra.mxu0 0.0
    %466 = vmatprep.subr.mxu0 0.0
    %467 = vmatpush1.msra.mxu0 0.0
    %468 = vmatprep.subr.mxu0 0.0
    %469 = vmatpush1.msra.mxu0 0.0
    %470 = vmatprep.subr.mxu0 0.0
    %471 = vmatpush1.msra.mxu0 0.0
    %472 = vmatprep.subr.mxu0 0.0
    %473 = vmatpush1.msra.mxu0 0.0
    %474 = vmatprep.subr.mxu0 0.0
    %475 = vmatpush1.msra.mxu0 0.0
    %476 = vmatprep.subr.mxu0 0.0
    %477 = vmatpush1.msra.mxu0 0.0
    %478 = vmatprep.subr.mxu0 0.0
    %479 = vmatpush1.msra.mxu0 0.0
    %480 = vmatprep.subr.mxu0 0.0
    %481 = vmatpush1.msra.mxu0 0.0
    %482 = vmatprep.subr.mxu0 0.0
    %483 = vmatpush1.msra.mxu0 0.0
    %484 = vmatprep.subr.mxu0 0.0
    %485 = vmatpush1.msra.mxu0 0.0
    %486 = vmatprep.subr.mxu0 0.0
    %487 = vmatpush1.msra.mxu0 0.0
    %488 = vmatprep.subr.mxu0 0.0
    %489 = vmatpush1.msra.mxu0 %v452
    %490 = vmatprep.subr.mxu0 0.0
    %491 = vmatpush1.msra.mxu0 %v451
    %492 = vmatprep.subr.mxu0 0.0
    %493 = vmatpush1.msra.mxu0 %v450
    %494 = vmatprep.subr.mxu0 0.0
    %495 = vmatpush1.msra.mxu0 %v449
    %496 = vmatprep.subr.mxu0 0.0
    %497 = vmatpush2.msra.mxu0 0.0
    %498 = vmatprep.subr.mxu0 0.0
    %499 = vmatpush2.msra.mxu0 0.0
    %500 = vmatprep.subr.mxu0 0.0
    %501 = vmatpush2.msra.mxu0 0.0
    %502 = vmatprep.subr.mxu0 0.0
    %503 = vmatpush2.msra.mxu0 0.0
    %504 = vmatprep.subr.mxu0 0.0
    %505 = vmatpush2.msra.mxu0 0.0
    %506 = vmatprep.subr.mxu0 0.0
    %507 = vmatpush2.msra.mxu0 0.0
    %508 = vmatprep.subr.mxu0 0.0
    %509 = vmatpush2.msra.mxu0 0.0
    %510 = vmatprep.subr.mxu0 0.0
    %511 = vmatpush2.msra.mxu0 0.0
    %512 = vmatprep.subr.mxu0 0.0
    %513 = vmatpush2.msra.mxu0 0.0
    %514 = vmatprep.subr.mxu0 0.0
    %515 = vmatpush2.msra.mxu0 0.0
    %516 = vmatprep.subr.mxu0 0.0
    %517 = vmatpush2.msra.mxu0 0.0
    %518 = vmatprep.subr.mxu0 0.0
    %519 = vmatpush2.msra.mxu0 0.0
    %520 = vmatprep.subr.mxu0 0.0
    %521 = vmatpush2.msra.mxu0 0.0
    %522 = vmatprep.subr.mxu0 0.0
    %523 = vmatpush2.msra.mxu0 0.0
    %524 = vmatprep.subr.mxu0 0.0
    %525 = vmatpush2.msra.mxu0 0.0
    %526 = vmatprep.subr.mxu0 0.0
    %527 = vmatpush2.msra.mxu0 0.0
    %528 = vmatprep.mubr.f32.mxu0 0.0
    %529 = vmatmul.mubr.f32.gmra.mxu0 %v462
    %v530 = vpop.f32.mrf.mxu0
    %v531 = vadd.f32 %v458, %v530
    %v532 = vpop.f32.mrf.mxu0
    %533 = vdwg.mxu0
    %s534 = scalar_lea.vmem %s4, 32
    %v535 = vld [vmem:[%s534] sm:$0xff]
    %v536 = vld [vmem:[%s534 + $0x8] sm:$0xff]
    %v537 = vld [vmem:[%s534 + $0x10] sm:$0xff]
    %v538 = vld [vmem:[%s534 + $0x18] sm:$0xff]
    %s539 = scalar_lea.vmem %s6, 1
    %v540 = vld [vmem:[%s539] sm:$0x1]
    %v542 = vlaneseq
    %v543 = vshrl.u32 %v542, 7
    %v544 = vsub.s32 0, %v543
    %v545 = vrot.slane %v540, %v544
    %547 = vmatprep.subr.mxu0 0.0
    %548 = vmatpush1.msra.mxu0 0.0
    %549 = vmatprep.subr.mxu0 0.0
    %550 = vmatpush1.msra.mxu0 0.0
    %551 = vmatprep.subr.mxu0 0.0
    %552 = vmatpush1.msra.mxu0 0.0
    %553 = vmatprep.subr.mxu0 0.0
    %554 = vmatpush1.msra.mxu0 0.0
    %555 = vmatprep.subr.mxu0 0.0
    %556 = vmatpush1.msra.mxu0 0.0
    %557 = vmatprep.subr.mxu0 0.0
    %558 = vmatpush1.msra.mxu0 0.0
    %559 = vmatprep.subr.mxu0 0.0
    %560 = vmatpush1.msra.mxu0 0.0
    %561 = vmatprep.subr.mxu0 0.0
    %562 = vmatpush1.msra.mxu0 0.0
    %563 = vmatprep.subr.mxu0 0.0
    %564 = vmatpush1.msra.mxu0 0.0
    %565 = vmatprep.subr.mxu0 0.0
    %566 = vmatpush1.msra.mxu0 0.0
    %567 = vmatprep.subr.mxu0 0.0
    %568 = vmatpush1.msra.mxu0 0.0
    %569 = vmatprep.subr.mxu0 0.0
    %570 = vmatpush1.msra.mxu0 0.0
    %571 = vmatprep.subr.mxu0 0.0
    %572 = vmatpush1.msra.mxu0 %v538
    %573 = vmatprep.subr.mxu0 0.0
    %574 = vmatpush1.msra.mxu0 %v537
    %575 = vmatprep.subr.mxu0 0.0
    %576 = vmatpush1.msra.mxu0 %v536
    %577 = vmatprep.subr.mxu0 0.0
    %578 = vmatpush1.msra.mxu0 %v535
    %579 = vmatprep.subr.mxu0 0.0
    %580 = vmatpush2.msra.mxu0 0.0
    %581 = vmatprep.subr.mxu0 0.0
    %582 = vmatpush2.msra.mxu0 0.0
    %583 = vmatprep.subr.mxu0 0.0
    %584 = vmatpush2.msra.mxu0 0.0
    %585 = vmatprep.subr.mxu0 0.0
    %586 = vmatpush2.msra.mxu0 0.0
    %587 = vmatprep.subr.mxu0 0.0
    %588 = vmatpush2.msra.mxu0 0.0
    %589 = vmatprep.subr.mxu0 0.0
    %590 = vmatpush2.msra.mxu0 0.0
    %591 = vmatprep.subr.mxu0 0.0
    %592 = vmatpush2.msra.mxu0 0.0
    %593 = vmatprep.subr.mxu0 0.0
    %594 = vmatpush2.msra.mxu0 0.0
    %595 = vmatprep.subr.mxu0 0.0
    %596 = vmatpush2.msra.mxu0 0.0
    %597 = vmatprep.subr.mxu0 0.0
    %598 = vmatpush2.msra.mxu0 0.0
    %599 = vmatprep.subr.mxu0 0.0
    %600 = vmatpush2.msra.mxu0 0.0
    %601 = vmatprep.subr.mxu0 0.0
    %602 = vmatpush2.msra.mxu0 0.0
    %603 = vmatprep.subr.mxu0 0.0
    %604 = vmatpush2.msra.mxu0 0.0
    %605 = vmatprep.subr.mxu0 0.0
    %606 = vmatpush2.msra.mxu0 0.0
    %607 = vmatprep.subr.mxu0 0.0
    %608 = vmatpush2.msra.mxu0 0.0
    %609 = vmatprep.subr.mxu0 0.0
    %610 = vmatpush2.msra.mxu0 0.0
    %611 = vmatprep.mubr.f32.mxu0 0.0
    %612 = vmatmul.mubr.f32.gmra.mxu0 %v462
    %v613 = vpop.f32.mrf.mxu0
    %v614 = vadd.f32 %v545, %v613
    %v615 = vpop.f32.mrf.mxu0
    %616 = vdwg.mxu0
    %s617 = scalar_lea.vmem %s4, 64
    %v618 = vld [vmem:[%s617] sm:$0xff]
    %v619 = vld [vmem:[%s617 + $0x8] sm:$0xff]
    %v620 = vld [vmem:[%s617 + $0x10] sm:$0xff]
    %v621 = vld [vmem:[%s617 + $0x18] sm:$0xff]
    %s622 = scalar_lea.vmem %s6, 2
    %v623 = vld [vmem:[%s622] sm:$0x1]
    %v625 = vlaneseq
    %v626 = vshrl.u32 %v625, 7
    %v627 = vsub.s32 0, %v626
    %v628 = vrot.slane %v623, %v627
    %630 = vmatprep.subr.mxu0 0.0
    %631 = vmatpush1.msra.mxu0 0.0
    %632 = vmatprep.subr.mxu0 0.0
    %633 = vmatpush1.msra.mxu0 0.0
    %634 = vmatprep.subr.mxu0 0.0
    %635 = vmatpush1.msra.mxu0 0.0
    %636 = vmatprep.subr.mxu0 0.0
    %637 = vmatpush1.msra.mxu0 0.0
    %638 = vmatprep.subr.mxu0 0.0
    %639 = vmatpush1.msra.mxu0 0.0
    %640 = vmatprep.subr.mxu0 0.0
    %641 = vmatpush1.msra.mxu0 0.0
    %642 = vmatprep.subr.mxu0 0.0
    %643 = vmatpush1.msra.mxu0 0.0
    %644 = vmatprep.subr.mxu0 0.0
    %645 = vmatpush1.msra.mxu0 0.0
    %646 = vmatprep.subr.mxu0 0.0
    %647 = vmatpush1.msra.mxu0 0.0
    %648 = vmatprep.subr.mxu0 0.0
    %649 = vmatpush1.msra.mxu0 0.0
    %650 = vmatprep.subr.mxu0 0.0
    %651 = vmatpush1.msra.mxu0 0.0
    %652 = vmatprep.subr.mxu0 0.0
    %653 = vmatpush1.msra.mxu0 0.0
    %654 = vmatprep.subr.mxu0 0.0
    %655 = vmatpush1.msra.mxu0 %v621
    %656 = vmatprep.subr.mxu0 0.0
    %657 = vmatpush1.msra.mxu0 %v620
    %658 = vmatprep.subr.mxu0 0.0
    %659 = vmatpush1.msra.mxu0 %v619
    %660 = vmatprep.subr.mxu0 0.0
    %661 = vmatpush1.msra.mxu0 %v618
    %662 = vmatprep.subr.mxu0 0.0
    %663 = vmatpush2.msra.mxu0 0.0
    %664 = vmatprep.subr.mxu0 0.0
    %665 = vmatpush2.msra.mxu0 0.0
    %666 = vmatprep.subr.mxu0 0.0
    %667 = vmatpush2.msra.mxu0 0.0
    %668 = vmatprep.subr.mxu0 0.0
    %669 = vmatpush2.msra.mxu0 0.0
    %670 = vmatprep.subr.mxu0 0.0
    %671 = vmatpush2.msra.mxu0 0.0
    %672 = vmatprep.subr.mxu0 0.0
    %673 = vmatpush2.msra.mxu0 0.0
    %674 = vmatprep.subr.mxu0 0.0
    %675 = vmatpush2.msra.mxu0 0.0
    %676 = vmatprep.subr.mxu0 0.0
    %677 = vmatpush2.msra.mxu0 0.0
    %678 = vmatprep.subr.mxu0 0.0
    %679 = vmatpush2.msra.mxu0 0.0
    %680 = vmatprep.subr.mxu0 0.0
    %681 = vmatpush2.msra.mxu0 0.0
    %682 = vmatprep.subr.mxu0 0.0
    %683 = vmatpush2.msra.mxu0 0.0
    %684 = vmatprep.subr.mxu0 0.0
    %685 = vmatpush2.msra.mxu0 0.0
    %686 = vmatprep.subr.mxu0 0.0
    %687 = vmatpush2.msra.mxu0 0.0
    %688 = vmatprep.subr.mxu0 0.0
    %689 = vmatpush2.msra.mxu0 0.0
    %690 = vmatprep.subr.mxu0 0.0
    %691 = vmatpush2.msra.mxu0 0.0
    %692 = vmatprep.subr.mxu0 0.0
    %693 = vmatpush2.msra.mxu0 0.0
    %694 = vmatprep.mubr.f32.mxu0 0.0
    %695 = vmatmul.mubr.f32.gmra.mxu0 %v462
    %v696 = vpop.f32.mrf.mxu0
    %v697 = vadd.f32 %v628, %v696
    %v698 = vpop.f32.mrf.mxu0
    %699 = vdwg.mxu0
    %v700 = vadd.f32 %v177, %v531
    %v701 = vxor.u32 %v700, 2147483648
    %v702 = vmul.f32 %v701, 1.442695
    %v703 = vpow.pop %v702
    %v704 = vadd.f32 %v703, 1.0
    %v705 = vrcp.pop %v704
    %v706 = vmul.f32 1.0, %v705
    %v707 = vadd.f32 %v293, %v614
    %v708 = vxor.u32 %v707, 2147483648
    %v709 = vmul.f32 %v708, 1.442695
    %v710 = vpow.pop %v709
    %v711 = vadd.f32 %v710, 1.0
    %v712 = vrcp.pop %v711
    %v713 = vmul.f32 1.0, %v712
    %v714 = vmul.f32 %v706, %v697
    %v715 = vadd.f32 %v409, %v714
    %v716 = vtanh.pop %v715
    %v717 = vsub.f32 1.0, %v713
    %v718 = vmul.f32 %v717, %v716
    %v719 = vmul.f32 %v713, %v448
    %v720 = vadd.f32 %v718, %v719
    %vm721 = vcmp.gt.f32.partialorder %v447, 0.0
    %v722 = vsel %vm721, 1, 0
    %v723 = vcvt.s32.f32 %v722
    %725 = vset.pattern.permute.xlu0 0
    %726 = vperm.xlu0 %725, %v723
    %v727 = vpop.permute.xlu0 %726
    %v729 = vmul.f32 %v727, %v720
    %v730 = vsub.f32 1.0, %v723
    %732 = vset.pattern.permute.xlu0 0
    %733 = vperm.xlu0 %732, %v730
    %v734 = vpop.permute.xlu0 %733
    %v736 = vmul.f32 %v734, %v448
    %v737 = vadd.f32 %v729, %v736
    %738 = vst.msk [vmem:[%s7] sm:$0xff] %vm460, %v737
    %v739 = vld [vmem:[%s4] sm:$0xff]
    %v740 = vld [vmem:[%s4 + $0x8] sm:$0xff]
    %v741 = vld [vmem:[%s4 + $0x10] sm:$0xff]
    %v742 = vld [vmem:[%s4 + $0x18] sm:$0xff]
    %v743 = vld [vmem:[%s6] sm:$0x1]
    %v745 = vlaneseq
    %v746 = vshrl.u32 %v745, 7
    %v747 = vsub.s32 0, %v746
    %v748 = vrot.slane %v743, %v747
    %v751 = vsel %vm460, %v737, 0
    %753 = vmatprep.subr.mxu0 0.0
    %754 = vmatpush1.msra.mxu0 0.0
    %755 = vmatprep.subr.mxu0 0.0
    %756 = vmatpush1.msra.mxu0 0.0
    %757 = vmatprep.subr.mxu0 0.0
    %758 = vmatpush1.msra.mxu0 0.0
    %759 = vmatprep.subr.mxu0 0.0
    %760 = vmatpush1.msra.mxu0 0.0
    %761 = vmatprep.subr.mxu0 0.0
    %762 = vmatpush1.msra.mxu0 0.0
    %763 = vmatprep.subr.mxu0 0.0
    %764 = vmatpush1.msra.mxu0 0.0
    %765 = vmatprep.subr.mxu0 0.0
    %766 = vmatpush1.msra.mxu0 0.0
    %767 = vmatprep.subr.mxu0 0.0
    %768 = vmatpush1.msra.mxu0 0.0
    %769 = vmatprep.subr.mxu0 0.0
    %770 = vmatpush1.msra.mxu0 0.0
    %771 = vmatprep.subr.mxu0 0.0
    %772 = vmatpush1.msra.mxu0 0.0
    %773 = vmatprep.subr.mxu0 0.0
    %774 = vmatpush1.msra.mxu0 0.0
    %775 = vmatprep.subr.mxu0 0.0
    %776 = vmatpush1.msra.mxu0 0.0
    %777 = vmatprep.subr.mxu0 0.0
    %778 = vmatpush1.msra.mxu0 %v742
    %779 = vmatprep.subr.mxu0 0.0
    %780 = vmatpush1.msra.mxu0 %v741
    %781 = vmatprep.subr.mxu0 0.0
    %782 = vmatpush1.msra.mxu0 %v740
    %783 = vmatprep.subr.mxu0 0.0
    %784 = vmatpush1.msra.mxu0 %v739
    %785 = vmatprep.subr.mxu0 0.0
    %786 = vmatpush2.msra.mxu0 0.0
    %787 = vmatprep.subr.mxu0 0.0
    %788 = vmatpush2.msra.mxu0 0.0
    %789 = vmatprep.subr.mxu0 0.0
    %790 = vmatpush2.msra.mxu0 0.0
    %791 = vmatprep.subr.mxu0 0.0
    %792 = vmatpush2.msra.mxu0 0.0
    %793 = vmatprep.subr.mxu0 0.0
    %794 = vmatpush2.msra.mxu0 0.0
    %795 = vmatprep.subr.mxu0 0.0
    %796 = vmatpush2.msra.mxu0 0.0
    %797 = vmatprep.subr.mxu0 0.0
    %798 = vmatpush2.msra.mxu0 0.0
    %799 = vmatprep.subr.mxu0 0.0
    %800 = vmatpush2.msra.mxu0 0.0
    %801 = vmatprep.subr.mxu0 0.0
    %802 = vmatpush2.msra.mxu0 0.0
    %803 = vmatprep.subr.mxu0 0.0
    %804 = vmatpush2.msra.mxu0 0.0
    %805 = vmatprep.subr.mxu0 0.0
    %806 = vmatpush2.msra.mxu0 0.0
    %807 = vmatprep.subr.mxu0 0.0
    %808 = vmatpush2.msra.mxu0 0.0
    %809 = vmatprep.subr.mxu0 0.0
    %810 = vmatpush2.msra.mxu0 0.0
    %811 = vmatprep.subr.mxu0 0.0
    %812 = vmatpush2.msra.mxu0 0.0
    %813 = vmatprep.subr.mxu0 0.0
    %814 = vmatpush2.msra.mxu0 0.0
    %815 = vmatprep.subr.mxu0 0.0
    %816 = vmatpush2.msra.mxu0 0.0
    %817 = vmatprep.mubr.f32.mxu0 0.0
    %818 = vmatmul.mubr.f32.gmra.mxu0 %v751
    %v819 = vpop.f32.mrf.mxu0
    %v820 = vadd.f32 %v748, %v819
    %v821 = vpop.f32.mrf.mxu0
    %822 = vdwg.mxu0
    %v823 = vld [vmem:[%s534] sm:$0xff]
    %v824 = vld [vmem:[%s534 + $0x8] sm:$0xff]
    %v825 = vld [vmem:[%s534 + $0x10] sm:$0xff]
    %v826 = vld [vmem:[%s534 + $0x18] sm:$0xff]
    %v827 = vld [vmem:[%s539] sm:$0x1]
    %v829 = vlaneseq
    %v830 = vshrl.u32 %v829, 7
    %v831 = vsub.s32 0, %v830
    %v832 = vrot.slane %v827, %v831
    %834 = vmatprep.subr.mxu0 0.0
    %835 = vmatpush1.msra.mxu0 0.0
    %836 = vmatprep.subr.mxu0 0.0
    %837 = vmatpush1.msra.mxu0 0.0
    %838 = vmatprep.subr.mxu0 0.0
    %839 = vmatpush1.msra.mxu0 0.0
    %840 = vmatprep.subr.mxu0 0.0
    %841 = vmatpush1.msra.mxu0 0.0
    %842 = vmatprep.subr.mxu0 0.0
    %843 = vmatpush1.msra.mxu0 0.0
    %844 = vmatprep.subr.mxu0 0.0
    %845 = vmatpush1.msra.mxu0 0.0
    %846 = vmatprep.subr.mxu0 0.0
    %847 = vmatpush1.msra.mxu0 0.0
    %848 = vmatprep.subr.mxu0 0.0
    %849 = vmatpush1.msra.mxu0 0.0
    %850 = vmatprep.subr.mxu0 0.0
    %851 = vmatpush1.msra.mxu0 0.0
    %852 = vmatprep.subr.mxu0 0.0
    %853 = vmatpush1.msra.mxu0 0.0
    %854 = vmatprep.subr.mxu0 0.0
    %855 = vmatpush1.msra.mxu0 0.0
    %856 = vmatprep.subr.mxu0 0.0
    %857 = vmatpush1.msra.mxu0 0.0
    %858 = vmatprep.subr.mxu0 0.0
    %859 = vmatpush1.msra.mxu0 %v826
    %860 = vmatprep.subr.mxu0 0.0
    %861 = vmatpush1.msra.mxu0 %v825
    %862 = vmatprep.subr.mxu0 0.0
    %863 = vmatpush1.msra.mxu0 %v824
    %864 = vmatprep.subr.mxu0 0.0
    %865 = vmatpush1.msra.mxu0 %v823
    %866 = vmatprep.subr.mxu0 0.0
    %867 = vmatpush2.msra.mxu0 0.0
    %868 = vmatprep.subr.mxu0 0.0
    %869 = vmatpush2.msra.mxu0 0.0
    %870 = vmatprep.subr.mxu0 0.0
    %871 = vmatpush2.msra.mxu0 0.0
    %872 = vmatprep.subr.mxu0 0.0
    %873 = vmatpush2.msra.mxu0 0.0
    %874 = vmatprep.subr.mxu0 0.0
    %875 = vmatpush2.msra.mxu0 0.0
    %876 = vmatprep.subr.mxu0 0.0
    %877 = vmatpush2.msra.mxu0 0.0
    %878 = vmatprep.subr.mxu0 0.0
    %879 = vmatpush2.msra.mxu0 0.0
    %880 = vmatprep.subr.mxu0 0.0
    %881 = vmatpush2.msra.mxu0 0.0
    %882 = vmatprep.subr.mxu0 0.0
    %883 = vmatpush2.msra.mxu0 0.0
    %884 = vmatprep.subr.mxu0 0.0
    %885 = vmatpush2.msra.mxu0 0.0
    %886 = vmatprep.subr.mxu0 0.0
    %887 = vmatpush2.msra.mxu0 0.0
    %888 = vmatprep.subr.mxu0 0.0
    %889 = vmatpush2.msra.mxu0 0.0
    %890 = vmatprep.subr.mxu0 0.0
    %891 = vmatpush2.msra.mxu0 0.0
    %892 = vmatprep.subr.mxu0 0.0
    %893 = vmatpush2.msra.mxu0 0.0
    %894 = vmatprep.subr.mxu0 0.0
    %895 = vmatpush2.msra.mxu0 0.0
    %896 = vmatprep.subr.mxu0 0.0
    %897 = vmatpush2.msra.mxu0 0.0
    %898 = vmatprep.mubr.f32.mxu0 0.0
    %899 = vmatmul.mubr.f32.gmra.mxu0 %v751
    %v900 = vpop.f32.mrf.mxu0
    %v901 = vadd.f32 %v832, %v900
    %v902 = vpop.f32.mrf.mxu0
    %903 = vdwg.mxu0
    %v904 = vld [vmem:[%s617] sm:$0xff]
    %v905 = vld [vmem:[%s617 + $0x8] sm:$0xff]
    %v906 = vld [vmem:[%s617 + $0x10] sm:$0xff]
    %v907 = vld [vmem:[%s617 + $0x18] sm:$0xff]
    %v908 = vld [vmem:[%s622] sm:$0x1]
    %v910 = vlaneseq
    %v911 = vshrl.u32 %v910, 7
    %v912 = vsub.s32 0, %v911
    %v913 = vrot.slane %v908, %v912
    %915 = vmatprep.subr.mxu0 0.0
    %916 = vmatpush1.msra.mxu0 0.0
    %917 = vmatprep.subr.mxu0 0.0
    %918 = vmatpush1.msra.mxu0 0.0
    %919 = vmatprep.subr.mxu0 0.0
    %920 = vmatpush1.msra.mxu0 0.0
    %921 = vmatprep.subr.mxu0 0.0
    %922 = vmatpush1.msra.mxu0 0.0
    %923 = vmatprep.subr.mxu0 0.0
    %924 = vmatpush1.msra.mxu0 0.0
    %925 = vmatprep.subr.mxu0 0.0
    %926 = vmatpush1.msra.mxu0 0.0
    %927 = vmatprep.subr.mxu0 0.0
    %928 = vmatpush1.msra.mxu0 0.0
    %929 = vmatprep.subr.mxu0 0.0
    %930 = vmatpush1.msra.mxu0 0.0
    %931 = vmatprep.subr.mxu0 0.0
    %932 = vmatpush1.msra.mxu0 0.0
    %933 = vmatprep.subr.mxu0 0.0
    %934 = vmatpush1.msra.mxu0 0.0
    %935 = vmatprep.subr.mxu0 0.0
    %936 = vmatpush1.msra.mxu0 0.0
    %937 = vmatprep.subr.mxu0 0.0
    %938 = vmatpush1.msra.mxu0 0.0
    %939 = vmatprep.subr.mxu0 0.0
    %940 = vmatpush1.msra.mxu0 %v907
    %941 = vmatprep.subr.mxu0 0.0
    %942 = vmatpush1.msra.mxu0 %v906
    %943 = vmatprep.subr.mxu0 0.0
    %944 = vmatpush1.msra.mxu0 %v905
    %945 = vmatprep.subr.mxu0 0.0
    %946 = vmatpush1.msra.mxu0 %v904
    %947 = vmatprep.subr.mxu0 0.0
    %948 = vmatpush2.msra.mxu0 0.0
    %949 = vmatprep.subr.mxu0 0.0
    %950 = vmatpush2.msra.mxu0 0.0
    %951 = vmatprep.subr.mxu0 0.0
    %952 = vmatpush2.msra.mxu0 0.0
    %953 = vmatprep.subr.mxu0 0.0
    %954 = vmatpush2.msra.mxu0 0.0
    %955 = vmatprep.subr.mxu0 0.0
    %956 = vmatpush2.msra.mxu0 0.0
    %957 = vmatprep.subr.mxu0 0.0
    %958 = vmatpush2.msra.mxu0 0.0
    %959 = vmatprep.subr.mxu0 0.0
    %960 = vmatpush2.msra.mxu0 0.0
    %961 = vmatprep.subr.mxu0 0.0
    %962 = vmatpush2.msra.mxu0 0.0
    %963 = vmatprep.subr.mxu0 0.0
    %964 = vmatpush2.msra.mxu0 0.0
    %965 = vmatprep.subr.mxu0 0.0
    %966 = vmatpush2.msra.mxu0 0.0
    %967 = vmatprep.subr.mxu0 0.0
    %968 = vmatpush2.msra.mxu0 0.0
    %969 = vmatprep.subr.mxu0 0.0
    %970 = vmatpush2.msra.mxu0 0.0
    %971 = vmatprep.subr.mxu0 0.0
    %972 = vmatpush2.msra.mxu0 0.0
    %973 = vmatprep.subr.mxu0 0.0
    %974 = vmatpush2.msra.mxu0 0.0
    %975 = vmatprep.subr.mxu0 0.0
    %976 = vmatpush2.msra.mxu0 0.0
    %977 = vmatprep.subr.mxu0 0.0
    %978 = vmatpush2.msra.mxu0 0.0
    %979 = vmatprep.mubr.f32.mxu0 0.0
    %980 = vmatmul.mubr.f32.gmra.mxu0 %v751
    %v981 = vpop.f32.mrf.mxu0
    %v982 = vadd.f32 %v913, %v981
    %v983 = vpop.f32.mrf.mxu0
    %984 = vdwg.mxu0
    %v985 = vadd.f32 %v182, %v820
    %v986 = vxor.u32 %v985, 2147483648
    %v987 = vmul.f32 %v986, 1.442695
    %v988 = vpow.pop %v987
    %v989 = vadd.f32 %v988, 1.0
    %v990 = vrcp.pop %v989
    %v991 = vmul.f32 1.0, %v990
    %v992 = vadd.f32 %v298, %v901
    %v993 = vxor.u32 %v992, 2147483648
    %v994 = vmul.f32 %v993, 1.442695
    %v995 = vpow.pop %v994
    %v996 = vadd.f32 %v995, 1.0
    %v997 = vrcp.pop %v996
    %v998 = vmul.f32 1.0, %v997
    %v999 = vmul.f32 %v991, %v982
    %v1000 = vadd.f32 %v414, %v999
    %v1001 = vtanh.pop %v1000
    %v1002 = vsub.f32 1.0, %v998
    %v1003 = vmul.f32 %v1002, %v1001
    %v1004 = vmul.f32 %v998, %v737
    %v1005 = vadd.f32 %v1003, %v1004
    %vm1006 = vcmp.gt.f32.partialorder %v447, 1.0
    %v1007 = vsel %vm1006, 1, 0
    %v1008 = vcvt.s32.f32 %v1007
    %1010 = vset.pattern.permute.xlu0 0
    %1011 = vperm.xlu0 %1010, %v1008
    %v1012 = vpop.permute.xlu0 %1011
    %v1014 = vmul.f32 %v1012, %v1005
    %v1015 = vsub.f32 1.0, %v1008
    %1017 = vset.pattern.permute.xlu0 0
    %1018 = vperm.xlu0 %1017, %v1015
    %v1019 = vpop.permute.xlu0 %1018
    %v1021 = vmul.f32 %v1019, %v737
    %v1022 = vadd.f32 %v1014, %v1021
    %1023 = vst.msk [vmem:[%s7 + $0x8] sm:$0xff] %vm460, %v1022
    %v1024 = vld [vmem:[%s4] sm:$0xff]
    %v1025 = vld [vmem:[%s4 + $0x8] sm:$0xff]
    %v1026 = vld [vmem:[%s4 + $0x10] sm:$0xff]
    %v1027 = vld [vmem:[%s4 + $0x18] sm:$0xff]
    %v1028 = vld [vmem:[%s6] sm:$0x1]
    %v1030 = vlaneseq
    %v1031 = vshrl.u32 %v1030, 7
    %v1032 = vsub.s32 0, %v1031
    %v1033 = vrot.slane %v1028, %v1032
    %v1036 = vsel %vm460, %v1022, 0
    %1038 = vmatprep.subr.mxu0 0.0
    %1039 = vmatpush1.msra.mxu0 0.0
    %1040 = vmatprep.subr.mxu0 0.0
    %1041 = vmatpush1.msra.mxu0 0.0
    %1042 = vmatprep.subr.mxu0 0.0
    %1043 = vmatpush1.msra.mxu0 0.0
    %1044 = vmatprep.subr.mxu0 0.0
    %1045 = vmatpush1.msra.mxu0 0.0
    %1046 = vmatprep.subr.mxu0 0.0
    %1047 = vmatpush1.msra.mxu0 0.0
    %1048 = vmatprep.subr.mxu0 0.0
    %1049 = vmatpush1.msra.mxu0 0.0
    %1050 = vmatprep.subr.mxu0 0.0
    %1051 = vmatpush1.msra.mxu0 0.0
    %1052 = vmatprep.subr.mxu0 0.0
    %1053 = vmatpush1.msra.mxu0 0.0
    %1054 = vmatprep.subr.mxu0 0.0
    %1055 = vmatpush1.msra.mxu0 0.0
    %1056 = vmatprep.subr.mxu0 0.0
    %1057 = vmatpush1.msra.mxu0 0.0
    %1058 = vmatprep.subr.mxu0 0.0
    %1059 = vmatpush1.msra.mxu0 0.0
    %1060 = vmatprep.subr.mxu0 0.0
    %1061 = vmatpush1.msra.mxu0 0.0
    %1062 = vmatprep.subr.mxu0 0.0
    %1063 = vmatpush1.msra.mxu0 %v1027
    %1064 = vmatprep.subr.mxu0 0.0
    %1065 = vmatpush1.msra.mxu0 %v1026
    %1066 = vmatprep.subr.mxu0 0.0
    %1067 = vmatpush1.msra.mxu0 %v1025
    %1068 = vmatprep.subr.mxu0 0.0
    %1069 = vmatpush1.msra.mxu0 %v1024
    %1070 = vmatprep.subr.mxu0 0.0
    %1071 = vmatpush2.msra.mxu0 0.0
    %1072 = vmatprep.subr.mxu0 0.0
    %1073 = vmatpush2.msra.mxu0 0.0
    %1074 = vmatprep.subr.mxu0 0.0
    %1075 = vmatpush2.msra.mxu0 0.0
    %1076 = vmatprep.subr.mxu0 0.0
    %1077 = vmatpush2.msra.mxu0 0.0
    %1078 = vmatprep.subr.mxu0 0.0
    %1079 = vmatpush2.msra.mxu0 0.0
    %1080 = vmatprep.subr.mxu0 0.0
    %1081 = vmatpush2.msra.mxu0 0.0
    %1082 = vmatprep.subr.mxu0 0.0
    %1083 = vmatpush2.msra.mxu0 0.0
    %1084 = vmatprep.subr.mxu0 0.0
    %1085 = vmatpush2.msra.mxu0 0.0
    %1086 = vmatprep.subr.mxu0 0.0
    %1087 = vmatpush2.msra.mxu0 0.0
    %1088 = vmatprep.subr.mxu0 0.0
    %1089 = vmatpush2.msra.mxu0 0.0
    %1090 = vmatprep.subr.mxu0 0.0
    %1091 = vmatpush2.msra.mxu0 0.0
    %1092 = vmatprep.subr.mxu0 0.0
    %1093 = vmatpush2.msra.mxu0 0.0
    %1094 = vmatprep.subr.mxu0 0.0
    %1095 = vmatpush2.msra.mxu0 0.0
    %1096 = vmatprep.subr.mxu0 0.0
    %1097 = vmatpush2.msra.mxu0 0.0
    %1098 = vmatprep.subr.mxu0 0.0
    %1099 = vmatpush2.msra.mxu0 0.0
    %1100 = vmatprep.subr.mxu0 0.0
    %1101 = vmatpush2.msra.mxu0 0.0
    %1102 = vmatprep.mubr.f32.mxu0 0.0
    %1103 = vmatmul.mubr.f32.gmra.mxu0 %v1036
    %v1104 = vpop.f32.mrf.mxu0
    %v1105 = vadd.f32 %v1033, %v1104
    %v1106 = vpop.f32.mrf.mxu0
    %1107 = vdwg.mxu0
    %v1108 = vld [vmem:[%s534] sm:$0xff]
    %v1109 = vld [vmem:[%s534 + $0x8] sm:$0xff]
    %v1110 = vld [vmem:[%s534 + $0x10] sm:$0xff]
    %v1111 = vld [vmem:[%s534 + $0x18] sm:$0xff]
    %v1112 = vld [vmem:[%s539] sm:$0x1]
    %v1114 = vlaneseq
    %v1115 = vshrl.u32 %v1114, 7
    %v1116 = vsub.s32 0, %v1115
    %v1117 = vrot.slane %v1112, %v1116
    %1119 = vmatprep.subr.mxu0 0.0
    %1120 = vmatpush1.msra.mxu0 0.0
    %1121 = vmatprep.subr.mxu0 0.0
    %1122 = vmatpush1.msra.mxu0 0.0
    %1123 = vmatprep.subr.mxu0 0.0
    %1124 = vmatpush1.msra.mxu0 0.0
    %1125 = vmatprep.subr.mxu0 0.0
    %1126 = vmatpush1.msra.mxu0 0.0
    %1127 = vmatprep.subr.mxu0 0.0
    %1128 = vmatpush1.msra.mxu0 0.0
    %1129 = vmatprep.subr.mxu0 0.0
    %1130 = vmatpush1.msra.mxu0 0.0
    %1131 = vmatprep.subr.mxu0 0.0
    %1132 = vmatpush1.msra.mxu0 0.0
    %1133 = vmatprep.subr.mxu0 0.0
    %1134 = vmatpush1.msra.mxu0 0.0
    %1135 = vmatprep.subr.mxu0 0.0
    %1136 = vmatpush1.msra.mxu0 0.0
    %1137 = vmatprep.subr.mxu0 0.0
    %1138 = vmatpush1.msra.mxu0 0.0
    %1139 = vmatprep.subr.mxu0 0.0
    %1140 = vmatpush1.msra.mxu0 0.0
    %1141 = vmatprep.subr.mxu0 0.0
    %1142 = vmatpush1.msra.mxu0 0.0
    %1143 = vmatprep.subr.mxu0 0.0
    %1144 = vmatpush1.msra.mxu0 %v1111
    %1145 = vmatprep.subr.mxu0 0.0
    %1146 = vmatpush1.msra.mxu0 %v1110
    %1147 = vmatprep.subr.mxu0 0.0
    %1148 = vmatpush1.msra.mxu0 %v1109
    %1149 = vmatprep.subr.mxu0 0.0
    %1150 = vmatpush1.msra.mxu0 %v1108
    %1151 = vmatprep.subr.mxu0 0.0
    %1152 = vmatpush2.msra.mxu0 0.0
    %1153 = vmatprep.subr.mxu0 0.0
    %1154 = vmatpush2.msra.mxu0 0.0
    %1155 = vmatprep.subr.mxu0 0.0
    %1156 = vmatpush2.msra.mxu0 0.0
    %1157 = vmatprep.subr.mxu0 0.0
    %1158 = vmatpush2.msra.mxu0 0.0
    %1159 = vmatprep.subr.mxu0 0.0
    %1160 = vmatpush2.msra.mxu0 0.0
    %1161 = vmatprep.subr.mxu0 0.0
    %1162 = vmatpush2.msra.mxu0 0.0
    %1163 = vmatprep.subr.mxu0 0.0
    %1164 = vmatpush2.msra.mxu0 0.0
    %1165 = vmatprep.subr.mxu0 0.0
    %1166 = vmatpush2.msra.mxu0 0.0
    %1167 = vmatprep.subr.mxu0 0.0
    %1168 = vmatpush2.msra.mxu0 0.0
    %1169 = vmatprep.subr.mxu0 0.0
    %1170 = vmatpush2.msra.mxu0 0.0
    %1171 = vmatprep.subr.mxu0 0.0
    %1172 = vmatpush2.msra.mxu0 0.0
    %1173 = vmatprep.subr.mxu0 0.0
    %1174 = vmatpush2.msra.mxu0 0.0
    %1175 = vmatprep.subr.mxu0 0.0
    %1176 = vmatpush2.msra.mxu0 0.0
    %1177 = vmatprep.subr.mxu0 0.0
    %1178 = vmatpush2.msra.mxu0 0.0
    %1179 = vmatprep.subr.mxu0 0.0
    %1180 = vmatpush2.msra.mxu0 0.0
    %1181 = vmatprep.subr.mxu0 0.0
    %1182 = vmatpush2.msra.mxu0 0.0
    %1183 = vmatprep.mubr.f32.mxu0 0.0
    %1184 = vmatmul.mubr.f32.gmra.mxu0 %v1036
    %v1185 = vpop.f32.mrf.mxu0
    %v1186 = vadd.f32 %v1117, %v1185
    %v1187 = vpop.f32.mrf.mxu0
    %1188 = vdwg.mxu0
    %v1189 = vld [vmem:[%s617] sm:$0xff]
    %v1190 = vld [vmem:[%s617 + $0x8] sm:$0xff]
    %v1191 = vld [vmem:[%s617 + $0x10] sm:$0xff]
    %v1192 = vld [vmem:[%s617 + $0x18] sm:$0xff]
    %v1193 = vld [vmem:[%s622] sm:$0x1]
    %v1195 = vlaneseq
    %v1196 = vshrl.u32 %v1195, 7
    %v1197 = vsub.s32 0, %v1196
    %v1198 = vrot.slane %v1193, %v1197
    %1200 = vmatprep.subr.mxu0 0.0
    %1201 = vmatpush1.msra.mxu0 0.0
    %1202 = vmatprep.subr.mxu0 0.0
    %1203 = vmatpush1.msra.mxu0 0.0
    %1204 = vmatprep.subr.mxu0 0.0
    %1205 = vmatpush1.msra.mxu0 0.0
    %1206 = vmatprep.subr.mxu0 0.0
    %1207 = vmatpush1.msra.mxu0 0.0
    %1208 = vmatprep.subr.mxu0 0.0
    %1209 = vmatpush1.msra.mxu0 0.0
    %1210 = vmatprep.subr.mxu0 0.0
    %1211 = vmatpush1.msra.mxu0 0.0
    %1212 = vmatprep.subr.mxu0 0.0
    %1213 = vmatpush1.msra.mxu0 0.0
    %1214 = vmatprep.subr.mxu0 0.0
    %1215 = vmatpush1.msra.mxu0 0.0
    %1216 = vmatprep.subr.mxu0 0.0
    %1217 = vmatpush1.msra.mxu0 0.0
    %1218 = vmatprep.subr.mxu0 0.0
    %1219 = vmatpush1.msra.mxu0 0.0
    %1220 = vmatprep.subr.mxu0 0.0
    %1221 = vmatpush1.msra.mxu0 0.0
    %1222 = vmatprep.subr.mxu0 0.0
    %1223 = vmatpush1.msra.mxu0 0.0
    %1224 = vmatprep.subr.mxu0 0.0
    %1225 = vmatpush1.msra.mxu0 %v1192
    %1226 = vmatprep.subr.mxu0 0.0
    %1227 = vmatpush1.msra.mxu0 %v1191
    %1228 = vmatprep.subr.mxu0 0.0
    %1229 = vmatpush1.msra.mxu0 %v1190
    %1230 = vmatprep.subr.mxu0 0.0
    %1231 = vmatpush1.msra.mxu0 %v1189
    %1232 = vmatprep.subr.mxu0 0.0
    %1233 = vmatpush2.msra.mxu0 0.0
    %1234 = vmatprep.subr.mxu0 0.0
    %1235 = vmatpush2.msra.mxu0 0.0
    %1236 = vmatprep.subr.mxu0 0.0
    %1237 = vmatpush2.msra.mxu0 0.0
    %1238 = vmatprep.subr.mxu0 0.0
    %1239 = vmatpush2.msra.mxu0 0.0
    %1240 = vmatprep.subr.mxu0 0.0
    %1241 = vmatpush2.msra.mxu0 0.0
    %1242 = vmatprep.subr.mxu0 0.0
    %1243 = vmatpush2.msra.mxu0 0.0
    %1244 = vmatprep.subr.mxu0 0.0
    %1245 = vmatpush2.msra.mxu0 0.0
    %1246 = vmatprep.subr.mxu0 0.0
    %1247 = vmatpush2.msra.mxu0 0.0
    %1248 = vmatprep.subr.mxu0 0.0
    %1249 = vmatpush2.msra.mxu0 0.0
    %1250 = vmatprep.subr.mxu0 0.0
    %1251 = vmatpush2.msra.mxu0 0.0
    %1252 = vmatprep.subr.mxu0 0.0
    %1253 = vmatpush2.msra.mxu0 0.0
    %1254 = vmatprep.subr.mxu0 0.0
    %1255 = vmatpush2.msra.mxu0 0.0
    %1256 = vmatprep.subr.mxu0 0.0
    %1257 = vmatpush2.msra.mxu0 0.0
    %1258 = vmatprep.subr.mxu0 0.0
    %1259 = vmatpush2.msra.mxu0 0.0
    %1260 = vmatprep.subr.mxu0 0.0
    %1261 = vmatpush2.msra.mxu0 0.0
    %1262 = vmatprep.subr.mxu0 0.0
    %1263 = vmatpush2.msra.mxu0 0.0
    %1264 = vmatprep.mubr.f32.mxu0 0.0
    %1265 = vmatmul.mubr.f32.gmra.mxu0 %v1036
    %v1266 = vpop.f32.mrf.mxu0
    %v1267 = vadd.f32 %v1198, %v1266
    %v1268 = vpop.f32.mrf.mxu0
    %1269 = vdwg.mxu0
    %v1270 = vadd.f32 %v187, %v1105
    %v1271 = vxor.u32 %v1270, 2147483648
    %v1272 = vmul.f32 %v1271, 1.442695
    %v1273 = vpow.pop %v1272
    %v1274 = vadd.f32 %v1273, 1.0
    %v1275 = vrcp.pop %v1274
    %v1276 = vmul.f32 1.0, %v1275
    %v1277 = vadd.f32 %v303, %v1186
    %v1278 = vxor.u32 %v1277, 2147483648
    %v1279 = vmul.f32 %v1278, 1.442695
    %v1280 = vpow.pop %v1279
    %v1281 = vadd.f32 %v1280, 1.0
    %v1282 = vrcp.pop %v1281
    %v1283 = vmul.f32 1.0, %v1282
    %v1284 = vmul.f32 %v1276, %v1267
    %v1285 = vadd.f32 %v419, %v1284
    %v1286 = vtanh.pop %v1285
    %v1287 = vsub.f32 1.0, %v1283
    %v1288 = vmul.f32 %v1287, %v1286
    %v1289 = vmul.f32 %v1283, %v1022
    %v1290 = vadd.f32 %v1288, %v1289
    %vm1291 = vcmp.gt.f32.partialorder %v447, 2.0
    %v1292 = vsel %vm1291, 1, 0
    %v1293 = vcvt.s32.f32 %v1292
    %1295 = vset.pattern.permute.xlu0 0
    %1296 = vperm.xlu0 %1295, %v1293
    %v1297 = vpop.permute.xlu0 %1296
    %v1299 = vmul.f32 %v1297, %v1290
    %v1300 = vsub.f32 1.0, %v1293
    %1302 = vset.pattern.permute.xlu0 0
    %1303 = vperm.xlu0 %1302, %v1300
    %v1304 = vpop.permute.xlu0 %1303
    %v1306 = vmul.f32 %v1304, %v1022
    %v1307 = vadd.f32 %v1299, %v1306
    %1308 = vst.msk [vmem:[%s7 + $0x10] sm:$0xff] %vm460, %v1307
    %v1309 = vld [vmem:[%s4] sm:$0xff]
    %v1310 = vld [vmem:[%s4 + $0x8] sm:$0xff]
    %v1311 = vld [vmem:[%s4 + $0x10] sm:$0xff]
    %v1312 = vld [vmem:[%s4 + $0x18] sm:$0xff]
    %v1313 = vld [vmem:[%s6] sm:$0x1]
    %v1315 = vlaneseq
    %v1316 = vshrl.u32 %v1315, 7
    %v1317 = vsub.s32 0, %v1316
    %v1318 = vrot.slane %v1313, %v1317
    %v1321 = vsel %vm460, %v1307, 0
    %1323 = vmatprep.subr.mxu0 0.0
    %1324 = vmatpush1.msra.mxu0 0.0
    %1325 = vmatprep.subr.mxu0 0.0
    %1326 = vmatpush1.msra.mxu0 0.0
    %1327 = vmatprep.subr.mxu0 0.0
    %1328 = vmatpush1.msra.mxu0 0.0
    %1329 = vmatprep.subr.mxu0 0.0
    %1330 = vmatpush1.msra.mxu0 0.0
    %1331 = vmatprep.subr.mxu0 0.0
    %1332 = vmatpush1.msra.mxu0 0.0
    %1333 = vmatprep.subr.mxu0 0.0
    %1334 = vmatpush1.msra.mxu0 0.0
    %1335 = vmatprep.subr.mxu0 0.0
    %1336 = vmatpush1.msra.mxu0 0.0
    %1337 = vmatprep.subr.mxu0 0.0
    %1338 = vmatpush1.msra.mxu0 0.0
    %1339 = vmatprep.subr.mxu0 0.0
    %1340 = vmatpush1.msra.mxu0 0.0
    %1341 = vmatprep.subr.mxu0 0.0
    %1342 = vmatpush1.msra.mxu0 0.0
    %1343 = vmatprep.subr.mxu0 0.0
    %1344 = vmatpush1.msra.mxu0 0.0
    %1345 = vmatprep.subr.mxu0 0.0
    %1346 = vmatpush1.msra.mxu0 0.0
    %1347 = vmatprep.subr.mxu0 0.0
    %1348 = vmatpush1.msra.mxu0 %v1312
    %1349 = vmatprep.subr.mxu0 0.0
    %1350 = vmatpush1.msra.mxu0 %v1311
    %1351 = vmatprep.subr.mxu0 0.0
    %1352 = vmatpush1.msra.mxu0 %v1310
    %1353 = vmatprep.subr.mxu0 0.0
    %1354 = vmatpush1.msra.mxu0 %v1309
    %1355 = vmatprep.subr.mxu0 0.0
    %1356 = vmatpush2.msra.mxu0 0.0
    %1357 = vmatprep.subr.mxu0 0.0
    %1358 = vmatpush2.msra.mxu0 0.0
    %1359 = vmatprep.subr.mxu0 0.0
    %1360 = vmatpush2.msra.mxu0 0.0
    %1361 = vmatprep.subr.mxu0 0.0
    %1362 = vmatpush2.msra.mxu0 0.0
    %1363 = vmatprep.subr.mxu0 0.0
    %1364 = vmatpush2.msra.mxu0 0.0
    %1365 = vmatprep.subr.mxu0 0.0
    %1366 = vmatpush2.msra.mxu0 0.0
    %1367 = vmatprep.subr.mxu0 0.0
    %1368 = vmatpush2.msra.mxu0 0.0
    %1369 = vmatprep.subr.mxu0 0.0
    %1370 = vmatpush2.msra.mxu0 0.0
    %1371 = vmatprep.subr.mxu0 0.0
    %1372 = vmatpush2.msra.mxu0 0.0
    %1373 = vmatprep.subr.mxu0 0.0
    %1374 = vmatpush2.msra.mxu0 0.0
    %1375 = vmatprep.subr.mxu0 0.0
    %1376 = vmatpush2.msra.mxu0 0.0
    %1377 = vmatprep.subr.mxu0 0.0
    %1378 = vmatpush2.msra.mxu0 0.0
    %1379 = vmatprep.subr.mxu0 0.0
    %1380 = vmatpush2.msra.mxu0 0.0
    %1381 = vmatprep.subr.mxu0 0.0
    %1382 = vmatpush2.msra.mxu0 0.0
    %1383 = vmatprep.subr.mxu0 0.0
    %1384 = vmatpush2.msra.mxu0 0.0
    %1385 = vmatprep.subr.mxu0 0.0
    %1386 = vmatpush2.msra.mxu0 0.0
    %1387 = vmatprep.mubr.f32.mxu0 0.0
    %1388 = vmatmul.mubr.f32.gmra.mxu0 %v1321
    %v1389 = vpop.f32.mrf.mxu0
    %v1390 = vadd.f32 %v1318, %v1389
    %v1391 = vpop.f32.mrf.mxu0
    %1392 = vdwg.mxu0
    %v1393 = vld [vmem:[%s534] sm:$0xff]
    %v1394 = vld [vmem:[%s534 + $0x8] sm:$0xff]
    %v1395 = vld [vmem:[%s534 + $0x10] sm:$0xff]
    %v1396 = vld [vmem:[%s534 + $0x18] sm:$0xff]
    %v1397 = vld [vmem:[%s539] sm:$0x1]
    %v1399 = vlaneseq
    %v1400 = vshrl.u32 %v1399, 7
    %v1401 = vsub.s32 0, %v1400
    %v1402 = vrot.slane %v1397, %v1401
    %1404 = vmatprep.subr.mxu0 0.0
    %1405 = vmatpush1.msra.mxu0 0.0
    %1406 = vmatprep.subr.mxu0 0.0
    %1407 = vmatpush1.msra.mxu0 0.0
    %1408 = vmatprep.subr.mxu0 0.0
    %1409 = vmatpush1.msra.mxu0 0.0
    %1410 = vmatprep.subr.mxu0 0.0
    %1411 = vmatpush1.msra.mxu0 0.0
    %1412 = vmatprep.subr.mxu0 0.0
    %1413 = vmatpush1.msra.mxu0 0.0
    %1414 = vmatprep.subr.mxu0 0.0
    %1415 = vmatpush1.msra.mxu0 0.0
    %1416 = vmatprep.subr.mxu0 0.0
    %1417 = vmatpush1.msra.mxu0 0.0
    %1418 = vmatprep.subr.mxu0 0.0
    %1419 = vmatpush1.msra.mxu0 0.0
    %1420 = vmatprep.subr.mxu0 0.0
    %1421 = vmatpush1.msra.mxu0 0.0
    %1422 = vmatprep.subr.mxu0 0.0
    %1423 = vmatpush1.msra.mxu0 0.0
    %1424 = vmatprep.subr.mxu0 0.0
    %1425 = vmatpush1.msra.mxu0 0.0
    %1426 = vmatprep.subr.mxu0 0.0
    %1427 = vmatpush1.msra.mxu0 0.0
    %1428 = vmatprep.subr.mxu0 0.0
    %1429 = vmatpush1.msra.mxu0 %v1396
    %1430 = vmatprep.subr.mxu0 0.0
    %1431 = vmatpush1.msra.mxu0 %v1395
    %1432 = vmatprep.subr.mxu0 0.0
    %1433 = vmatpush1.msra.mxu0 %v1394
    %1434 = vmatprep.subr.mxu0 0.0
    %1435 = vmatpush1.msra.mxu0 %v1393
    %1436 = vmatprep.subr.mxu0 0.0
    %1437 = vmatpush2.msra.mxu0 0.0
    %1438 = vmatprep.subr.mxu0 0.0
    %1439 = vmatpush2.msra.mxu0 0.0
    %1440 = vmatprep.subr.mxu0 0.0
    %1441 = vmatpush2.msra.mxu0 0.0
    %1442 = vmatprep.subr.mxu0 0.0
    %1443 = vmatpush2.msra.mxu0 0.0
    %1444 = vmatprep.subr.mxu0 0.0
    %1445 = vmatpush2.msra.mxu0 0.0
    %1446 = vmatprep.subr.mxu0 0.0
    %1447 = vmatpush2.msra.mxu0 0.0
    %1448 = vmatprep.subr.mxu0 0.0
    %1449 = vmatpush2.msra.mxu0 0.0
    %1450 = vmatprep.subr.mxu0 0.0
    %1451 = vmatpush2.msra.mxu0 0.0
    %1452 = vmatprep.subr.mxu0 0.0
    %1453 = vmatpush2.msra.mxu0 0.0
    %1454 = vmatprep.subr.mxu0 0.0
    %1455 = vmatpush2.msra.mxu0 0.0
    %1456 = vmatprep.subr.mxu0 0.0
    %1457 = vmatpush2.msra.mxu0 0.0
    %1458 = vmatprep.subr.mxu0 0.0
    %1459 = vmatpush2.msra.mxu0 0.0
    %1460 = vmatprep.subr.mxu0 0.0
    %1461 = vmatpush2.msra.mxu0 0.0
    %1462 = vmatprep.subr.mxu0 0.0
    %1463 = vmatpush2.msra.mxu0 0.0
    %1464 = vmatprep.subr.mxu0 0.0
    %1465 = vmatpush2.msra.mxu0 0.0
    %1466 = vmatprep.subr.mxu0 0.0
    %1467 = vmatpush2.msra.mxu0 0.0
    %1468 = vmatprep.mubr.f32.mxu0 0.0
    %1469 = vmatmul.mubr.f32.gmra.mxu0 %v1321
    %v1470 = vpop.f32.mrf.mxu0
    %v1471 = vadd.f32 %v1402, %v1470
    %v1472 = vpop.f32.mrf.mxu0
    %1473 = vdwg.mxu0
    %v1474 = vld [vmem:[%s617] sm:$0xff]
    %v1475 = vld [vmem:[%s617 + $0x8] sm:$0xff]
    %v1476 = vld [vmem:[%s617 + $0x10] sm:$0xff]
    %v1477 = vld [vmem:[%s617 + $0x18] sm:$0xff]
    %v1478 = vld [vmem:[%s622] sm:$0x1]
    %v1480 = vlaneseq
    %v1481 = vshrl.u32 %v1480, 7
    %v1482 = vsub.s32 0, %v1481
    %v1483 = vrot.slane %v1478, %v1482
    %1485 = vmatprep.subr.mxu0 0.0
    %1486 = vmatpush1.msra.mxu0 0.0
    %1487 = vmatprep.subr.mxu0 0.0
    %1488 = vmatpush1.msra.mxu0 0.0
    %1489 = vmatprep.subr.mxu0 0.0
    %1490 = vmatpush1.msra.mxu0 0.0
    %1491 = vmatprep.subr.mxu0 0.0
    %1492 = vmatpush1.msra.mxu0 0.0
    %1493 = vmatprep.subr.mxu0 0.0
    %1494 = vmatpush1.msra.mxu0 0.0
    %1495 = vmatprep.subr.mxu0 0.0
    %1496 = vmatpush1.msra.mxu0 0.0
    %1497 = vmatprep.subr.mxu0 0.0
    %1498 = vmatpush1.msra.mxu0 0.0
    %1499 = vmatprep.subr.mxu0 0.0
    %1500 = vmatpush1.msra.mxu0 0.0
    %1501 = vmatprep.subr.mxu0 0.0
    %1502 = vmatpush1.msra.mxu0 0.0
    %1503 = vmatprep.subr.mxu0 0.0
    %1504 = vmatpush1.msra.mxu0 0.0
    %1505 = vmatprep.subr.mxu0 0.0
    %1506 = vmatpush1.msra.mxu0 0.0
    %1507 = vmatprep.subr.mxu0 0.0
    %1508 = vmatpush1.msra.mxu0 0.0
    %1509 = vmatprep.subr.mxu0 0.0
    %1510 = vmatpush1.msra.mxu0 %v1477
    %1511 = vmatprep.subr.mxu0 0.0
    %1512 = vmatpush1.msra.mxu0 %v1476
    %1513 = vmatprep.subr.mxu0 0.0
    %1514 = vmatpush1.msra.mxu0 %v1475
    %1515 = vmatprep.subr.mxu0 0.0
    %1516 = vmatpush1.msra.mxu0 %v1474
    %1517 = vmatprep.subr.mxu0 0.0
    %1518 = vmatpush2.msra.mxu0 0.0
    %1519 = vmatprep.subr.mxu0 0.0
    %1520 = vmatpush2.msra.mxu0 0.0
    %1521 = vmatprep.subr.mxu0 0.0
    %1522 = vmatpush2.msra.mxu0 0.0
    %1523 = vmatprep.subr.mxu0 0.0
    %1524 = vmatpush2.msra.mxu0 0.0
    %1525 = vmatprep.subr.mxu0 0.0
    %1526 = vmatpush2.msra.mxu0 0.0
    %1527 = vmatprep.subr.mxu0 0.0
    %1528 = vmatpush2.msra.mxu0 0.0
    %1529 = vmatprep.subr.mxu0 0.0
    %1530 = vmatpush2.msra.mxu0 0.0
    %1531 = vmatprep.subr.mxu0 0.0
    %1532 = vmatpush2.msra.mxu0 0.0
    %1533 = vmatprep.subr.mxu0 0.0
    %1534 = vmatpush2.msra.mxu0 0.0
    %1535 = vmatprep.subr.mxu0 0.0
    %1536 = vmatpush2.msra.mxu0 0.0
    %1537 = vmatprep.subr.mxu0 0.0
    %1538 = vmatpush2.msra.mxu0 0.0
    %1539 = vmatprep.subr.mxu0 0.0
    %1540 = vmatpush2.msra.mxu0 0.0
    %1541 = vmatprep.subr.mxu0 0.0
    %1542 = vmatpush2.msra.mxu0 0.0
    %1543 = vmatprep.subr.mxu0 0.0
    %1544 = vmatpush2.msra.mxu0 0.0
    %1545 = vmatprep.subr.mxu0 0.0
    %1546 = vmatpush2.msra.mxu0 0.0
    %1547 = vmatprep.subr.mxu0 0.0
    %1548 = vmatpush2.msra.mxu0 0.0
    %1549 = vmatprep.mubr.f32.mxu0 0.0
    %1550 = vmatmul.mubr.f32.gmra.mxu0 %v1321
    %v1551 = vpop.f32.mrf.mxu0
    %v1552 = vadd.f32 %v1483, %v1551
    %v1553 = vpop.f32.mrf.mxu0
    %1554 = vdwg.mxu0
    %v1555 = vadd.f32 %v192, %v1390
    %v1556 = vxor.u32 %v1555, 2147483648
    %v1557 = vmul.f32 %v1556, 1.442695
    %v1558 = vpow.pop %v1557
    %v1559 = vadd.f32 %v1558, 1.0
    %v1560 = vrcp.pop %v1559
    %v1561 = vmul.f32 1.0, %v1560
    %v1562 = vadd.f32 %v308, %v1471
    %v1563 = vxor.u32 %v1562, 2147483648
    %v1564 = vmul.f32 %v1563, 1.442695
    %v1565 = vpow.pop %v1564
    %v1566 = vadd.f32 %v1565, 1.0
    %v1567 = vrcp.pop %v1566
    %v1568 = vmul.f32 1.0, %v1567
    %v1569 = vmul.f32 %v1561, %v1552
    %v1570 = vadd.f32 %v424, %v1569
    %v1571 = vtanh.pop %v1570
    %v1572 = vsub.f32 1.0, %v1568
    %v1573 = vmul.f32 %v1572, %v1571
    %v1574 = vmul.f32 %v1568, %v1307
    %v1575 = vadd.f32 %v1573, %v1574
    %vm1576 = vcmp.gt.f32.partialorder %v447, 3.0
    %v1577 = vsel %vm1576, 1, 0
    %v1578 = vcvt.s32.f32 %v1577
    %1580 = vset.pattern.permute.xlu0 0
    %1581 = vperm.xlu0 %1580, %v1578
    %v1582 = vpop.permute.xlu0 %1581
    %v1584 = vmul.f32 %v1582, %v1575
    %v1585 = vsub.f32 1.0, %v1578
    %1587 = vset.pattern.permute.xlu0 0
    %1588 = vperm.xlu0 %1587, %v1585
    %v1589 = vpop.permute.xlu0 %1588
    %v1591 = vmul.f32 %v1589, %v1307
    %v1592 = vadd.f32 %v1584, %v1591
    %1593 = vst.msk [vmem:[%s7 + $0x18] sm:$0xff] %vm460, %v1592
    %v1594 = vld [vmem:[%s4] sm:$0xff]
    %v1595 = vld [vmem:[%s4 + $0x8] sm:$0xff]
    %v1596 = vld [vmem:[%s4 + $0x10] sm:$0xff]
    %v1597 = vld [vmem:[%s4 + $0x18] sm:$0xff]
    %v1598 = vld [vmem:[%s6] sm:$0x1]
    %v1600 = vlaneseq
    %v1601 = vshrl.u32 %v1600, 7
    %v1602 = vsub.s32 0, %v1601
    %v1603 = vrot.slane %v1598, %v1602
    %v1606 = vsel %vm460, %v1592, 0
    %1608 = vmatprep.subr.mxu0 0.0
    %1609 = vmatpush1.msra.mxu0 0.0
    %1610 = vmatprep.subr.mxu0 0.0
    %1611 = vmatpush1.msra.mxu0 0.0
    %1612 = vmatprep.subr.mxu0 0.0
    %1613 = vmatpush1.msra.mxu0 0.0
    %1614 = vmatprep.subr.mxu0 0.0
    %1615 = vmatpush1.msra.mxu0 0.0
    %1616 = vmatprep.subr.mxu0 0.0
    %1617 = vmatpush1.msra.mxu0 0.0
    %1618 = vmatprep.subr.mxu0 0.0
    %1619 = vmatpush1.msra.mxu0 0.0
    %1620 = vmatprep.subr.mxu0 0.0
    %1621 = vmatpush1.msra.mxu0 0.0
    %1622 = vmatprep.subr.mxu0 0.0
    %1623 = vmatpush1.msra.mxu0 0.0
    %1624 = vmatprep.subr.mxu0 0.0
    %1625 = vmatpush1.msra.mxu0 0.0
    %1626 = vmatprep.subr.mxu0 0.0
    %1627 = vmatpush1.msra.mxu0 0.0
    %1628 = vmatprep.subr.mxu0 0.0
    %1629 = vmatpush1.msra.mxu0 0.0
    %1630 = vmatprep.subr.mxu0 0.0
    %1631 = vmatpush1.msra.mxu0 0.0
    %1632 = vmatprep.subr.mxu0 0.0
    %1633 = vmatpush1.msra.mxu0 %v1597
    %1634 = vmatprep.subr.mxu0 0.0
    %1635 = vmatpush1.msra.mxu0 %v1596
    %1636 = vmatprep.subr.mxu0 0.0
    %1637 = vmatpush1.msra.mxu0 %v1595
    %1638 = vmatprep.subr.mxu0 0.0
    %1639 = vmatpush1.msra.mxu0 %v1594
    %1640 = vmatprep.subr.mxu0 0.0
    %1641 = vmatpush2.msra.mxu0 0.0
    %1642 = vmatprep.subr.mxu0 0.0
    %1643 = vmatpush2.msra.mxu0 0.0
    %1644 = vmatprep.subr.mxu0 0.0
    %1645 = vmatpush2.msra.mxu0 0.0
    %1646 = vmatprep.subr.mxu0 0.0
    %1647 = vmatpush2.msra.mxu0 0.0
    %1648 = vmatprep.subr.mxu0 0.0
    %1649 = vmatpush2.msra.mxu0 0.0
    %1650 = vmatprep.subr.mxu0 0.0
    %1651 = vmatpush2.msra.mxu0 0.0
    %1652 = vmatprep.subr.mxu0 0.0
    %1653 = vmatpush2.msra.mxu0 0.0
    %1654 = vmatprep.subr.mxu0 0.0
    %1655 = vmatpush2.msra.mxu0 0.0
    %1656 = vmatprep.subr.mxu0 0.0
    %1657 = vmatpush2.msra.mxu0 0.0
    %1658 = vmatprep.subr.mxu0 0.0
    %1659 = vmatpush2.msra.mxu0 0.0
    %1660 = vmatprep.subr.mxu0 0.0
    %1661 = vmatpush2.msra.mxu0 0.0
    %1662 = vmatprep.subr.mxu0 0.0
    %1663 = vmatpush2.msra.mxu0 0.0
    %1664 = vmatprep.subr.mxu0 0.0
    %1665 = vmatpush2.msra.mxu0 0.0
    %1666 = vmatprep.subr.mxu0 0.0
    %1667 = vmatpush2.msra.mxu0 0.0
    %1668 = vmatprep.subr.mxu0 0.0
    %1669 = vmatpush2.msra.mxu0 0.0
    %1670 = vmatprep.subr.mxu0 0.0
    %1671 = vmatpush2.msra.mxu0 0.0
    %1672 = vmatprep.mubr.f32.mxu0 0.0
    %1673 = vmatmul.mubr.f32.gmra.mxu0 %v1606
    %v1674 = vpop.f32.mrf.mxu0
    %v1675 = vadd.f32 %v1603, %v1674
    %v1676 = vpop.f32.mrf.mxu0
    %1677 = vdwg.mxu0
    %v1678 = vld [vmem:[%s534] sm:$0xff]
    %v1679 = vld [vmem:[%s534 + $0x8] sm:$0xff]
    %v1680 = vld [vmem:[%s534 + $0x10] sm:$0xff]
    %v1681 = vld [vmem:[%s534 + $0x18] sm:$0xff]
    %v1682 = vld [vmem:[%s539] sm:$0x1]
    %v1684 = vlaneseq
    %v1685 = vshrl.u32 %v1684, 7
    %v1686 = vsub.s32 0, %v1685
    %v1687 = vrot.slane %v1682, %v1686
    %1689 = vmatprep.subr.mxu0 0.0
    %1690 = vmatpush1.msra.mxu0 0.0
    %1691 = vmatprep.subr.mxu0 0.0
    %1692 = vmatpush1.msra.mxu0 0.0
    %1693 = vmatprep.subr.mxu0 0.0
    %1694 = vmatpush1.msra.mxu0 0.0
    %1695 = vmatprep.subr.mxu0 0.0
    %1696 = vmatpush1.msra.mxu0 0.0
    %1697 = vmatprep.subr.mxu0 0.0
    %1698 = vmatpush1.msra.mxu0 0.0
    %1699 = vmatprep.subr.mxu0 0.0
    %1700 = vmatpush1.msra.mxu0 0.0
    %1701 = vmatprep.subr.mxu0 0.0
    %1702 = vmatpush1.msra.mxu0 0.0
    %1703 = vmatprep.subr.mxu0 0.0
    %1704 = vmatpush1.msra.mxu0 0.0
    %1705 = vmatprep.subr.mxu0 0.0
    %1706 = vmatpush1.msra.mxu0 0.0
    %1707 = vmatprep.subr.mxu0 0.0
    %1708 = vmatpush1.msra.mxu0 0.0
    %1709 = vmatprep.subr.mxu0 0.0
    %1710 = vmatpush1.msra.mxu0 0.0
    %1711 = vmatprep.subr.mxu0 0.0
    %1712 = vmatpush1.msra.mxu0 0.0
    %1713 = vmatprep.subr.mxu0 0.0
    %1714 = vmatpush1.msra.mxu0 %v1681
    %1715 = vmatprep.subr.mxu0 0.0
    %1716 = vmatpush1.msra.mxu0 %v1680
    %1717 = vmatprep.subr.mxu0 0.0
    %1718 = vmatpush1.msra.mxu0 %v1679
    %1719 = vmatprep.subr.mxu0 0.0
    %1720 = vmatpush1.msra.mxu0 %v1678
    %1721 = vmatprep.subr.mxu0 0.0
    %1722 = vmatpush2.msra.mxu0 0.0
    %1723 = vmatprep.subr.mxu0 0.0
    %1724 = vmatpush2.msra.mxu0 0.0
    %1725 = vmatprep.subr.mxu0 0.0
    %1726 = vmatpush2.msra.mxu0 0.0
    %1727 = vmatprep.subr.mxu0 0.0
    %1728 = vmatpush2.msra.mxu0 0.0
    %1729 = vmatprep.subr.mxu0 0.0
    %1730 = vmatpush2.msra.mxu0 0.0
    %1731 = vmatprep.subr.mxu0 0.0
    %1732 = vmatpush2.msra.mxu0 0.0
    %1733 = vmatprep.subr.mxu0 0.0
    %1734 = vmatpush2.msra.mxu0 0.0
    %1735 = vmatprep.subr.mxu0 0.0
    %1736 = vmatpush2.msra.mxu0 0.0
    %1737 = vmatprep.subr.mxu0 0.0
    %1738 = vmatpush2.msra.mxu0 0.0
    %1739 = vmatprep.subr.mxu0 0.0
    %1740 = vmatpush2.msra.mxu0 0.0
    %1741 = vmatprep.subr.mxu0 0.0
    %1742 = vmatpush2.msra.mxu0 0.0
    %1743 = vmatprep.subr.mxu0 0.0
    %1744 = vmatpush2.msra.mxu0 0.0
    %1745 = vmatprep.subr.mxu0 0.0
    %1746 = vmatpush2.msra.mxu0 0.0
    %1747 = vmatprep.subr.mxu0 0.0
    %1748 = vmatpush2.msra.mxu0 0.0
    %1749 = vmatprep.subr.mxu0 0.0
    %1750 = vmatpush2.msra.mxu0 0.0
    %1751 = vmatprep.subr.mxu0 0.0
    %1752 = vmatpush2.msra.mxu0 0.0
    %1753 = vmatprep.mubr.f32.mxu0 0.0
    %1754 = vmatmul.mubr.f32.gmra.mxu0 %v1606
    %v1755 = vpop.f32.mrf.mxu0
    %v1756 = vadd.f32 %v1687, %v1755
    %v1757 = vpop.f32.mrf.mxu0
    %1758 = vdwg.mxu0
    %v1759 = vld [vmem:[%s617] sm:$0xff]
    %v1760 = vld [vmem:[%s617 + $0x8] sm:$0xff]
    %v1761 = vld [vmem:[%s617 + $0x10] sm:$0xff]
    %v1762 = vld [vmem:[%s617 + $0x18] sm:$0xff]
    %v1763 = vld [vmem:[%s622] sm:$0x1]
    %v1765 = vlaneseq
    %v1766 = vshrl.u32 %v1765, 7
    %v1767 = vsub.s32 0, %v1766
    %v1768 = vrot.slane %v1763, %v1767
    %1770 = vmatprep.subr.mxu0 0.0
    %1771 = vmatpush1.msra.mxu0 0.0
    %1772 = vmatprep.subr.mxu0 0.0
    %1773 = vmatpush1.msra.mxu0 0.0
    %1774 = vmatprep.subr.mxu0 0.0
    %1775 = vmatpush1.msra.mxu0 0.0
    %1776 = vmatprep.subr.mxu0 0.0
    %1777 = vmatpush1.msra.mxu0 0.0
    %1778 = vmatprep.subr.mxu0 0.0
    %1779 = vmatpush1.msra.mxu0 0.0
    %1780 = vmatprep.subr.mxu0 0.0
    %1781 = vmatpush1.msra.mxu0 0.0
    %1782 = vmatprep.subr.mxu0 0.0
    %1783 = vmatpush1.msra.mxu0 0.0
    %1784 = vmatprep.subr.mxu0 0.0
    %1785 = vmatpush1.msra.mxu0 0.0
    %1786 = vmatprep.subr.mxu0 0.0
    %1787 = vmatpush1.msra.mxu0 0.0
    %1788 = vmatprep.subr.mxu0 0.0
    %1789 = vmatpush1.msra.mxu0 0.0
    %1790 = vmatprep.subr.mxu0 0.0
    %1791 = vmatpush1.msra.mxu0 0.0
    %1792 = vmatprep.subr.mxu0 0.0
    %1793 = vmatpush1.msra.mxu0 0.0
    %1794 = vmatprep.subr.mxu0 0.0
    %1795 = vmatpush1.msra.mxu0 %v1762
    %1796 = vmatprep.subr.mxu0 0.0
    %1797 = vmatpush1.msra.mxu0 %v1761
    %1798 = vmatprep.subr.mxu0 0.0
    %1799 = vmatpush1.msra.mxu0 %v1760
    %1800 = vmatprep.subr.mxu0 0.0
    %1801 = vmatpush1.msra.mxu0 %v1759
    %1802 = vmatprep.subr.mxu0 0.0
    %1803 = vmatpush2.msra.mxu0 0.0
    %1804 = vmatprep.subr.mxu0 0.0
    %1805 = vmatpush2.msra.mxu0 0.0
    %1806 = vmatprep.subr.mxu0 0.0
    %1807 = vmatpush2.msra.mxu0 0.0
    %1808 = vmatprep.subr.mxu0 0.0
    %1809 = vmatpush2.msra.mxu0 0.0
    %1810 = vmatprep.subr.mxu0 0.0
    %1811 = vmatpush2.msra.mxu0 0.0
    %1812 = vmatprep.subr.mxu0 0.0
    %1813 = vmatpush2.msra.mxu0 0.0
    %1814 = vmatprep.subr.mxu0 0.0
    %1815 = vmatpush2.msra.mxu0 0.0
    %1816 = vmatprep.subr.mxu0 0.0
    %1817 = vmatpush2.msra.mxu0 0.0
    %1818 = vmatprep.subr.mxu0 0.0
    %1819 = vmatpush2.msra.mxu0 0.0
    %1820 = vmatprep.subr.mxu0 0.0
    %1821 = vmatpush2.msra.mxu0 0.0
    %1822 = vmatprep.subr.mxu0 0.0
    %1823 = vmatpush2.msra.mxu0 0.0
    %1824 = vmatprep.subr.mxu0 0.0
    %1825 = vmatpush2.msra.mxu0 0.0
    %1826 = vmatprep.subr.mxu0 0.0
    %1827 = vmatpush2.msra.mxu0 0.0
    %1828 = vmatprep.subr.mxu0 0.0
    %1829 = vmatpush2.msra.mxu0 0.0
    %1830 = vmatprep.subr.mxu0 0.0
    %1831 = vmatpush2.msra.mxu0 0.0
    %1832 = vmatprep.subr.mxu0 0.0
    %1833 = vmatpush2.msra.mxu0 0.0
    %1834 = vmatprep.mubr.f32.mxu0 0.0
    %1835 = vmatmul.mubr.f32.gmra.mxu0 %v1606
    %v1836 = vpop.f32.mrf.mxu0
    %v1837 = vadd.f32 %v1768, %v1836
    %v1838 = vpop.f32.mrf.mxu0
    %1839 = vdwg.mxu0
    %v1840 = vadd.f32 %v197, %v1675
    %v1841 = vxor.u32 %v1840, 2147483648
    %v1842 = vmul.f32 %v1841, 1.442695
    %v1843 = vpow.pop %v1842
    %v1844 = vadd.f32 %v1843, 1.0
    %v1845 = vrcp.pop %v1844
    %v1846 = vmul.f32 1.0, %v1845
    %v1847 = vadd.f32 %v313, %v1756
    %v1848 = vxor.u32 %v1847, 2147483648
    %v1849 = vmul.f32 %v1848, 1.442695
    %v1850 = vpow.pop %v1849
    %v1851 = vadd.f32 %v1850, 1.0
    %v1852 = vrcp.pop %v1851
    %v1853 = vmul.f32 1.0, %v1852
    %v1854 = vmul.f32 %v1846, %v1837
    %v1855 = vadd.f32 %v429, %v1854
    %v1856 = vtanh.pop %v1855
    %v1857 = vsub.f32 1.0, %v1853
    %v1858 = vmul.f32 %v1857, %v1856
    %v1859 = vmul.f32 %v1853, %v1592
    %v1860 = vadd.f32 %v1858, %v1859
    %vm1861 = vcmp.gt.f32.partialorder %v447, 4.0
    %v1862 = vsel %vm1861, 1, 0
    %v1863 = vcvt.s32.f32 %v1862
    %1865 = vset.pattern.permute.xlu0 0
    %1866 = vperm.xlu0 %1865, %v1863
    %v1867 = vpop.permute.xlu0 %1866
    %v1869 = vmul.f32 %v1867, %v1860
    %v1870 = vsub.f32 1.0, %v1863
    %1872 = vset.pattern.permute.xlu0 0
    %1873 = vperm.xlu0 %1872, %v1870
    %v1874 = vpop.permute.xlu0 %1873
    %v1876 = vmul.f32 %v1874, %v1592
    %v1877 = vadd.f32 %v1869, %v1876
    %1878 = vst.msk [vmem:[%s7 + $0x20] sm:$0xff] %vm460, %v1877
    %v1879 = vld [vmem:[%s4] sm:$0xff]
    %v1880 = vld [vmem:[%s4 + $0x8] sm:$0xff]
    %v1881 = vld [vmem:[%s4 + $0x10] sm:$0xff]
    %v1882 = vld [vmem:[%s4 + $0x18] sm:$0xff]
    %v1883 = vld [vmem:[%s6] sm:$0x1]
    %v1885 = vlaneseq
    %v1886 = vshrl.u32 %v1885, 7
    %v1887 = vsub.s32 0, %v1886
    %v1888 = vrot.slane %v1883, %v1887
    %v1891 = vsel %vm460, %v1877, 0
    %1893 = vmatprep.subr.mxu0 0.0
    %1894 = vmatpush1.msra.mxu0 0.0
    %1895 = vmatprep.subr.mxu0 0.0
    %1896 = vmatpush1.msra.mxu0 0.0
    %1897 = vmatprep.subr.mxu0 0.0
    %1898 = vmatpush1.msra.mxu0 0.0
    %1899 = vmatprep.subr.mxu0 0.0
    %1900 = vmatpush1.msra.mxu0 0.0
    %1901 = vmatprep.subr.mxu0 0.0
    %1902 = vmatpush1.msra.mxu0 0.0
    %1903 = vmatprep.subr.mxu0 0.0
    %1904 = vmatpush1.msra.mxu0 0.0
    %1905 = vmatprep.subr.mxu0 0.0
    %1906 = vmatpush1.msra.mxu0 0.0
    %1907 = vmatprep.subr.mxu0 0.0
    %1908 = vmatpush1.msra.mxu0 0.0
    %1909 = vmatprep.subr.mxu0 0.0
    %1910 = vmatpush1.msra.mxu0 0.0
    %1911 = vmatprep.subr.mxu0 0.0
    %1912 = vmatpush1.msra.mxu0 0.0
    %1913 = vmatprep.subr.mxu0 0.0
    %1914 = vmatpush1.msra.mxu0 0.0
    %1915 = vmatprep.subr.mxu0 0.0
    %1916 = vmatpush1.msra.mxu0 0.0
    %1917 = vmatprep.subr.mxu0 0.0
    %1918 = vmatpush1.msra.mxu0 %v1882
    %1919 = vmatprep.subr.mxu0 0.0
    %1920 = vmatpush1.msra.mxu0 %v1881
    %1921 = vmatprep.subr.mxu0 0.0
    %1922 = vmatpush1.msra.mxu0 %v1880
    %1923 = vmatprep.subr.mxu0 0.0
    %1924 = vmatpush1.msra.mxu0 %v1879
    %1925 = vmatprep.subr.mxu0 0.0
    %1926 = vmatpush2.msra.mxu0 0.0
    %1927 = vmatprep.subr.mxu0 0.0
    %1928 = vmatpush2.msra.mxu0 0.0
    %1929 = vmatprep.subr.mxu0 0.0
    %1930 = vmatpush2.msra.mxu0 0.0
    %1931 = vmatprep.subr.mxu0 0.0
    %1932 = vmatpush2.msra.mxu0 0.0
    %1933 = vmatprep.subr.mxu0 0.0
    %1934 = vmatpush2.msra.mxu0 0.0
    %1935 = vmatprep.subr.mxu0 0.0
    %1936 = vmatpush2.msra.mxu0 0.0
    %1937 = vmatprep.subr.mxu0 0.0
    %1938 = vmatpush2.msra.mxu0 0.0
    %1939 = vmatprep.subr.mxu0 0.0
    %1940 = vmatpush2.msra.mxu0 0.0
    %1941 = vmatprep.subr.mxu0 0.0
    %1942 = vmatpush2.msra.mxu0 0.0
    %1943 = vmatprep.subr.mxu0 0.0
    %1944 = vmatpush2.msra.mxu0 0.0
    %1945 = vmatprep.subr.mxu0 0.0
    %1946 = vmatpush2.msra.mxu0 0.0
    %1947 = vmatprep.subr.mxu0 0.0
    %1948 = vmatpush2.msra.mxu0 0.0
    %1949 = vmatprep.subr.mxu0 0.0
    %1950 = vmatpush2.msra.mxu0 0.0
    %1951 = vmatprep.subr.mxu0 0.0
    %1952 = vmatpush2.msra.mxu0 0.0
    %1953 = vmatprep.subr.mxu0 0.0
    %1954 = vmatpush2.msra.mxu0 0.0
    %1955 = vmatprep.subr.mxu0 0.0
    %1956 = vmatpush2.msra.mxu0 0.0
    %1957 = vmatprep.mubr.f32.mxu0 0.0
    %1958 = vmatmul.mubr.f32.gmra.mxu0 %v1891
    %v1959 = vpop.f32.mrf.mxu0
    %v1960 = vadd.f32 %v1888, %v1959
    %v1961 = vpop.f32.mrf.mxu0
    %1962 = vdwg.mxu0
    %v1963 = vld [vmem:[%s534] sm:$0xff]
    %v1964 = vld [vmem:[%s534 + $0x8] sm:$0xff]
    %v1965 = vld [vmem:[%s534 + $0x10] sm:$0xff]
    %v1966 = vld [vmem:[%s534 + $0x18] sm:$0xff]
    %v1967 = vld [vmem:[%s539] sm:$0x1]
    %v1969 = vlaneseq
    %v1970 = vshrl.u32 %v1969, 7
    %v1971 = vsub.s32 0, %v1970
    %v1972 = vrot.slane %v1967, %v1971
    %1974 = vmatprep.subr.mxu0 0.0
    %1975 = vmatpush1.msra.mxu0 0.0
    %1976 = vmatprep.subr.mxu0 0.0
    %1977 = vmatpush1.msra.mxu0 0.0
    %1978 = vmatprep.subr.mxu0 0.0
    %1979 = vmatpush1.msra.mxu0 0.0
    %1980 = vmatprep.subr.mxu0 0.0
    %1981 = vmatpush1.msra.mxu0 0.0
    %1982 = vmatprep.subr.mxu0 0.0
    %1983 = vmatpush1.msra.mxu0 0.0
    %1984 = vmatprep.subr.mxu0 0.0
    %1985 = vmatpush1.msra.mxu0 0.0
    %1986 = vmatprep.subr.mxu0 0.0
    %1987 = vmatpush1.msra.mxu0 0.0
    %1988 = vmatprep.subr.mxu0 0.0
    %1989 = vmatpush1.msra.mxu0 0.0
    %1990 = vmatprep.subr.mxu0 0.0
    %1991 = vmatpush1.msra.mxu0 0.0
    %1992 = vmatprep.subr.mxu0 0.0
    %1993 = vmatpush1.msra.mxu0 0.0
    %1994 = vmatprep.subr.mxu0 0.0
    %1995 = vmatpush1.msra.mxu0 0.0
    %1996 = vmatprep.subr.mxu0 0.0
    %1997 = vmatpush1.msra.mxu0 0.0
    %1998 = vmatprep.subr.mxu0 0.0
    %1999 = vmatpush1.msra.mxu0 %v1966
    %2000 = vmatprep.subr.mxu0 0.0
    %2001 = vmatpush1.msra.mxu0 %v1965
    %2002 = vmatprep.subr.mxu0 0.0
    %2003 = vmatpush1.msra.mxu0 %v1964
    %2004 = vmatprep.subr.mxu0 0.0
    %2005 = vmatpush1.msra.mxu0 %v1963
    %2006 = vmatprep.subr.mxu0 0.0
    %2007 = vmatpush2.msra.mxu0 0.0
    %2008 = vmatprep.subr.mxu0 0.0
    %2009 = vmatpush2.msra.mxu0 0.0
    %2010 = vmatprep.subr.mxu0 0.0
    %2011 = vmatpush2.msra.mxu0 0.0
    %2012 = vmatprep.subr.mxu0 0.0
    %2013 = vmatpush2.msra.mxu0 0.0
    %2014 = vmatprep.subr.mxu0 0.0
    %2015 = vmatpush2.msra.mxu0 0.0
    %2016 = vmatprep.subr.mxu0 0.0
    %2017 = vmatpush2.msra.mxu0 0.0
    %2018 = vmatprep.subr.mxu0 0.0
    %2019 = vmatpush2.msra.mxu0 0.0
    %2020 = vmatprep.subr.mxu0 0.0
    %2021 = vmatpush2.msra.mxu0 0.0
    %2022 = vmatprep.subr.mxu0 0.0
    %2023 = vmatpush2.msra.mxu0 0.0
    %2024 = vmatprep.subr.mxu0 0.0
    %2025 = vmatpush2.msra.mxu0 0.0
    %2026 = vmatprep.subr.mxu0 0.0
    %2027 = vmatpush2.msra.mxu0 0.0
    %2028 = vmatprep.subr.mxu0 0.0
    %2029 = vmatpush2.msra.mxu0 0.0
    %2030 = vmatprep.subr.mxu0 0.0
    %2031 = vmatpush2.msra.mxu0 0.0
    %2032 = vmatprep.subr.mxu0 0.0
    %2033 = vmatpush2.msra.mxu0 0.0
    %2034 = vmatprep.subr.mxu0 0.0
    %2035 = vmatpush2.msra.mxu0 0.0
    %2036 = vmatprep.subr.mxu0 0.0
    %2037 = vmatpush2.msra.mxu0 0.0
    %2038 = vmatprep.mubr.f32.mxu0 0.0
    %2039 = vmatmul.mubr.f32.gmra.mxu0 %v1891
    %v2040 = vpop.f32.mrf.mxu0
    %v2041 = vadd.f32 %v1972, %v2040
    %v2042 = vpop.f32.mrf.mxu0
    %2043 = vdwg.mxu0
    %v2044 = vld [vmem:[%s617] sm:$0xff]
    %v2045 = vld [vmem:[%s617 + $0x8] sm:$0xff]
    %v2046 = vld [vmem:[%s617 + $0x10] sm:$0xff]
    %v2047 = vld [vmem:[%s617 + $0x18] sm:$0xff]
    %v2048 = vld [vmem:[%s622] sm:$0x1]
    %v2050 = vlaneseq
    %v2051 = vshrl.u32 %v2050, 7
    %v2052 = vsub.s32 0, %v2051
    %v2053 = vrot.slane %v2048, %v2052
    %2055 = vmatprep.subr.mxu0 0.0
    %2056 = vmatpush1.msra.mxu0 0.0
    %2057 = vmatprep.subr.mxu0 0.0
    %2058 = vmatpush1.msra.mxu0 0.0
    %2059 = vmatprep.subr.mxu0 0.0
    %2060 = vmatpush1.msra.mxu0 0.0
    %2061 = vmatprep.subr.mxu0 0.0
    %2062 = vmatpush1.msra.mxu0 0.0
    %2063 = vmatprep.subr.mxu0 0.0
    %2064 = vmatpush1.msra.mxu0 0.0
    %2065 = vmatprep.subr.mxu0 0.0
    %2066 = vmatpush1.msra.mxu0 0.0
    %2067 = vmatprep.subr.mxu0 0.0
    %2068 = vmatpush1.msra.mxu0 0.0
    %2069 = vmatprep.subr.mxu0 0.0
    %2070 = vmatpush1.msra.mxu0 0.0
    %2071 = vmatprep.subr.mxu0 0.0
    %2072 = vmatpush1.msra.mxu0 0.0
    %2073 = vmatprep.subr.mxu0 0.0
    %2074 = vmatpush1.msra.mxu0 0.0
    %2075 = vmatprep.subr.mxu0 0.0
    %2076 = vmatpush1.msra.mxu0 0.0
    %2077 = vmatprep.subr.mxu0 0.0
    %2078 = vmatpush1.msra.mxu0 0.0
    %2079 = vmatprep.subr.mxu0 0.0
    %2080 = vmatpush1.msra.mxu0 %v2047
    %2081 = vmatprep.subr.mxu0 0.0
    %2082 = vmatpush1.msra.mxu0 %v2046
    %2083 = vmatprep.subr.mxu0 0.0
    %2084 = vmatpush1.msra.mxu0 %v2045
    %2085 = vmatprep.subr.mxu0 0.0
    %2086 = vmatpush1.msra.mxu0 %v2044
    %2087 = vmatprep.subr.mxu0 0.0
    %2088 = vmatpush2.msra.mxu0 0.0
    %2089 = vmatprep.subr.mxu0 0.0
    %2090 = vmatpush2.msra.mxu0 0.0
    %2091 = vmatprep.subr.mxu0 0.0
    %2092 = vmatpush2.msra.mxu0 0.0
    %2093 = vmatprep.subr.mxu0 0.0
    %2094 = vmatpush2.msra.mxu0 0.0
    %2095 = vmatprep.subr.mxu0 0.0
    %2096 = vmatpush2.msra.mxu0 0.0
    %2097 = vmatprep.subr.mxu0 0.0
    %2098 = vmatpush2.msra.mxu0 0.0
    %2099 = vmatprep.subr.mxu0 0.0
    %2100 = vmatpush2.msra.mxu0 0.0
    %2101 = vmatprep.subr.mxu0 0.0
    %2102 = vmatpush2.msra.mxu0 0.0
    %2103 = vmatprep.subr.mxu0 0.0
    %2104 = vmatpush2.msra.mxu0 0.0
    %2105 = vmatprep.subr.mxu0 0.0
    %2106 = vmatpush2.msra.mxu0 0.0
    %2107 = vmatprep.subr.mxu0 0.0
    %2108 = vmatpush2.msra.mxu0 0.0
    %2109 = vmatprep.subr.mxu0 0.0
    %2110 = vmatpush2.msra.mxu0 0.0
    %2111 = vmatprep.subr.mxu0 0.0
    %2112 = vmatpush2.msra.mxu0 0.0
    %2113 = vmatprep.subr.mxu0 0.0
    %2114 = vmatpush2.msra.mxu0 0.0
    %2115 = vmatprep.subr.mxu0 0.0
    %2116 = vmatpush2.msra.mxu0 0.0
    %2117 = vmatprep.subr.mxu0 0.0
    %2118 = vmatpush2.msra.mxu0 0.0
    %2119 = vmatprep.mubr.f32.mxu0 0.0
    %2120 = vmatmul.mubr.f32.gmra.mxu0 %v1891
    %v2121 = vpop.f32.mrf.mxu0
    %v2122 = vadd.f32 %v2053, %v2121
    %v2123 = vpop.f32.mrf.mxu0
    %2124 = vdwg.mxu0
    %v2125 = vadd.f32 %v202, %v1960
    %v2126 = vxor.u32 %v2125, 2147483648
    %v2127 = vmul.f32 %v2126, 1.442695
    %v2128 = vpow.pop %v2127
    %v2129 = vadd.f32 %v2128, 1.0
    %v2130 = vrcp.pop %v2129
    %v2131 = vmul.f32 1.0, %v2130
    %v2132 = vadd.f32 %v318, %v2041
    %v2133 = vxor.u32 %v2132, 2147483648
    %v2134 = vmul.f32 %v2133, 1.442695
    %v2135 = vpow.pop %v2134
    %v2136 = vadd.f32 %v2135, 1.0
    %v2137 = vrcp.pop %v2136
    %v2138 = vmul.f32 1.0, %v2137
    %v2139 = vmul.f32 %v2131, %v2122
    %v2140 = vadd.f32 %v434, %v2139
    %v2141 = vtanh.pop %v2140
    %v2142 = vsub.f32 1.0, %v2138
    %v2143 = vmul.f32 %v2142, %v2141
    %v2144 = vmul.f32 %v2138, %v1877
    %v2145 = vadd.f32 %v2143, %v2144
    %vm2146 = vcmp.gt.f32.partialorder %v447, 5.0
    %v2147 = vsel %vm2146, 1, 0
    %v2148 = vcvt.s32.f32 %v2147
    %2150 = vset.pattern.permute.xlu0 0
    %2151 = vperm.xlu0 %2150, %v2148
    %v2152 = vpop.permute.xlu0 %2151
    %v2154 = vmul.f32 %v2152, %v2145
    %v2155 = vsub.f32 1.0, %v2148
    %2157 = vset.pattern.permute.xlu0 0
    %2158 = vperm.xlu0 %2157, %v2155
    %v2159 = vpop.permute.xlu0 %2158
    %v2161 = vmul.f32 %v2159, %v1877
    %v2162 = vadd.f32 %v2154, %v2161
    %2163 = vst.msk [vmem:[%s7 + $0x28] sm:$0xff] %vm460, %v2162
    %v2164 = vld [vmem:[%s4] sm:$0xff]
    %v2165 = vld [vmem:[%s4 + $0x8] sm:$0xff]
    %v2166 = vld [vmem:[%s4 + $0x10] sm:$0xff]
    %v2167 = vld [vmem:[%s4 + $0x18] sm:$0xff]
    %v2168 = vld [vmem:[%s6] sm:$0x1]
    %v2170 = vlaneseq
    %v2171 = vshrl.u32 %v2170, 7
    %v2172 = vsub.s32 0, %v2171
    %v2173 = vrot.slane %v2168, %v2172
    %v2176 = vsel %vm460, %v2162, 0
    %2178 = vmatprep.subr.mxu0 0.0
    %2179 = vmatpush1.msra.mxu0 0.0
    %2180 = vmatprep.subr.mxu0 0.0
    %2181 = vmatpush1.msra.mxu0 0.0
    %2182 = vmatprep.subr.mxu0 0.0
    %2183 = vmatpush1.msra.mxu0 0.0
    %2184 = vmatprep.subr.mxu0 0.0
    %2185 = vmatpush1.msra.mxu0 0.0
    %2186 = vmatprep.subr.mxu0 0.0
    %2187 = vmatpush1.msra.mxu0 0.0
    %2188 = vmatprep.subr.mxu0 0.0
    %2189 = vmatpush1.msra.mxu0 0.0
    %2190 = vmatprep.subr.mxu0 0.0
    %2191 = vmatpush1.msra.mxu0 0.0
    %2192 = vmatprep.subr.mxu0 0.0
    %2193 = vmatpush1.msra.mxu0 0.0
    %2194 = vmatprep.subr.mxu0 0.0
    %2195 = vmatpush1.msra.mxu0 0.0
    %2196 = vmatprep.subr.mxu0 0.0
    %2197 = vmatpush1.msra.mxu0 0.0
    %2198 = vmatprep.subr.mxu0 0.0
    %2199 = vmatpush1.msra.mxu0 0.0
    %2200 = vmatprep.subr.mxu0 0.0
    %2201 = vmatpush1.msra.mxu0 0.0
    %2202 = vmatprep.subr.mxu0 0.0
    %2203 = vmatpush1.msra.mxu0 %v2167
    %2204 = vmatprep.subr.mxu0 0.0
    %2205 = vmatpush1.msra.mxu0 %v2166
    %2206 = vmatprep.subr.mxu0 0.0
    %2207 = vmatpush1.msra.mxu0 %v2165
    %2208 = vmatprep.subr.mxu0 0.0
    %2209 = vmatpush1.msra.mxu0 %v2164
    %2210 = vmatprep.subr.mxu0 0.0
    %2211 = vmatpush2.msra.mxu0 0.0
    %2212 = vmatprep.subr.mxu0 0.0
    %2213 = vmatpush2.msra.mxu0 0.0
    %2214 = vmatprep.subr.mxu0 0.0
    %2215 = vmatpush2.msra.mxu0 0.0
    %2216 = vmatprep.subr.mxu0 0.0
    %2217 = vmatpush2.msra.mxu0 0.0
    %2218 = vmatprep.subr.mxu0 0.0
    %2219 = vmatpush2.msra.mxu0 0.0
    %2220 = vmatprep.subr.mxu0 0.0
    %2221 = vmatpush2.msra.mxu0 0.0
    %2222 = vmatprep.subr.mxu0 0.0
    %2223 = vmatpush2.msra.mxu0 0.0
    %2224 = vmatprep.subr.mxu0 0.0
    %2225 = vmatpush2.msra.mxu0 0.0
    %2226 = vmatprep.subr.mxu0 0.0
    %2227 = vmatpush2.msra.mxu0 0.0
    %2228 = vmatprep.subr.mxu0 0.0
    %2229 = vmatpush2.msra.mxu0 0.0
    %2230 = vmatprep.subr.mxu0 0.0
    %2231 = vmatpush2.msra.mxu0 0.0
    %2232 = vmatprep.subr.mxu0 0.0
    %2233 = vmatpush2.msra.mxu0 0.0
    %2234 = vmatprep.subr.mxu0 0.0
    %2235 = vmatpush2.msra.mxu0 0.0
    %2236 = vmatprep.subr.mxu0 0.0
    %2237 = vmatpush2.msra.mxu0 0.0
    %2238 = vmatprep.subr.mxu0 0.0
    %2239 = vmatpush2.msra.mxu0 0.0
    %2240 = vmatprep.subr.mxu0 0.0
    %2241 = vmatpush2.msra.mxu0 0.0
    %2242 = vmatprep.mubr.f32.mxu0 0.0
    %2243 = vmatmul.mubr.f32.gmra.mxu0 %v2176
    %v2244 = vpop.f32.mrf.mxu0
    %v2245 = vadd.f32 %v2173, %v2244
    %v2246 = vpop.f32.mrf.mxu0
    %2247 = vdwg.mxu0
    %v2248 = vld [vmem:[%s534] sm:$0xff]
    %v2249 = vld [vmem:[%s534 + $0x8] sm:$0xff]
    %v2250 = vld [vmem:[%s534 + $0x10] sm:$0xff]
    %v2251 = vld [vmem:[%s534 + $0x18] sm:$0xff]
    %v2252 = vld [vmem:[%s539] sm:$0x1]
    %v2254 = vlaneseq
    %v2255 = vshrl.u32 %v2254, 7
    %v2256 = vsub.s32 0, %v2255
    %v2257 = vrot.slane %v2252, %v2256
    %2259 = vmatprep.subr.mxu0 0.0
    %2260 = vmatpush1.msra.mxu0 0.0
    %2261 = vmatprep.subr.mxu0 0.0
    %2262 = vmatpush1.msra.mxu0 0.0
    %2263 = vmatprep.subr.mxu0 0.0
    %2264 = vmatpush1.msra.mxu0 0.0
    %2265 = vmatprep.subr.mxu0 0.0
    %2266 = vmatpush1.msra.mxu0 0.0
    %2267 = vmatprep.subr.mxu0 0.0
    %2268 = vmatpush1.msra.mxu0 0.0
    %2269 = vmatprep.subr.mxu0 0.0
    %2270 = vmatpush1.msra.mxu0 0.0
    %2271 = vmatprep.subr.mxu0 0.0
    %2272 = vmatpush1.msra.mxu0 0.0
    %2273 = vmatprep.subr.mxu0 0.0
    %2274 = vmatpush1.msra.mxu0 0.0
    %2275 = vmatprep.subr.mxu0 0.0
    %2276 = vmatpush1.msra.mxu0 0.0
    %2277 = vmatprep.subr.mxu0 0.0
    %2278 = vmatpush1.msra.mxu0 0.0
    %2279 = vmatprep.subr.mxu0 0.0
    %2280 = vmatpush1.msra.mxu0 0.0
    %2281 = vmatprep.subr.mxu0 0.0
    %2282 = vmatpush1.msra.mxu0 0.0
    %2283 = vmatprep.subr.mxu0 0.0
    %2284 = vmatpush1.msra.mxu0 %v2251
    %2285 = vmatprep.subr.mxu0 0.0
    %2286 = vmatpush1.msra.mxu0 %v2250
    %2287 = vmatprep.subr.mxu0 0.0
    %2288 = vmatpush1.msra.mxu0 %v2249
    %2289 = vmatprep.subr.mxu0 0.0
    %2290 = vmatpush1.msra.mxu0 %v2248
    %2291 = vmatprep.subr.mxu0 0.0
    %2292 = vmatpush2.msra.mxu0 0.0
    %2293 = vmatprep.subr.mxu0 0.0
    %2294 = vmatpush2.msra.mxu0 0.0
    %2295 = vmatprep.subr.mxu0 0.0
    %2296 = vmatpush2.msra.mxu0 0.0
    %2297 = vmatprep.subr.mxu0 0.0
    %2298 = vmatpush2.msra.mxu0 0.0
    %2299 = vmatprep.subr.mxu0 0.0
    %2300 = vmatpush2.msra.mxu0 0.0
    %2301 = vmatprep.subr.mxu0 0.0
    %2302 = vmatpush2.msra.mxu0 0.0
    %2303 = vmatprep.subr.mxu0 0.0
    %2304 = vmatpush2.msra.mxu0 0.0
    %2305 = vmatprep.subr.mxu0 0.0
    %2306 = vmatpush2.msra.mxu0 0.0
    %2307 = vmatprep.subr.mxu0 0.0
    %2308 = vmatpush2.msra.mxu0 0.0
    %2309 = vmatprep.subr.mxu0 0.0
    %2310 = vmatpush2.msra.mxu0 0.0
    %2311 = vmatprep.subr.mxu0 0.0
    %2312 = vmatpush2.msra.mxu0 0.0
    %2313 = vmatprep.subr.mxu0 0.0
    %2314 = vmatpush2.msra.mxu0 0.0
    %2315 = vmatprep.subr.mxu0 0.0
    %2316 = vmatpush2.msra.mxu0 0.0
    %2317 = vmatprep.subr.mxu0 0.0
    %2318 = vmatpush2.msra.mxu0 0.0
    %2319 = vmatprep.subr.mxu0 0.0
    %2320 = vmatpush2.msra.mxu0 0.0
    %2321 = vmatprep.subr.mxu0 0.0
    %2322 = vmatpush2.msra.mxu0 0.0
    %2323 = vmatprep.mubr.f32.mxu0 0.0
    %2324 = vmatmul.mubr.f32.gmra.mxu0 %v2176
    %v2325 = vpop.f32.mrf.mxu0
    %v2326 = vadd.f32 %v2257, %v2325
    %v2327 = vpop.f32.mrf.mxu0
    %2328 = vdwg.mxu0
    %v2329 = vld [vmem:[%s617] sm:$0xff]
    %v2330 = vld [vmem:[%s617 + $0x8] sm:$0xff]
    %v2331 = vld [vmem:[%s617 + $0x10] sm:$0xff]
    %v2332 = vld [vmem:[%s617 + $0x18] sm:$0xff]
    %v2333 = vld [vmem:[%s622] sm:$0x1]
    %v2335 = vlaneseq
    %v2336 = vshrl.u32 %v2335, 7
    %v2337 = vsub.s32 0, %v2336
    %v2338 = vrot.slane %v2333, %v2337
    %2340 = vmatprep.subr.mxu0 0.0
    %2341 = vmatpush1.msra.mxu0 0.0
    %2342 = vmatprep.subr.mxu0 0.0
    %2343 = vmatpush1.msra.mxu0 0.0
    %2344 = vmatprep.subr.mxu0 0.0
    %2345 = vmatpush1.msra.mxu0 0.0
    %2346 = vmatprep.subr.mxu0 0.0
    %2347 = vmatpush1.msra.mxu0 0.0
    %2348 = vmatprep.subr.mxu0 0.0
    %2349 = vmatpush1.msra.mxu0 0.0
    %2350 = vmatprep.subr.mxu0 0.0
    %2351 = vmatpush1.msra.mxu0 0.0
    %2352 = vmatprep.subr.mxu0 0.0
    %2353 = vmatpush1.msra.mxu0 0.0
    %2354 = vmatprep.subr.mxu0 0.0
    %2355 = vmatpush1.msra.mxu0 0.0
    %2356 = vmatprep.subr.mxu0 0.0
    %2357 = vmatpush1.msra.mxu0 0.0
    %2358 = vmatprep.subr.mxu0 0.0
    %2359 = vmatpush1.msra.mxu0 0.0
    %2360 = vmatprep.subr.mxu0 0.0
    %2361 = vmatpush1.msra.mxu0 0.0
    %2362 = vmatprep.subr.mxu0 0.0
    %2363 = vmatpush1.msra.mxu0 0.0
    %2364 = vmatprep.subr.mxu0 0.0
    %2365 = vmatpush1.msra.mxu0 %v2332
    %2366 = vmatprep.subr.mxu0 0.0
    %2367 = vmatpush1.msra.mxu0 %v2331
    %2368 = vmatprep.subr.mxu0 0.0
    %2369 = vmatpush1.msra.mxu0 %v2330
    %2370 = vmatprep.subr.mxu0 0.0
    %2371 = vmatpush1.msra.mxu0 %v2329
    %2372 = vmatprep.subr.mxu0 0.0
    %2373 = vmatpush2.msra.mxu0 0.0
    %2374 = vmatprep.subr.mxu0 0.0
    %2375 = vmatpush2.msra.mxu0 0.0
    %2376 = vmatprep.subr.mxu0 0.0
    %2377 = vmatpush2.msra.mxu0 0.0
    %2378 = vmatprep.subr.mxu0 0.0
    %2379 = vmatpush2.msra.mxu0 0.0
    %2380 = vmatprep.subr.mxu0 0.0
    %2381 = vmatpush2.msra.mxu0 0.0
    %2382 = vmatprep.subr.mxu0 0.0
    %2383 = vmatpush2.msra.mxu0 0.0
    %2384 = vmatprep.subr.mxu0 0.0
    %2385 = vmatpush2.msra.mxu0 0.0
    %2386 = vmatprep.subr.mxu0 0.0
    %2387 = vmatpush2.msra.mxu0 0.0
    %2388 = vmatprep.subr.mxu0 0.0
    %2389 = vmatpush2.msra.mxu0 0.0
    %2390 = vmatprep.subr.mxu0 0.0
    %2391 = vmatpush2.msra.mxu0 0.0
    %2392 = vmatprep.subr.mxu0 0.0
    %2393 = vmatpush2.msra.mxu0 0.0
    %2394 = vmatprep.subr.mxu0 0.0
    %2395 = vmatpush2.msra.mxu0 0.0
    %2396 = vmatprep.subr.mxu0 0.0
    %2397 = vmatpush2.msra.mxu0 0.0
    %2398 = vmatprep.subr.mxu0 0.0
    %2399 = vmatpush2.msra.mxu0 0.0
    %2400 = vmatprep.subr.mxu0 0.0
    %2401 = vmatpush2.msra.mxu0 0.0
    %2402 = vmatprep.subr.mxu0 0.0
    %2403 = vmatpush2.msra.mxu0 0.0
    %2404 = vmatprep.mubr.f32.mxu0 0.0
    %2405 = vmatmul.mubr.f32.gmra.mxu0 %v2176
    %v2406 = vpop.f32.mrf.mxu0
    %v2407 = vadd.f32 %v2338, %v2406
    %v2408 = vpop.f32.mrf.mxu0
    %2409 = vdwg.mxu0
    %v2410 = vadd.f32 %v207, %v2245
    %v2411 = vxor.u32 %v2410, 2147483648
    %v2412 = vmul.f32 %v2411, 1.442695
    %v2413 = vpow.pop %v2412
    %v2414 = vadd.f32 %v2413, 1.0
    %v2415 = vrcp.pop %v2414
    %v2416 = vmul.f32 1.0, %v2415
    %v2417 = vadd.f32 %v323, %v2326
    %v2418 = vxor.u32 %v2417, 2147483648
    %v2419 = vmul.f32 %v2418, 1.442695
    %v2420 = vpow.pop %v2419
    %v2421 = vadd.f32 %v2420, 1.0
    %v2422 = vrcp.pop %v2421
    %v2423 = vmul.f32 1.0, %v2422
    %v2424 = vmul.f32 %v2416, %v2407
    %v2425 = vadd.f32 %v439, %v2424
    %v2426 = vtanh.pop %v2425
    %v2427 = vsub.f32 1.0, %v2423
    %v2428 = vmul.f32 %v2427, %v2426
    %v2429 = vmul.f32 %v2423, %v2162
    %v2430 = vadd.f32 %v2428, %v2429
    %vm2431 = vcmp.gt.f32.partialorder %v447, 6.0
    %v2432 = vsel %vm2431, 1, 0
    %v2433 = vcvt.s32.f32 %v2432
    %2435 = vset.pattern.permute.xlu0 0
    %2436 = vperm.xlu0 %2435, %v2433
    %v2437 = vpop.permute.xlu0 %2436
    %v2439 = vmul.f32 %v2437, %v2430
    %v2440 = vsub.f32 1.0, %v2433
    %2442 = vset.pattern.permute.xlu0 0
    %2443 = vperm.xlu0 %2442, %v2440
    %v2444 = vpop.permute.xlu0 %2443
    %v2446 = vmul.f32 %v2444, %v2162
    %v2447 = vadd.f32 %v2439, %v2446
    %2448 = vst.msk [vmem:[%s7 + $0x30] sm:$0xff] %vm460, %v2447
    %v2449 = vld [vmem:[%s4] sm:$0xff]
    %v2450 = vld [vmem:[%s4 + $0x8] sm:$0xff]
    %v2451 = vld [vmem:[%s4 + $0x10] sm:$0xff]
    %v2452 = vld [vmem:[%s4 + $0x18] sm:$0xff]
    %v2453 = vld [vmem:[%s6] sm:$0x1]
    %v2455 = vlaneseq
    %v2456 = vshrl.u32 %v2455, 7
    %v2457 = vsub.s32 0, %v2456
    %v2458 = vrot.slane %v2453, %v2457
    %v2461 = vsel %vm460, %v2447, 0
    %2463 = vmatprep.subr.mxu0 0.0
    %2464 = vmatpush1.msra.mxu0 0.0
    %2465 = vmatprep.subr.mxu0 0.0
    %2466 = vmatpush1.msra.mxu0 0.0
    %2467 = vmatprep.subr.mxu0 0.0
    %2468 = vmatpush1.msra.mxu0 0.0
    %2469 = vmatprep.subr.mxu0 0.0
    %2470 = vmatpush1.msra.mxu0 0.0
    %2471 = vmatprep.subr.mxu0 0.0
    %2472 = vmatpush1.msra.mxu0 0.0
    %2473 = vmatprep.subr.mxu0 0.0
    %2474 = vmatpush1.msra.mxu0 0.0
    %2475 = vmatprep.subr.mxu0 0.0
    %2476 = vmatpush1.msra.mxu0 0.0
    %2477 = vmatprep.subr.mxu0 0.0
    %2478 = vmatpush1.msra.mxu0 0.0
    %2479 = vmatprep.subr.mxu0 0.0
    %2480 = vmatpush1.msra.mxu0 0.0
    %2481 = vmatprep.subr.mxu0 0.0
    %2482 = vmatpush1.msra.mxu0 0.0
    %2483 = vmatprep.subr.mxu0 0.0
    %2484 = vmatpush1.msra.mxu0 0.0
    %2485 = vmatprep.subr.mxu0 0.0
    %2486 = vmatpush1.msra.mxu0 0.0
    %2487 = vmatprep.subr.mxu0 0.0
    %2488 = vmatpush1.msra.mxu0 %v2452
    %2489 = vmatprep.subr.mxu0 0.0
    %2490 = vmatpush1.msra.mxu0 %v2451
    %2491 = vmatprep.subr.mxu0 0.0
    %2492 = vmatpush1.msra.mxu0 %v2450
    %2493 = vmatprep.subr.mxu0 0.0
    %2494 = vmatpush1.msra.mxu0 %v2449
    %2495 = vmatprep.subr.mxu0 0.0
    %2496 = vmatpush2.msra.mxu0 0.0
    %2497 = vmatprep.subr.mxu0 0.0
    %2498 = vmatpush2.msra.mxu0 0.0
    %2499 = vmatprep.subr.mxu0 0.0
    %2500 = vmatpush2.msra.mxu0 0.0
    %2501 = vmatprep.subr.mxu0 0.0
    %2502 = vmatpush2.msra.mxu0 0.0
    %2503 = vmatprep.subr.mxu0 0.0
    %2504 = vmatpush2.msra.mxu0 0.0
    %2505 = vmatprep.subr.mxu0 0.0
    %2506 = vmatpush2.msra.mxu0 0.0
    %2507 = vmatprep.subr.mxu0 0.0
    %2508 = vmatpush2.msra.mxu0 0.0
    %2509 = vmatprep.subr.mxu0 0.0
    %2510 = vmatpush2.msra.mxu0 0.0
    %2511 = vmatprep.subr.mxu0 0.0
    %2512 = vmatpush2.msra.mxu0 0.0
    %2513 = vmatprep.subr.mxu0 0.0
    %2514 = vmatpush2.msra.mxu0 0.0
    %2515 = vmatprep.subr.mxu0 0.0
    %2516 = vmatpush2.msra.mxu0 0.0
    %2517 = vmatprep.subr.mxu0 0.0
    %2518 = vmatpush2.msra.mxu0 0.0
    %2519 = vmatprep.subr.mxu0 0.0
    %2520 = vmatpush2.msra.mxu0 0.0
    %2521 = vmatprep.subr.mxu0 0.0
    %2522 = vmatpush2.msra.mxu0 0.0
    %2523 = vmatprep.subr.mxu0 0.0
    %2524 = vmatpush2.msra.mxu0 0.0
    %2525 = vmatprep.subr.mxu0 0.0
    %2526 = vmatpush2.msra.mxu0 0.0
    %2527 = vmatprep.mubr.f32.mxu0 0.0
    %2528 = vmatmul.mubr.f32.gmra.mxu0 %v2461
    %v2529 = vpop.f32.mrf.mxu0
    %v2530 = vadd.f32 %v2458, %v2529
    %v2531 = vpop.f32.mrf.mxu0
    %2532 = vdwg.mxu0
    %v2533 = vld [vmem:[%s534] sm:$0xff]
    %v2534 = vld [vmem:[%s534 + $0x8] sm:$0xff]
    %v2535 = vld [vmem:[%s534 + $0x10] sm:$0xff]
    %v2536 = vld [vmem:[%s534 + $0x18] sm:$0xff]
    %v2537 = vld [vmem:[%s539] sm:$0x1]
    %v2539 = vlaneseq
    %v2540 = vshrl.u32 %v2539, 7
    %v2541 = vsub.s32 0, %v2540
    %v2542 = vrot.slane %v2537, %v2541
    %2544 = vmatprep.subr.mxu0 0.0
    %2545 = vmatpush1.msra.mxu0 0.0
    %2546 = vmatprep.subr.mxu0 0.0
    %2547 = vmatpush1.msra.mxu0 0.0
    %2548 = vmatprep.subr.mxu0 0.0
    %2549 = vmatpush1.msra.mxu0 0.0
    %2550 = vmatprep.subr.mxu0 0.0
    %2551 = vmatpush1.msra.mxu0 0.0
    %2552 = vmatprep.subr.mxu0 0.0
    %2553 = vmatpush1.msra.mxu0 0.0
    %2554 = vmatprep.subr.mxu0 0.0
    %2555 = vmatpush1.msra.mxu0 0.0
    %2556 = vmatprep.subr.mxu0 0.0
    %2557 = vmatpush1.msra.mxu0 0.0
    %2558 = vmatprep.subr.mxu0 0.0
    %2559 = vmatpush1.msra.mxu0 0.0
    %2560 = vmatprep.subr.mxu0 0.0
    %2561 = vmatpush1.msra.mxu0 0.0
    %2562 = vmatprep.subr.mxu0 0.0
    %2563 = vmatpush1.msra.mxu0 0.0
    %2564 = vmatprep.subr.mxu0 0.0
    %2565 = vmatpush1.msra.mxu0 0.0
    %2566 = vmatprep.subr.mxu0 0.0
    %2567 = vmatpush1.msra.mxu0 0.0
    %2568 = vmatprep.subr.mxu0 0.0
    %2569 = vmatpush1.msra.mxu0 %v2536
    %2570 = vmatprep.subr.mxu0 0.0
    %2571 = vmatpush1.msra.mxu0 %v2535
    %2572 = vmatprep.subr.mxu0 0.0
    %2573 = vmatpush1.msra.mxu0 %v2534
    %2574 = vmatprep.subr.mxu0 0.0
    %2575 = vmatpush1.msra.mxu0 %v2533
    %2576 = vmatprep.subr.mxu0 0.0
    %2577 = vmatpush2.msra.mxu0 0.0
    %2578 = vmatprep.subr.mxu0 0.0
    %2579 = vmatpush2.msra.mxu0 0.0
    %2580 = vmatprep.subr.mxu0 0.0
    %2581 = vmatpush2.msra.mxu0 0.0
    %2582 = vmatprep.subr.mxu0 0.0
    %2583 = vmatpush2.msra.mxu0 0.0
    %2584 = vmatprep.subr.mxu0 0.0
    %2585 = vmatpush2.msra.mxu0 0.0
    %2586 = vmatprep.subr.mxu0 0.0
    %2587 = vmatpush2.msra.mxu0 0.0
    %2588 = vmatprep.subr.mxu0 0.0
    %2589 = vmatpush2.msra.mxu0 0.0
    %2590 = vmatprep.subr.mxu0 0.0
    %2591 = vmatpush2.msra.mxu0 0.0
    %2592 = vmatprep.subr.mxu0 0.0
    %2593 = vmatpush2.msra.mxu0 0.0
    %2594 = vmatprep.subr.mxu0 0.0
    %2595 = vmatpush2.msra.mxu0 0.0
    %2596 = vmatprep.subr.mxu0 0.0
    %2597 = vmatpush2.msra.mxu0 0.0
    %2598 = vmatprep.subr.mxu0 0.0
    %2599 = vmatpush2.msra.mxu0 0.0
    %2600 = vmatprep.subr.mxu0 0.0
    %2601 = vmatpush2.msra.mxu0 0.0
    %2602 = vmatprep.subr.mxu0 0.0
    %2603 = vmatpush2.msra.mxu0 0.0
    %2604 = vmatprep.subr.mxu0 0.0
    %2605 = vmatpush2.msra.mxu0 0.0
    %2606 = vmatprep.subr.mxu0 0.0
    %2607 = vmatpush2.msra.mxu0 0.0
    %2608 = vmatprep.mubr.f32.mxu0 0.0
    %2609 = vmatmul.mubr.f32.gmra.mxu0 %v2461
    %v2610 = vpop.f32.mrf.mxu0
    %v2611 = vadd.f32 %v2542, %v2610
    %v2612 = vpop.f32.mrf.mxu0
    %2613 = vdwg.mxu0
    %v2614 = vld [vmem:[%s617] sm:$0xff]
    %v2615 = vld [vmem:[%s617 + $0x8] sm:$0xff]
    %v2616 = vld [vmem:[%s617 + $0x10] sm:$0xff]
    %v2617 = vld [vmem:[%s617 + $0x18] sm:$0xff]
    %v2618 = vld [vmem:[%s622] sm:$0x1]
    %v2620 = vlaneseq
    %v2621 = vshrl.u32 %v2620, 7
    %v2622 = vsub.s32 0, %v2621
    %v2623 = vrot.slane %v2618, %v2622
    %2625 = vmatprep.subr.mxu0 0.0
    %2626 = vmatpush1.msra.mxu0 0.0
    %2627 = vmatprep.subr.mxu0 0.0
    %2628 = vmatpush1.msra.mxu0 0.0
    %2629 = vmatprep.subr.mxu0 0.0
    %2630 = vmatpush1.msra.mxu0 0.0
    %2631 = vmatprep.subr.mxu0 0.0
    %2632 = vmatpush1.msra.mxu0 0.0
    %2633 = vmatprep.subr.mxu0 0.0
    %2634 = vmatpush1.msra.mxu0 0.0
    %2635 = vmatprep.subr.mxu0 0.0
    %2636 = vmatpush1.msra.mxu0 0.0
    %2637 = vmatprep.subr.mxu0 0.0
    %2638 = vmatpush1.msra.mxu0 0.0
    %2639 = vmatprep.subr.mxu0 0.0
    %2640 = vmatpush1.msra.mxu0 0.0
    %2641 = vmatprep.subr.mxu0 0.0
    %2642 = vmatpush1.msra.mxu0 0.0
    %2643 = vmatprep.subr.mxu0 0.0
    %2644 = vmatpush1.msra.mxu0 0.0
    %2645 = vmatprep.subr.mxu0 0.0
    %2646 = vmatpush1.msra.mxu0 0.0
    %2647 = vmatprep.subr.mxu0 0.0
    %2648 = vmatpush1.msra.mxu0 0.0
    %2649 = vmatprep.subr.mxu0 0.0
    %2650 = vmatpush1.msra.mxu0 %v2617
    %2651 = vmatprep.subr.mxu0 0.0
    %2652 = vmatpush1.msra.mxu0 %v2616
    %2653 = vmatprep.subr.mxu0 0.0
    %2654 = vmatpush1.msra.mxu0 %v2615
    %2655 = vmatprep.subr.mxu0 0.0
    %2656 = vmatpush1.msra.mxu0 %v2614
    %2657 = vmatprep.subr.mxu0 0.0
    %2658 = vmatpush2.msra.mxu0 0.0
    %2659 = vmatprep.subr.mxu0 0.0
    %2660 = vmatpush2.msra.mxu0 0.0
    %2661 = vmatprep.subr.mxu0 0.0
    %2662 = vmatpush2.msra.mxu0 0.0
    %2663 = vmatprep.subr.mxu0 0.0
    %2664 = vmatpush2.msra.mxu0 0.0
    %2665 = vmatprep.subr.mxu0 0.0
    %2666 = vmatpush2.msra.mxu0 0.0
    %2667 = vmatprep.subr.mxu0 0.0
    %2668 = vmatpush2.msra.mxu0 0.0
    %2669 = vmatprep.subr.mxu0 0.0
    %2670 = vmatpush2.msra.mxu0 0.0
    %2671 = vmatprep.subr.mxu0 0.0
    %2672 = vmatpush2.msra.mxu0 0.0
    %2673 = vmatprep.subr.mxu0 0.0
    %2674 = vmatpush2.msra.mxu0 0.0
    %2675 = vmatprep.subr.mxu0 0.0
    %2676 = vmatpush2.msra.mxu0 0.0
    %2677 = vmatprep.subr.mxu0 0.0
    %2678 = vmatpush2.msra.mxu0 0.0
    %2679 = vmatprep.subr.mxu0 0.0
    %2680 = vmatpush2.msra.mxu0 0.0
    %2681 = vmatprep.subr.mxu0 0.0
    %2682 = vmatpush2.msra.mxu0 0.0
    %2683 = vmatprep.subr.mxu0 0.0
    %2684 = vmatpush2.msra.mxu0 0.0
    %2685 = vmatprep.subr.mxu0 0.0
    %2686 = vmatpush2.msra.mxu0 0.0
    %2687 = vmatprep.subr.mxu0 0.0
    %2688 = vmatpush2.msra.mxu0 0.0
    %2689 = vmatprep.mubr.f32.mxu0 0.0
    %2690 = vmatmul.mubr.f32.gmra.mxu0 %v2461
    %v2691 = vpop.f32.mrf.mxu0
    %v2692 = vadd.f32 %v2623, %v2691
    %v2693 = vpop.f32.mrf.mxu0
    %2694 = vdwg.mxu0
    %v2695 = vadd.f32 %v212, %v2530
    %v2696 = vxor.u32 %v2695, 2147483648
    %v2697 = vmul.f32 %v2696, 1.442695
    %v2698 = vpow.pop %v2697
    %v2699 = vadd.f32 %v2698, 1.0
    %v2700 = vrcp.pop %v2699
    %v2701 = vmul.f32 1.0, %v2700
    %v2702 = vadd.f32 %v328, %v2611
    %v2703 = vxor.u32 %v2702, 2147483648
    %v2704 = vmul.f32 %v2703, 1.442695
    %v2705 = vpow.pop %v2704
    %v2706 = vadd.f32 %v2705, 1.0
    %v2707 = vrcp.pop %v2706
    %v2708 = vmul.f32 1.0, %v2707
    %v2709 = vmul.f32 %v2701, %v2692
    %v2710 = vadd.f32 %v444, %v2709
    %v2711 = vtanh.pop %v2710
    %v2712 = vsub.f32 1.0, %v2708
    %v2713 = vmul.f32 %v2712, %v2711
    %v2714 = vmul.f32 %v2708, %v2447
    %v2715 = vadd.f32 %v2713, %v2714
    %vm2716 = vcmp.gt.f32.partialorder %v447, 7.0
    %v2717 = vsel %vm2716, 1, 0
    %v2718 = vcvt.s32.f32 %v2717
    %2720 = vset.pattern.permute.xlu0 0
    %2721 = vperm.xlu0 %2720, %v2718
    %v2722 = vpop.permute.xlu0 %2721
    %v2724 = vmul.f32 %v2722, %v2715
    %v2725 = vsub.f32 1.0, %v2718
    %2727 = vset.pattern.permute.xlu0 0
    %2728 = vperm.xlu0 %2727, %v2725
    %v2729 = vpop.permute.xlu0 %2728
    %v2731 = vmul.f32 %v2729, %v2447
    %v2732 = vadd.f32 %v2724, %v2731
    %2733 = vst.msk [vmem:[%s7 + $0x38] sm:$0xff] %vm460, %v2732
    %2734 = vst.msk [vmem:[#allocation8] sm:$0xff] %vm460, %v2732
    // Predicated region
    $region42: #{tpu_custom_call.1} parent=1 // pred_check
      _
    $region43: #{tpu_custom_call.1} parent=1 // pred_check_branch
      %2736 = sbr.rel (0) target = $region45
    $region44: #{tpu_custom_call.1} parent=1 // pred_region
      _
    $region45: #{tpu_custom_call.1} parent=1 // pred_fallthru
      _
    // Predicated region
    $region46: #{tpu_custom_call.1} parent=1 // pred_check
      _
    $region47: #{tpu_custom_call.1} parent=1 // pred_check_branch
      %2738 = sbr.rel (0) target = $region49
    $region48: #{tpu_custom_call.1} parent=1 // pred_region
      %s2740 = ssub.s32 128, 128
      %2741 = vsyncadd [#allocation4], %s2740
      %s2743 = sshll.u32 [#allocation8], 4
      %s2744 = int_to_ptr.vmem [resolvable:$true] %s2743
      %2746 = dma.vmem_to_hbm [thread:$0]  %s2744, 128, %s8, [#allocation4]
    $region49: #{tpu_custom_call.1} parent=1 // pred_fallthru
      _
    // Predicated region
    $region50: #{tpu_custom_call.1} parent=1 // pred_check
      _
    $region51: #{tpu_custom_call.1} parent=1 // pred_check_branch
      %2748 = sbr.rel (0) target = $region53
    $region52: #{tpu_custom_call.1} parent=1 // pred_region
      _
    $region53: #{tpu_custom_call.1} parent=1 // pred_fallthru
      _
    // Predicated region
    $region54: #{tpu_custom_call.1} parent=1 // pred_check
      _
    $region55: #{tpu_custom_call.1} parent=1 // pred_check_branch
      %2750 = sbr.rel (0) target = $region57
    $region56: #{tpu_custom_call.1} parent=1 // pred_region
      %2751 = dma.done [#allocation4], 128
    $region57: #{tpu_custom_call.1} parent=1 // pred_fallthru
      _
    %2752 = vsyncpa [#allocation3], 1
    %2753 = vsyncpa [#allocation6], 1
    %2754 = vsyncpa [#allocation4], 1

</llo_original>
